<compile_context>
chip_gen: v6e
topology: v6e:2x2x1
jax: 0.10.0
libtpu: 0.0.40
codegen_flags: <defaults>
</compile_context>

<pallas_src>
import math
import functools

import jax
import jax.numpy as jnp
from jax import lax
from jax.experimental import pallas as pl
from jax.experimental.pallas import tpu as pltpu


# ----------------------------------------------------------------------------
# ALiBi (matches AliBiPositionalEncoding)
# ----------------------------------------------------------------------------
def _alibi_slopes(num_heads):
    def pow2_slopes(n):
        start = 2 ** (-2 ** (-(math.log2(n) - 3)))
        ratio = start
        return [start * ratio ** i for i in range(n)]

    if math.log2(num_heads).is_integer():
        slopes = pow2_slopes(num_heads)
    else:
        closest = 2 ** math.floor(math.log2(num_heads))
        slopes = pow2_slopes(closest)
        slopes += slopes[-1:] * (num_heads - closest)
    return jnp.asarray(slopes, dtype=jnp.float32)


def _alibi_bias(num_heads, seq_len):
    # distance[i, j] = j - i  (position.view(1,-1) - position.view(-1,1) in torch)
    slopes = _alibi_slopes(num_heads)                      # (H,)
    pos = jnp.arange(seq_len, dtype=jnp.float32)
    dist = pos[None, :] - pos[:, None]                     # (S, S)
    return slopes[:, None, None] * dist[None, :, :]        # (H, S, S) f32


# ----------------------------------------------------------------------------
# Pallas kernel
# ----------------------------------------------------------------------------
def _layernorm(x, gamma, beta, eps=1e-5):
    mu = jnp.mean(x, axis=-1, keepdims=True)
    var = jnp.mean((x - mu) ** 2, axis=-1, keepdims=True)
    return (x - mu) * lax.rsqrt(var + eps) * gamma + beta


def fused_encoder_kernel(x_ref, *refs, num_heads, use_alibi, return_attn):
    # Ref layout (inputs, outputs, scratch):
    #   x_ref (1,S,E) f32
    #   [alibi_ref (H,S,S) f32]           (only when use_alibi)
    #   12 per-layer weight refs (layer l selected by the BlockSpec index_map)
    #   [attn_ref (H,S,S) f32]            (only when return_attn)
    #   pooled_ref (1,1,E) f32
    #   x_carry (S,E) f32 scratch         (activation carried across layers)
    idx = 0
    if use_alibi:
        alibi_ref = refs[idx]; idx += 1
    (wqkv_ref, bqkv_ref, wo_ref, bo_ref, g1_ref, be1_ref,
     w1_ref, bf1_ref, w2_ref, bf2_ref, g2_ref, be2_ref) = refs[idx:idx + 12]
    idx += 12
    if return_attn:
        attn_ref = refs[idx]; idx += 1
    pooled_ref = refs[idx]; idx += 1
    x_carry = refs[idx]

    l = pl.program_id(1)

    @pl.when(l == 0)
    def _():
        x_carry[...] = x_ref[0]

    S, E = x_carry.shape
    H = num_heads
    hd = E // H

    xb = x_carry[...]                                     # (S, E) f32
    x16 = xb.astype(jnp.bfloat16)

    # --- fused QKV projection: one (S,E)x(E,3E) MXU pass, f32 accumulate.
    # 1/sqrt(hd) is already folded into the q columns of wqkv / bqkv.
    qkv = jnp.dot(x16, wqkv_ref[...],
                  preferred_element_type=jnp.float32) + bqkv_ref[...]   # (S, 3E)

    # --- per-head attention with static, 128-aligned lane slices
    # (torch column layout: reshape(B,S,H,3*hd).chunk(3, -1)).
    ctx_parts = []
    for h in range(H):                                    # static unroll (H small)
        base = h * 3 * hd
        qh = qkv[:, base:base + hd].astype(jnp.bfloat16)          # (S, hd)
        kh = qkv[:, base + hd:base + 2 * hd].astype(jnp.bfloat16)
        vh = qkv[:, base + 2 * hd:base + 3 * hd].astype(jnp.bfloat16)

        # q @ k^T via dot_general contracting last dims (no explicit transpose)
        s = lax.dot_general(qh, kh, (((1,), (1,)), ((), ())),
                            preferred_element_type=jnp.float32)   # (S, S)
        if use_alibi:
            s = s + alibi_ref[h]

        m = jnp.max(s, axis=-1, keepdims=True)
        p = jnp.exp(s - m)
        # exact division so returned attention rows sum to 1 (torch.softmax parity)
        attn_h = p / jnp.sum(p, axis=-1, keepdims=True)
        if return_attn:
            attn_ref[h] = attn_h
        ctx_parts.append(jnp.dot(attn_h.astype(jnp.bfloat16), vh,
                                 preferred_element_type=jnp.float32))  # (S, hd)

    ctx = jnp.concatenate(ctx_parts, axis=-1)             # (S, E), head-major

    proj = jnp.dot(ctx.astype(jnp.bfloat16), wo_ref[...],
                   preferred_element_type=jnp.float32) + bo_ref[...]

    # TODO(synk): dropout omitted (identity / eval mode).
    x1 = _layernorm(xb + proj, g1_ref[...], be1_ref[...])

    # --- feed-forward ---
    h1 = jnp.maximum(
        jnp.dot(x1.astype(jnp.bfloat16), w1_ref[...],
                preferred_element_type=jnp.float32) + bf1_ref[...], 0.0)
    ff = jnp.dot(h1.astype(jnp.bfloat16), w2_ref[...],
                 preferred_element_type=jnp.float32) + bf2_ref[...]

    x2 = _layernorm(x1 + ff, g2_ref[...], be2_ref[...])
    x_carry[...] = x2

    # --- fused mean pool over the sequence, emitted only after the last layer
    @pl.when(l == pl.num_programs(1) - 1)
    def _():
        pooled_ref[0] = jnp.mean(x2, axis=0, keepdims=True)


# ----------------------------------------------------------------------------
# Wrapper
# ----------------------------------------------------------------------------
def _vmem_limit_bytes(S, E, H, FF, use_alibi, return_attn):
    # Budget computed from actual block sizes (weights double-buffered even
    # with layer-indexed maps), clamped below any generation's physical VMEM.
    bf16, f32 = 2, 4
    w = (E * 3 * E + E * E + E * FF + FF * E) * bf16      # per-layer matmul weights
    w += (3 * E + E + FF + E + 4 * E) * f32               # biases + LN params
    buf = 2 * w                                           # double-buffered weights
    buf += 2 * S * E * f32                                # x input block
    buf += 2 * E * f32                                    # pooled output block
    if return_attn:
        buf += 2 * H * S * S * f32                        # attn output block
    if use_alibi:
        buf += H * S * S * f32                            # resident alibi bias
    buf += S * E * f32                                    # x carry scratch
    inter = (3 * S * E + S * 3 * E + 3 * S * S + S * FF) * f32   # live intermediates
    total = buf + inter
    return int(min(max(2 * total + (4 << 20), 32 << 20), 48 << 20))


def run_fused_encoder(x, alibi_bias, lw, *, num_heads, use_alibi, return_attn=True):
    B, S, E = x.shape
    H = num_heads
    L = lw["wqkv"].shape[0]
    FF = lw["w1"].shape[-1]

    weight_order = ("wqkv", "bqkv", "wo", "bo", "g1", "be1",
                    "w1", "bf1", "w2", "bf2", "g2", "be2")
    weights = [lw[name] for name in weight_order]

    def wspec(arr):
        rest = arr.shape[1:]                              # stacked (L, *rest)
        return pl.BlockSpec((None,) + rest,
                            lambda b, l, _rest=rest: (l,) + (0,) * len(_rest))

    in_specs = [pl.BlockSpec((1, S, E), lambda b, l: (b, 0, 0))]
    inputs = [x]
    if use_alibi:
        in_specs.append(pl.BlockSpec(alibi_bias.shape, lambda b, l: (0, 0, 0)))
        inputs.append(alibi_bias)
    in_specs += [wspec(w) for w in weights]
    inputs += weights

    out_shapes, out_specs = [], []
    if return_attn:
        out_shapes.append(jax.ShapeDtypeStruct((B, L, H, S, S), jnp.float32))
        out_specs.append(pl.BlockSpec((None, None, H, S, S),
                                      lambda b, l: (b, l, 0, 0, 0)))
    out_shapes.append(jax.ShapeDtypeStruct((B, 1, E), jnp.float32))
    out_specs.append(pl.BlockSpec((1, 1, E), lambda b, l: (b, 0, 0)))

    kernel = functools.partial(fused_encoder_kernel, num_heads=H,
                               use_alibi=use_alibi, return_attn=return_attn)

    outs = pl.pallas_call(
        kernel,
        grid=(B, L),                                      # layer axis innermost
        in_specs=in_specs,
        out_specs=tuple(out_specs),
        out_shape=tuple(out_shapes),
        scratch_shapes=[pltpu.VMEM((S, E), jnp.float32)],  # x carried across layers
        compiler_params=pltpu.CompilerParams(
            dimension_semantics=("parallel", "arbitrary"),
            vmem_limit_bytes=_vmem_limit_bytes(S, E, H, FF, use_alibi, return_attn)),
    )(*inputs)

    if return_attn:
        attn, pooled3 = outs
    else:
        attn = None
        pooled3 = outs[0] if isinstance(outs, (tuple, list)) else outs
    return pooled3[:, 0, :], attn


def transformer_encoder_forward(params, x_tok, *, num_heads, position,
                                return_attn=True):
    B, S = x_tok.shape

    # TODO(synk): token/position embedding gather left to XLA glue
    # (data-dependent gather; not worth a dedicated kernel at these sizes).
    positions = jnp.arange(S, dtype=jnp.int32)
    x = jnp.take(params["tok_emb"], x_tok, axis=0) + \
        jnp.take(params["pos_emb"], positions, axis=0)[None, :, :]
    x = x.astype(jnp.float32)
    # TODO(synk): dropout omitted (identity / eval mode).

    alibi = _alibi_bias(num_heads, S) if position else None

    pooled, attn = run_fused_encoder(x, alibi, params["layers"],
                                     num_heads=num_heads, use_alibi=position,
                                     return_attn=return_attn)
    if return_attn:
        attn_all = [attn[:, l] for l in range(attn.shape[1])]
    else:
        attn_all = []
    return pooled, attn_all


# ----------------------------------------------------------------------------
# Deterministic parameter construction (per-layer weights stacked on axis 0)
# ----------------------------------------------------------------------------
def make_params(key, vocab_size, embed_dim, num_heads, num_layers,
                feedforward_dim, max_seq_length):
    E, FF, L = embed_dim, feedforward_dim, num_layers
    hd = E // num_heads
    scale = 1.0 / math.sqrt(hd)
    # Fold 1/sqrt(head_dim) into the q columns of the fused qkv projection:
    # columns with (c % (3*hd)) < hd are q columns of some head (torch layout).
    col_scale = jnp.where((jnp.arange(3 * E) % (3 * hd)) < hd,
                          jnp.float32(scale), jnp.float32(1.0))

    def nrm(k, shape, s=0.02):
        return (s * jax.random.normal(k, shape)).astype(jnp.float32)

    keys = iter(jax.random.split(key, 2 + 8 * L))
    params = {"tok_emb": nrm(next(keys), (vocab_size, E)),
              "pos_emb": nrm(next(keys), (max_seq_length, E))}

    acc = {n: [] for n in ("wqkv", "bqkv", "wo", "bo", "g1", "be1",
                           "w1", "bf1", "w2", "bf2", "g2", "be2")}
    for _ in range(L):
        acc["wqkv"].append((nrm(next(keys), (E, 3 * E)) * col_scale[None, :])
                           .astype(jnp.bfloat16))
        acc["bqkv"].append(nrm(next(keys), (1, 3 * E)) * col_scale[None, :])
        acc["wo"].append(nrm(next(keys), (E, E)).astype(jnp.bfloat16))
        acc["bo"].append(nrm(next(keys), (1, E)))
        acc["w1"].append(nrm(next(keys), (E, FF)).astype(jnp.bfloat16))
        acc["bf1"].append(nrm(next(keys), (1, FF)))
        acc["w2"].append(nrm(next(keys), (FF, E)).astype(jnp.bfloat16))
        acc["bf2"].append(nrm(next(keys), (1, E)))
        acc["g1"].append(jnp.ones((1, E), jnp.float32))
        acc["be1"].append(jnp.zeros((1, E), jnp.float32))
        acc["g2"].append(jnp.ones((1, E), jnp.float32))
        acc["be2"].append(jnp.zeros((1, E), jnp.float32))

    params["layers"] = {n: jnp.stack(v) for n, v in acc.items()}
    return params


if __name__ == "__main__":
    VOCAB = 512
    EMBED = 256      # E multiple of 128 -> lane-dense blocks
    HEADS = 2        # head_dim = 128    -> 128-aligned static lane slices
    LAYERS = 2
    FFDIM = 512
    MAXSEQ = 128
    POSITION = True  # use ALiBi positional bias
    B, S = 2, 128

    key = jax.random.PRNGKey(0)
    kp, kx = jax.random.split(key, 2)
    params = make_params(kp, VOCAB, EMBED, HEADS, LAYERS, FFDIM, MAXSEQ)
    x_tok = jax.random.randint(kx, (B, S), 0, VOCAB, dtype=jnp.int32)

    fwd = jax.jit(functools.partial(transformer_encoder_forward,
                                    num_heads=HEADS, position=POSITION))
    pooled, attn_all = fwd(params, x_tok)

    jax.block_until_ready(pooled)
    for a in attn_all:
        jax.block_until_ready(a)

    assert pooled.shape == (B, EMBED)
    assert len(attn_all) == LAYERS
    assert all(a.shape == (B, HEADS, S, S) for a in attn_all)
    assert bool(jnp.all(jnp.isfinite(pooled)))
    # softmax rows must sum to ~1 (exact division used in the kernel)
    row_sums = jnp.sum(attn_all[0], axis=-1)
    assert bool(jnp.all(jnp.abs(row_sums - 1.0) < 1e-3))
    print("KERNEL_OK")
</pallas_src>

<mosaic_0001>
module attributes {stable_mosaic.version = 11 : i64} {
  func.func @fused_encoder_kernel(%arg0: i32, %arg1: i32, %arg2: memref<1x128x256xf32, #tpu.memory_space<vmem>>, %arg3: memref<2x128x128xf32, #tpu.memory_space<vmem>>, %arg4: memref<1x256x768xbf16, #tpu.memory_space<vmem>>, %arg5: memref<1x1x768xf32, #tpu.memory_space<vmem>>, %arg6: memref<1x256x256xbf16, #tpu.memory_space<vmem>>, %arg7: memref<1x1x256xf32, #tpu.memory_space<vmem>>, %arg8: memref<1x1x256xf32, #tpu.memory_space<vmem>>, %arg9: memref<1x1x256xf32, #tpu.memory_space<vmem>>, %arg10: memref<1x256x512xbf16, #tpu.memory_space<vmem>>, %arg11: memref<1x1x512xf32, #tpu.memory_space<vmem>>, %arg12: memref<1x512x256xbf16, #tpu.memory_space<vmem>>, %arg13: memref<1x1x256xf32, #tpu.memory_space<vmem>>, %arg14: memref<1x1x256xf32, #tpu.memory_space<vmem>>, %arg15: memref<1x1x256xf32, #tpu.memory_space<vmem>>, %arg16: memref<1x1x2x128x128xf32, #tpu.memory_space<vmem>>, %arg17: memref<1x1x256xf32, #tpu.memory_space<vmem>>, %arg18: memref<128x256xf32, #tpu.memory_space<vmem>>) attributes {dimension_semantics = [#tpu.dimension_semantics<parallel>, #tpu.dimension_semantics<arbitrary>], iteration_bounds = array<i64: 2, 2>, scalar_prefetch = 0 : i64, scratch_operands = 1 : i64, tpu.core_type = #tpu.core_type<tc>, window_params = [{transform_indices = @transform_0, window_bounds = array<i64: 1, 128, 256>}, {pipeline_mode = #tpu.pipeline_mode<synchronous>, transform_indices = @transform_1, window_bounds = array<i64: 2, 128, 128>}, {transform_indices = @transform_2, window_bounds = array<i64: 1, 256, 768>}, {transform_indices = @transform_3, window_bounds = array<i64: 1, 1, 768>}, {transform_indices = @transform_4, window_bounds = array<i64: 1, 256, 256>}, {transform_indices = @transform_5, window_bounds = array<i64: 1, 1, 256>}, {transform_indices = @transform_6, window_bounds = array<i64: 1, 1, 256>}, {transform_indices = @transform_7, window_bounds = array<i64: 1, 1, 256>}, {transform_indices = @transform_8, window_bounds = array<i64: 1, 256, 512>}, {transform_indices = @transform_9, window_bounds = array<i64: 1, 1, 512>}, {transform_indices = @transform_10, window_bounds = array<i64: 1, 512, 256>}, {transform_indices = @transform_11, window_bounds = array<i64: 1, 1, 256>}, {transform_indices = @transform_12, window_bounds = array<i64: 1, 1, 256>}, {transform_indices = @transform_13, window_bounds = array<i64: 1, 1, 256>}, {transform_indices = @transform_14, window_bounds = array<i64: 1, 1, 2, 128, 128>}, {transform_indices = @transform_15, window_bounds = array<i64: 1, 1, 256>}]} {
    %c0_i32 = arith.constant 0 : i32
    %0 = arith.cmpi eq, %arg1, %c0_i32 : i32
    %1 = arith.extui %0 : i1 to i32
    %c0_i32_0 = arith.constant 0 : i32
    %2 = arith.cmpi ne, %1, %c0_i32_0 : i32
    scf.if %2 {
      %c0_78 = arith.constant 0 : index
      %c0_79 = arith.constant 0 : index
      %c0_80 = arith.constant 0 : index
      %145 = vector.load %arg2[%c0_78, %c0_79, %c0_80] : memref<1x128x256xf32, #tpu.memory_space<vmem>>, vector<1x128x256xf32>
      %146 = vector.shape_cast %145 : vector<1x128x256xf32> to vector<128x256xf32>
      %c0_81 = arith.constant 0 : index
      %c0_82 = arith.constant 0 : index
      %147 = vector.load %arg18[%c0_81, %c0_82] : memref<128x256xf32, #tpu.memory_space<vmem>>, vector<128x256xf32>
      tpu.vector_store %arg18[%c0_81, %c0_82], %146 {strides = array<i32>} : memref<128x256xf32, #tpu.memory_space<vmem>>, vector<128x256xf32>,
    } else {
    }
    %c0 = arith.constant 0 : index
    %c0_1 = arith.constant 0 : index
    %3 = vector.load %arg18[%c0, %c0_1] : memref<128x256xf32, #tpu.memory_space<vmem>>, vector<128x256xf32>
    %4 = arith.truncf %3 : vector<128x256xf32> to vector<128x256xbf16>
    %c0_2 = arith.constant 0 : index
    %c0_3 = arith.constant 0 : index
    %c0_4 = arith.constant 0 : index
    %5 = vector.load %arg4[%c0_2, %c0_3, %c0_4] : memref<1x256x768xbf16, #tpu.memory_space<vmem>>, vector<1x256x768xbf16>
    %6 = vector.shape_cast %5 : vector<1x256x768xbf16> to vector<256x768xbf16>
    %cst = arith.constant dense<0.000000e+00> : vector<128x768xf32>
    %7 = tpu.matmul %4, %6, %cst {dimension_numbers = #tpu.dot_dimension_numbers<[1], [0], [0], [1], [0, 0, 1, 1], [], []>} : vector<128x256xbf16>, vector<256x768xbf16>, vector<128x768xf32> -> vector<128x768xf32>
    %c0_5 = arith.constant 0 : index
    %c0_6 = arith.constant 0 : index
    %c0_7 = arith.constant 0 : index
    %8 = vector.load %arg5[%c0_5, %c0_6, %c0_7] : memref<1x1x768xf32, #tpu.memory_space<vmem>>, vector<1x1x768xf32>
    %9 = vector.shape_cast %8 : vector<1x1x768xf32> to vector<1x768xf32>
    %10 = vector.broadcast %9 : vector<1x768xf32> to vector<128x768xf32>
    %11 = arith.addf %7, %10 : vector<128x768xf32>
    %12 = vector.extract_strided_slice %11 {offsets = [0, 0], sizes = [128, 128], strides = [1, 1]} : vector<128x768xf32> to vector<128x128xf32>
    %13 = arith.truncf %12 : vector<128x128xf32> to vector<128x128xbf16>
    %14 = vector.extract_strided_slice %11 {offsets = [0, 128], sizes = [128, 128], strides = [1, 1]} : vector<128x768xf32> to vector<128x128xf32>
    %15 = arith.truncf %14 : vector<128x128xf32> to vector<128x128xbf16>
    %16 = vector.extract_strided_slice %11 {offsets = [0, 256], sizes = [128, 128], strides = [1, 1]} : vector<128x768xf32> to vector<128x128xf32>
    %17 = arith.truncf %16 : vector<128x128xf32> to vector<128x128xbf16>
    %cst_8 = arith.constant dense<0.000000e+00> : vector<128x128xf32>
    %18 = tpu.matmul %13, %15, %cst_8 {dimension_numbers = #tpu.dot_dimension_numbers<[1], [1], [0], [0], [0, 0, 1, 0], [], []>} : vector<128x128xbf16>, vector<128x128xbf16>, vector<128x128xf32> -> vector<128x128xf32>
    %c0_9 = arith.constant 0 : index
    %c0_10 = arith.constant 0 : index
    %c0_11 = arith.constant 0 : index
    %19 = vector.load %arg3[%c0_9, %c0_10, %c0_11] : memref<2x128x128xf32, #tpu.memory_space<vmem>>, vector<1x128x128xf32>
    %20 = vector.shape_cast %19 : vector<1x128x128xf32> to vector<128x128xf32>
    %21 = arith.addf %18, %20 : vector<128x128xf32>
    %cst_12 = arith.constant dense<0xFF800000> : vector<128xf32>
    %22 = vector.multi_reduction <maximumf>, %21, %cst_12 [1] : vector<128x128xf32> to vector<128xf32>
    %23 = vector.shape_cast %22 : vector<128xf32> to vector<128x1xf32>
    %24 = vector.broadcast %23 : vector<128x1xf32> to vector<128x128xf32>
    %25 = arith.subf %21, %24 : vector<128x128xf32>
    %26 = math.exp %25 : vector<128x128xf32>
    %cst_13 = arith.constant dense<0.000000e+00> : vector<128xf32>
    %27 = vector.multi_reduction <add>, %26, %cst_13 [1] : vector<128x128xf32> to vector<128xf32>
    %28 = vector.shape_cast %27 : vector<128xf32> to vector<128x1xf32>
    %29 = vector.broadcast %28 : vector<128x1xf32> to vector<128x128xf32>
    %30 = arith.divf %26, %29 : vector<128x128xf32>
    %c0_14 = arith.constant 0 : index
    %c0_15 = arith.constant 0 : index
    %c0_16 = arith.constant 0 : index
    %c0_17 = arith.constant 0 : index
    %c0_18 = arith.constant 0 : index
    %31 = vector.load %arg16[%c0_14, %c0_15, %c0_16, %c0_17, %c0_18] : memref<1x1x2x128x128xf32, #tpu.memory_space<vmem>>, vector<1x1x1x128x128xf32>
    %32 = vector.shape_cast %31 : vector<1x1x1x128x128xf32> to vector<128x128xf32>
    %33 = vector.shape_cast %30 : vector<128x128xf32> to vector<1x1x1x128x128xf32>
    tpu.vector_store %arg16[%c0_14, %c0_15, %c0_16, %c0_17, %c0_18], %33 {strides = array<i32>} : memref<1x1x2x128x128xf32, #tpu.memory_space<vmem>>, vector<1x1x1x128x128xf32>,
    %34 = arith.truncf %30 : vector<128x128xf32> to vector<128x128xbf16>
    %cst_19 = arith.constant dense<0.000000e+00> : vector<128x128xf32>
    %35 = tpu.matmul %34, %17, %cst_19 {dimension_numbers = #tpu.dot_dimension_numbers<[1], [0], [0], [1], [0, 0, 1, 1], [], []>} : vector<128x128xbf16>, vector<128x128xbf16>, vector<128x128xf32> -> vector<128x128xf32>
    %36 = vector.extract_strided_slice %11 {offsets = [0, 384], sizes = [128, 128], strides = [1, 1]} : vector<128x768xf32> to vector<128x128xf32>
    %37 = arith.truncf %36 : vector<128x128xf32> to vector<128x128xbf16>
    %38 = vector.extract_strided_slice %11 {offsets = [0, 512], sizes = [128, 128], strides = [1, 1]} : vector<128x768xf32> to vector<128x128xf32>
    %39 = arith.truncf %38 : vector<128x128xf32> to vector<128x128xbf16>
    %40 = vector.extract_strided_slice %11 {offsets = [0, 640], sizes = [128, 128], strides = [1, 1]} : vector<128x768xf32> to vector<128x128xf32>
    %41 = arith.truncf %40 : vector<128x128xf32> to vector<128x128xbf16>
    %cst_20 = arith.constant dense<0.000000e+00> : vector<128x128xf32>
    %42 = tpu.matmul %37, %39, %cst_20 {dimension_numbers = #tpu.dot_dimension_numbers<[1], [1], [0], [0], [0, 0, 1, 0], [], []>} : vector<128x128xbf16>, vector<128x128xbf16>, vector<128x128xf32> -> vector<128x128xf32>
    %c1 = arith.constant 1 : index
    %c0_21 = arith.constant 0 : index
    %c0_22 = arith.constant 0 : index
    %43 = vector.load %arg3[%c1, %c0_21, %c0_22] : memref<2x128x128xf32, #tpu.memory_space<vmem>>, vector<1x128x128xf32>
    %44 = vector.shape_cast %43 : vector<1x128x128xf32> to vector<128x128xf32>
    %45 = arith.addf %42, %44 : vector<128x128xf32>
    %cst_23 = arith.constant dense<0xFF800000> : vector<128xf32>
    %46 = vector.multi_reduction <maximumf>, %45, %cst_23 [1] : vector<128x128xf32> to vector<128xf32>
    %47 = vector.shape_cast %46 : vector<128xf32> to vector<128x1xf32>
    %48 = vector.broadcast %47 : vector<128x1xf32> to vector<128x128xf32>
    %49 = arith.subf %45, %48 : vector<128x128xf32>
    %50 = math.exp %49 : vector<128x128xf32>
    %cst_24 = arith.constant dense<0.000000e+00> : vector<128xf32>
    %51 = vector.multi_reduction <add>, %50, %cst_24 [1] : vector<128x128xf32> to vector<128xf32>
    %52 = vector.shape_cast %51 : vector<128xf32> to vector<128x1xf32>
    %53 = vector.broadcast %52 : vector<128x1xf32> to vector<128x128xf32>
    %54 = arith.divf %50, %53 : vector<128x128xf32>
    %c0_25 = arith.constant 0 : index
    %c0_26 = arith.constant 0 : index
    %c1_27 = arith.constant 1 : index
    %c0_28 = arith.constant 0 : index
    %c0_29 = arith.constant 0 : index
    %55 = vector.load %arg16[%c0_25, %c0_26, %c1_27, %c0_28, %c0_29] : memref<1x1x2x128x128xf32, #tpu.memory_space<vmem>>, vector<1x1x1x128x128xf32>
    %56 = vector.shape_cast %55 : vector<1x1x1x128x128xf32> to vector<128x128xf32>
    %57 = vector.shape_cast %54 : vector<128x128xf32> to vector<1x1x1x128x128xf32>
    tpu.vector_store %arg16[%c0_25, %c0_26, %c1_27, %c0_28, %c0_29], %57 {strides = array<i32>} : memref<1x1x2x128x128xf32, #tpu.memory_space<vmem>>, vector<1x1x1x128x128xf32>,
    %58 = arith.truncf %54 : vector<128x128xf32> to vector<128x128xbf16>
    %cst_30 = arith.constant dense<0.000000e+00> : vector<128x128xf32>
    %59 = tpu.matmul %58, %41, %cst_30 {dimension_numbers = #tpu.dot_dimension_numbers<[1], [0], [0], [1], [0, 0, 1, 1], [], []>} : vector<128x128xbf16>, vector<128x128xbf16>, vector<128x128xf32> -> vector<128x128xf32>
    %60 = tpu.concatenate %35, %59 in 1 : vector<128x128xf32>, vector<128x128xf32> -> vector<128x256xf32>
    %61 = arith.truncf %60 : vector<128x256xf32> to vector<128x256xbf16>
    %c0_31 = arith.constant 0 : index
    %c0_32 = arith.constant 0 : index
    %c0_33 = arith.constant 0 : index
    %62 = vector.load %arg6[%c0_31, %c0_32, %c0_33] : memref<1x256x256xbf16, #tpu.memory_space<vmem>>, vector<1x256x256xbf16>
    %63 = vector.shape_cast %62 : vector<1x256x256xbf16> to vector<256x256xbf16>
    %cst_34 = arith.constant dense<0.000000e+00> : vector<128x256xf32>
    %64 = tpu.matmul %61, %63, %cst_34 {dimension_numbers = #tpu.dot_dimension_numbers<[1], [0], [0], [1], [0, 0, 1, 1], [], []>} : vector<128x256xbf16>, vector<256x256xbf16>, vector<128x256xf32> -> vector<128x256xf32>
    %c0_35 = arith.constant 0 : index
    %c0_36 = arith.constant 0 : index
    %c0_37 = arith.constant 0 : index
    %65 = vector.load %arg7[%c0_35, %c0_36, %c0_37] : memref<1x1x256xf32, #tpu.memory_space<vmem>>, vector<1x1x256xf32>
    %66 = vector.shape_cast %65 : vector<1x1x256xf32> to vector<1x256xf32>
    %67 = vector.broadcast %66 : vector<1x256xf32> to vector<128x256xf32>
    %68 = arith.addf %64, %67 : vector<128x256xf32>
    %69 = arith.addf %3, %68 : vector<128x256xf32>
    %c0_38 = arith.constant 0 : index
    %c0_39 = arith.constant 0 : index
    %c0_40 = arith.constant 0 : index
    %70 = vector.load %arg8[%c0_38, %c0_39, %c0_40] : memref<1x1x256xf32, #tpu.memory_space<vmem>>, vector<1x1x256xf32>
    %71 = vector.shape_cast %70 : vector<1x1x256xf32> to vector<1x256xf32>
    %c0_41 = arith.constant 0 : index
    %c0_42 = arith.constant 0 : index
    %c0_43 = arith.constant 0 : index
    %72 = vector.load %arg9[%c0_41, %c0_42, %c0_43] : memref<1x1x256xf32, #tpu.memory_space<vmem>>, vector<1x1x256xf32>
    %73 = vector.shape_cast %72 : vector<1x1x256xf32> to vector<1x256xf32>
    %cst_44 = arith.constant dense<0.000000e+00> : vector<128xf32>
    %74 = vector.multi_reduction <add>, %69, %cst_44 [1] : vector<128x256xf32> to vector<128xf32>
    %75 = vector.shape_cast %74 : vector<128xf32> to vector<128x1xf32>
    %cst_45 = arith.constant 2.560000e+02 : f32
    %76 = vector.broadcast %cst_45 : f32 to vector<128x1xf32>
    %77 = arith.divf %75, %76 : vector<128x1xf32>
    %78 = vector.broadcast %77 : vector<128x1xf32> to vector<128x256xf32>
    %79 = arith.subf %69, %78 : vector<128x256xf32>
    %80 = arith.mulf %79, %79 : vector<128x256xf32>
    %cst_46 = arith.constant dense<0.000000e+00> : vector<128xf32>
    %81 = vector.multi_reduction <add>, %80, %cst_46 [1] : vector<128x256xf32> to vector<128xf32>
    %82 = vector.shape_cast %81 : vector<128xf32> to vector<128x1xf32>
    %cst_47 = arith.constant 2.560000e+02 : f32
    %83 = vector.broadcast %cst_47 : f32 to vector<128x1xf32>
    %84 = arith.divf %82, %83 : vector<128x1xf32>
    %85 = vector.broadcast %77 : vector<128x1xf32> to vector<128x256xf32>
    %86 = arith.subf %69, %85 : vector<128x256xf32>
    %cst_48 = arith.constant 9.99999974E-6 : f32
    %87 = vector.broadcast %cst_48 : f32 to vector<128x1xf32>
    %88 = arith.addf %84, %87 : vector<128x1xf32>
    %89 = math.rsqrt %88 : vector<128x1xf32>
    %90 = vector.broadcast %89 : vector<128x1xf32> to vector<128x256xf32>
    %91 = arith.mulf %86, %90 : vector<128x256xf32>
    %92 = vector.broadcast %71 : vector<1x256xf32> to vector<128x256xf32>
    %93 = arith.mulf %91, %92 : vector<128x256xf32>
    %94 = vector.broadcast %73 : vector<1x256xf32> to vector<128x256xf32>
    %95 = arith.addf %93, %94 : vector<128x256xf32>
    %96 = arith.truncf %95 : vector<128x256xf32> to vector<128x256xbf16>
    %c0_49 = arith.constant 0 : index
    %c0_50 = arith.constant 0 : index
    %c0_51 = arith.constant 0 : index
    %97 = vector.load %arg10[%c0_49, %c0_50, %c0_51] : memref<1x256x512xbf16, #tpu.memory_space<vmem>>, vector<1x256x512xbf16>
    %98 = vector.shape_cast %97 : vector<1x256x512xbf16> to vector<256x512xbf16>
    %cst_52 = arith.constant dense<0.000000e+00> : vector<128x512xf32>
    %99 = tpu.matmul %96, %98, %cst_52 {dimension_numbers = #tpu.dot_dimension_numbers<[1], [0], [0], [1], [0, 0, 1, 1], [], []>} : vector<128x256xbf16>, vector<256x512xbf16>, vector<128x512xf32> -> vector<128x512xf32>
    %c0_53 = arith.constant 0 : index
    %c0_54 = arith.constant 0 : index
    %c0_55 = arith.constant 0 : index
    %100 = vector.load %arg11[%c0_53, %c0_54, %c0_55] : memref<1x1x512xf32, #tpu.memory_space<vmem>>, vector<1x1x512xf32>
    %101 = vector.shape_cast %100 : vector<1x1x512xf32> to vector<1x512xf32>
    %102 = vector.broadcast %101 : vector<1x512xf32> to vector<128x512xf32>
    %103 = arith.addf %99, %102 : vector<128x512xf32>
    %cst_56 = arith.constant 0.000000e+00 : f32
    %104 = vector.broadcast %cst_56 : f32 to vector<128x512xf32>
    %105 = arith.maximumf %103, %104 : vector<128x512xf32>
    %106 = arith.truncf %105 : vector<128x512xf32> to vector<128x512xbf16>
    %c0_57 = arith.constant 0 : index
    %c0_58 = arith.constant 0 : index
    %c0_59 = arith.constant 0 : index
    %107 = vector.load %arg12[%c0_57, %c0_58, %c0_59] : memref<1x512x256xbf16, #tpu.memory_space<vmem>>, vector<1x512x256xbf16>
    %108 = vector.shape_cast %107 : vector<1x512x256xbf16> to vector<512x256xbf16>
    %cst_60 = arith.constant dense<0.000000e+00> : vector<128x256xf32>
    %109 = tpu.matmul %106, %108, %cst_60 {dimension_numbers = #tpu.dot_dimension_numbers<[1], [0], [0], [1], [0, 0, 1, 1], [], []>} : vector<128x512xbf16>, vector<512x256xbf16>, vector<128x256xf32> -> vector<128x256xf32>
    %c0_61 = arith.constant 0 : index
    %c0_62 = arith.constant 0 : index
    %c0_63 = arith.constant 0 : index
    %110 = vector.load %arg13[%c0_61, %c0_62, %c0_63] : memref<1x1x256xf32, #tpu.memory_space<vmem>>, vector<1x1x256xf32>
    %111 = vector.shape_cast %110 : vector<1x1x256xf32> to vector<1x256xf32>
    %112 = vector.broadcast %111 : vector<1x256xf32> to vector<128x256xf32>
    %113 = arith.addf %109, %112 : vector<128x256xf32>
    %114 = arith.addf %95, %113 : vector<128x256xf32>
    %c0_64 = arith.constant 0 : index
    %c0_65 = arith.constant 0 : index
    %c0_66 = arith.constant 0 : index
    %115 = vector.load %arg14[%c0_64, %c0_65, %c0_66] : memref<1x1x256xf32, #tpu.memory_space<vmem>>, vector<1x1x256xf32>
    %116 = vector.shape_cast %115 : vector<1x1x256xf32> to vector<1x256xf32>
    %c0_67 = arith.constant 0 : index
    %c0_68 = arith.constant 0 : index
    %c0_69 = arith.constant 0 : index
    %117 = vector.load %arg15[%c0_67, %c0_68, %c0_69] : memref<1x1x256xf32, #tpu.memory_space<vmem>>, vector<1x1x256xf32>
    %118 = vector.shape_cast %117 : vector<1x1x256xf32> to vector<1x256xf32>
    %cst_70 = arith.constant dense<0.000000e+00> : vector<128xf32>
    %119 = vector.multi_reduction <add>, %114, %cst_70 [1] : vector<128x256xf32> to vector<128xf32>
    %120 = vector.shape_cast %119 : vector<128xf32> to vector<128x1xf32>
    %cst_71 = arith.constant 2.560000e+02 : f32
    %121 = vector.broadcast %cst_71 : f32 to vector<128x1xf32>
    %122 = arith.divf %120, %121 : vector<128x1xf32>
    %123 = vector.broadcast %122 : vector<128x1xf32> to vector<128x256xf32>
    %124 = arith.subf %114, %123 : vector<128x256xf32>
    %125 = arith.mulf %124, %124 : vector<128x256xf32>
    %cst_72 = arith.constant dense<0.000000e+00> : vector<128xf32>
    %126 = vector.multi_reduction <add>, %125, %cst_72 [1] : vector<128x256xf32> to vector<128xf32>
    %127 = vector.shape_cast %126 : vector<128xf32> to vector<128x1xf32>
    %cst_73 = arith.constant 2.560000e+02 : f32
    %128 = vector.broadcast %cst_73 : f32 to vector<128x1xf32>
    %129 = arith.divf %127, %128 : vector<128x1xf32>
    %130 = vector.broadcast %122 : vector<128x1xf32> to vector<128x256xf32>
    %131 = arith.subf %114, %130 : vector<128x256xf32>
    %cst_74 = arith.constant 9.99999974E-6 : f32
    %132 = vector.broadcast %cst_74 : f32 to vector<128x1xf32>
    %133 = arith.addf %129, %132 : vector<128x1xf32>
    %134 = math.rsqrt %133 : vector<128x1xf32>
    %135 = vector.broadcast %134 : vector<128x1xf32> to vector<128x256xf32>
    %136 = arith.mulf %131, %135 : vector<128x256xf32>
    %137 = vector.broadcast %116 : vector<1x256xf32> to vector<128x256xf32>
    %138 = arith.mulf %136, %137 : vector<128x256xf32>
    %139 = vector.broadcast %118 : vector<1x256xf32> to vector<128x256xf32>
    %140 = arith.addf %138, %139 : vector<128x256xf32>
    %c0_75 = arith.constant 0 : index
    %c0_76 = arith.constant 0 : index
    %141 = vector.load %arg18[%c0_75, %c0_76] : memref<128x256xf32, #tpu.memory_space<vmem>>, vector<128x256xf32>
    tpu.vector_store %arg18[%c0_75, %c0_76], %140 {strides = array<i32>} : memref<128x256xf32, #tpu.memory_space<vmem>>, vector<128x256xf32>,
    %c1_i32 = arith.constant 1 : i32
    %142 = arith.cmpi eq, %arg1, %c1_i32 : i32
    %143 = arith.extui %142 : i1 to i32
    %c0_i32_77 = arith.constant 0 : i32
    %144 = arith.cmpi ne, %143, %c0_i32_77 : i32
    scf.if %144 {
      %cst_78 = arith.constant dense<0.000000e+00> : vector<256xf32>
      %145 = vector.multi_reduction <add>, %140, %cst_78 [0] : vector<128x256xf32> to vector<256xf32>
      %146 = vector.shape_cast %145 : vector<256xf32> to vector<1x256xf32>
      %cst_79 = arith.constant 1.280000e+02 : f32
      %147 = vector.broadcast %cst_79 : f32 to vector<1x256xf32>
      %148 = arith.divf %146, %147 : vector<1x256xf32>
      %c0_80 = arith.constant 0 : index
      %c0_81 = arith.constant 0 : index
      %c0_82 = arith.constant 0 : index
      %149 = vector.load %arg17[%c0_80, %c0_81, %c0_82] : memref<1x1x256xf32, #tpu.memory_space<vmem>>, vector<1x1x256xf32>
      %150 = vector.shape_cast %149 : vector<1x1x256xf32> to vector<1x256xf32>
      %151 = vector.shape_cast %148 : vector<1x256xf32> to vector<1x1x256xf32>
      tpu.vector_store %arg17[%c0_80, %c0_81, %c0_82], %151 {strides = array<i32>} : memref<1x1x256xf32, #tpu.memory_space<vmem>>, vector<1x1x256xf32>,
    } else {
    }
    return
  }
  func.func @transform_0(%arg0: i32, %arg1: i32) -> (i32, i32, i32) {
    %c0_i32 = arith.constant 0 : i32
    %c0_i32_0 = arith.constant 0 : i32
    %c0_i32_1 = arith.constant 0 : i32
    return %arg0, %c0_i32, %c0_i32_0 : i32, i32, i32
  }
  func.func @transform_1(%arg0: i32, %arg1: i32) -> (i32, i32, i32) {
    %c0_i32 = arith.constant 0 : i32
    %c0_i32_0 = arith.constant 0 : i32
    %c0_i32_1 = arith.constant 0 : i32
    %c0_i32_2 = arith.constant 0 : i32
    return %c0_i32, %c0_i32_0, %c0_i32_1 : i32, i32, i32
  }
  func.func @transform_2(%arg0: i32, %arg1: i32) -> (i32, i32, i32) {
    %c0_i32 = arith.constant 0 : i32
    %c0_i32_0 = arith.constant 0 : i32
    %c0_i32_1 = arith.constant 0 : i32
    return %arg1, %c0_i32, %c0_i32_0 : i32, i32, i32
  }
  func.func @transform_3(%arg0: i32, %arg1: i32) -> (i32, i32, i32) {
    %c0_i32 = arith.constant 0 : i32
    %c0_i32_0 = arith.constant 0 : i32
    %c0_i32_1 = arith.constant 0 : i32
    return %arg1, %c0_i32, %c0_i32_0 : i32, i32, i32
  }
  func.func @transform_4(%arg0: i32, %arg1: i32) -> (i32, i32, i32) {
    %c0_i32 = arith.constant 0 : i32
    %c0_i32_0 = arith.constant 0 : i32
    %c0_i32_1 = arith.constant 0 : i32
    return %arg1, %c0_i32, %c0_i32_0 : i32, i32, i32
  }
  func.func @transform_5(%arg0: i32, %arg1: i32) -> (i32, i32, i32) {
    %c0_i32 = arith.constant 0 : i32
    %c0_i32_0 = arith.constant 0 : i32
    %c0_i32_1 = arith.constant 0 : i32
    return %arg1, %c0_i32, %c0_i32_0 : i32, i32, i32
  }
  func.func @transform_6(%arg0: i32, %arg1: i32) -> (i32, i32, i32) {
    %c0_i32 = arith.constant 0 : i32
    %c0_i32_0 = arith.constant 0 : i32
    %c0_i32_1 = arith.constant 0 : i32
    return %arg1, %c0_i32, %c0_i32_0 : i32, i32, i32
  }
  func.func @transform_7(%arg0: i32, %arg1: i32) -> (i32, i32, i32) {
    %c0_i32 = arith.constant 0 : i32
    %c0_i32_0 = arith.constant 0 : i32
    %c0_i32_1 = arith.constant 0 : i32
    return %arg1, %c0_i32, %c0_i32_0 : i32, i32, i32
  }
  func.func @transform_8(%arg0: i32, %arg1: i32) -> (i32, i32, i32) {
    %c0_i32 = arith.constant 0 : i32
    %c0_i32_0 = arith.constant 0 : i32
    %c0_i32_1 = arith.constant 0 : i32
    return %arg1, %c0_i32, %c0_i32_0 : i32, i32, i32
  }
  func.func @transform_9(%arg0: i32, %arg1: i32) -> (i32, i32, i32) {
    %c0_i32 = arith.constant 0 : i32
    %c0_i32_0 = arith.constant 0 : i32
    %c0_i32_1 = arith.constant 0 : i32
    return %arg1, %c0_i32, %c0_i32_0 : i32, i32, i32
  }
  func.func @transform_10(%arg0: i32, %arg1: i32) -> (i32, i32, i32) {
    %c0_i32 = arith.constant 0 : i32
    %c0_i32_0 = arith.constant 0 : i32
    %c0_i32_1 = arith.constant 0 : i32
    return %arg1, %c0_i32, %c0_i32_0 : i32, i32, i32
  }
  func.func @transform_11(%arg0: i32, %arg1: i32) -> (i32, i32, i32) {
    %c0_i32 = arith.constant 0 : i32
    %c0_i32_0 = arith.constant 0 : i32
    %c0_i32_1 = arith.constant 0 : i32
    return %arg1, %c0_i32, %c0_i32_0 : i32, i32, i32
  }
  func.func @transform_12(%arg0: i32, %arg1: i32) -> (i32, i32, i32) {
    %c0_i32 = arith.constant 0 : i32
    %c0_i32_0 = arith.constant 0 : i32
    %c0_i32_1 = arith.constant 0 : i32
    return %arg1, %c0_i32, %c0_i32_0 : i32, i32, i32
  }
  func.func @transform_13(%arg0: i32, %arg1: i32) -> (i32, i32, i32) {
    %c0_i32 = arith.constant 0 : i32
    %c0_i32_0 = arith.constant 0 : i32
    %c0_i32_1 = arith.constant 0 : i32
    return %arg1, %c0_i32, %c0_i32_0 : i32, i32, i32
  }
  func.func @transform_14(%arg0: i32, %arg1: i32) -> (i32, i32, i32, i32, i32) {
    %c0_i32 = arith.constant 0 : i32
    %c0_i32_0 = arith.constant 0 : i32
    %c0_i32_1 = arith.constant 0 : i32
    %c0_i32_2 = arith.constant 0 : i32
    return %arg0, %arg1, %c0_i32, %c0_i32_0, %c0_i32_1 : i32, i32, i32, i32, i32
  }
  func.func @transform_15(%arg0: i32, %arg1: i32) -> (i32, i32, i32) {
    %c0_i32 = arith.constant 0 : i32
    %c0_i32_0 = arith.constant 0 : i32
    %c0_i32_1 = arith.constant 0 : i32
    return %arg0, %c0_i32, %c0_i32_0 : i32, i32, i32
  }
}

</mosaic_0001>

<llo_original>
// kernel: transformer_encoder_forward.1
$region0: #{transformer_encoder_forward.1}
  #allocation0 [shape = 'u32[]', space=smem, size = 0x4, offset = 0x4, fixed_abs, tag = 'smem constant byte address 0x4 - core index']
  #allocation1 [shape = 'u32[144,128]{1,0:T(1,128)}', space=vmem, size = 0x12000, scoped, tag = 'internal scratch']
  #allocation2 [shape = 'f32[128,256]{1,0:T(8,128)}', space=vmem, size = 0x20000, scoped, tag = 'scratch operand']
  %s0 = inlined_call_operand.vmem [shape: f32[2,128,256], index: 0, kind: input, shape index: {}]
  %s1 = inlined_call_operand.vmem [shape: f32[2,128,128], index: 1, kind: input, shape index: {}]
  %s2 = inlined_call_operand.vmem [shape: bf16[2,256,768], index: 2, kind: input, shape index: {}]
  %s3 = inlined_call_operand.vmem [shape: f32[2,1,768], index: 3, kind: input, shape index: {}]
  %s4 = inlined_call_operand.vmem [shape: bf16[2,256,256], index: 4, kind: input, shape index: {}]
  %s5 = inlined_call_operand.vmem [shape: f32[2,1,256], index: 5, kind: input, shape index: {}]
  %s6 = inlined_call_operand.vmem [shape: f32[2,1,256], index: 6, kind: input, shape index: {}]
  %s7 = inlined_call_operand.vmem [shape: f32[2,1,256], index: 7, kind: input, shape index: {}]
  %s8 = inlined_call_operand.vmem [shape: bf16[2,256,512], index: 8, kind: input, shape index: {}]
  %s9 = inlined_call_operand.vmem [shape: f32[2,1,512], index: 9, kind: input, shape index: {}]
  %s10 = inlined_call_operand.vmem [shape: bf16[2,512,256], index: 10, kind: input, shape index: {}]
  %s11 = inlined_call_operand.vmem [shape: f32[2,1,256], index: 11, kind: input, shape index: {}]
  %s12 = inlined_call_operand.vmem [shape: f32[2,1,256], index: 12, kind: input, shape index: {}]
  %s13 = inlined_call_operand.vmem [shape: f32[2,1,256], index: 13, kind: input, shape index: {}]
  %s14 = inlined_call_operand.vmem [shape: f32[2,2,2,128,128], index: 14, kind: output, shape index: {0}]
  %s15 = inlined_call_operand.vmem [shape: f32[2,1,256], index: 15, kind: output, shape index: {1}]
  %16 = xla_tuple %s14, %s15
  %s17 = sld [smem:[#allocation0]]
  $region105: #{transformer_encoder_forward.1} parent=0
    _
  %s19 = ssub.s32 1, %s17
  %s20 = scalar_select 0, %s19, %s17
  loop: start=0, step=1, limit=6
  $region2: #{transformer_encoder_forward.1} parent=0 // loop_pre_header
    _
  $region3: #{transformer_encoder_forward.1} parent=0 // loop_header
    %s22 = sphi 0, %s26
    %p23 = scmp.ge.s32.totalorder %s22, 6
    %s29 = sphi 0, %s41
    %s30 = sphi 0, %s37
    %s31 = sphi 0, %s29
    %s32 = sphi 0, %s30
    %s33 = sphi 0, %s31
    %s34 = sphi 0, %s32
    %s44 = sphi 0, %s46
    %s47 = sphi 0, %s44
    %s48 = sphi 0, %s47
    %s64 = sphi 0, %s48
    %s68 = sphi 0, %s68
    %s70 = sphi 0, %s68
    %s71 = sphi 0, %s70
    %s85 = sphi 0, %s71
    %s91 = sphi 0, %s93
    %s94 = sphi 0, %s91
    %s95 = sphi 0, %s94
    %s111 = sphi 0, %s95
    %s117 = sphi 0, %s119
    %s120 = sphi 0, %s117
    %s121 = sphi 0, %s120
    %s137 = sphi 0, %s121
    %s143 = sphi 0, %s145
    %s146 = sphi 0, %s143
    %s147 = sphi 0, %s146
    %s163 = sphi 0, %s147
    %s169 = sphi 0, %s171
    %s172 = sphi 0, %s169
    %s173 = sphi 0, %s172
    %s189 = sphi 0, %s173
    %s195 = sphi 0, %s197
    %s198 = sphi 0, %s195
    %s199 = sphi 0, %s198
    %s215 = sphi 0, %s199
    %s221 = sphi 0, %s223
    %s224 = sphi 0, %s221
    %s225 = sphi 0, %s224
    %s241 = sphi 0, %s225
    %s247 = sphi 0, %s249
    %s250 = sphi 0, %s247
    %s251 = sphi 0, %s250
    %s267 = sphi 0, %s251
    %s273 = sphi 0, %s275
    %s276 = sphi 0, %s273
    %s277 = sphi 0, %s276
    %s293 = sphi 0, %s277
    %s299 = sphi 0, %s301
    %s302 = sphi 0, %s299
    %s303 = sphi 0, %s302
    %s319 = sphi 0, %s303
    %s325 = sphi 0, %s327
    %s328 = sphi 0, %s325
    %s329 = sphi 0, %s328
    %s345 = sphi 0, %s329
    %s351 = sphi 0, %s353
    %s354 = sphi 0, %s351
    %s355 = sphi 0, %s354
    %s371 = sphi 0, %s355
    %s377 = sphi 0, %s379
    %s380 = sphi 0, %s377
    %s381 = sphi 0, %s380
    %s397 = sphi 0, %s381
    %s405 = sphi 0, %s407
    %s408 = sphi 0, %s405
    %s409 = sphi 0, %s408
    %s425 = sphi 0, %s409
    %s431 = sphi 0, %s433
    %s434 = sphi 0, %s431
    %s435 = sphi 0, %s434
    %s451 = sphi 0, %s435
  $region4: #{transformer_encoder_forward.1} parent=0 // loop_header_branch
    %25 = sbr.rel (%p23) target = $region8
  $region5: #{transformer_encoder_forward.1} parent=0 // loop_body
    %s27 = ssub.s32 %s22, 1
    %s28 = ssub.s32 %s22, 2
    %s35 = sadd.s32 1, %s30
    %p36 = scmp.ge.s32.totalorder %s35, 2
    %s37 = scalar_select %p36, 0, %s35
    %s38 = sadd.s32 1, %s29
    %s39 = scalar_select %p36, %s38, %s29
    %p40 = scmp.ge.s32.totalorder %s39, 2
    %s41 = scalar_select %p40, 0, %s39
    %s42 = ssub.s32 %s29, %s41
    %p43 = scmp.eq.s32.totalorder %s42, 0
    %s45 = sadd.s32 %s44, 1
    %s46 = scalar_select %p43, %s44, %s45
    %p49 = pneg %p43
    %p50 = scmp.eq.s32.totalorder %s22, 3
    %p51 = por %p49, %p50
    %p52 = scmp.ne.s32.totalorder %s44, %s47
    %p53 = scmp.eq.s32.totalorder %s22, 0
    %p54 = por %p52, %p53
    %p55 = scmp.ne.s32.totalorder %s44, %s47
    %p56 = scmp.eq.s32.totalorder %s27, 3
    %p57 = por %p55, %p56
    %p58 = scmp.ne.s32.totalorder %s47, %s48
    %p59 = scmp.eq.s32.totalorder %s27, 0
    %p60 = por %p58, %p59
    %p61 = scmp.ne.s32.totalorder %s47, %s48
    %p62 = scmp.eq.s32.totalorder %s28, 3
    %p63 = por %p61, %p62
    %p65 = scmp.ne.s32.totalorder %s48, %s64
    %p66 = scmp.eq.s32.totalorder %s28, 0
    %p67 = por %p65, %p66
    %s69 = sadd.s32 %s68, 1
    %p72 = scmp.eq.s32.totalorder %s22, 3
    %p73 = scmp.ne.s32.totalorder %s68, %s70
    %p74 = scmp.eq.s32.totalorder %s22, 0
    %p75 = por %p73, %p74
    %p76 = scmp.ne.s32.totalorder %s68, %s70
    %p77 = scmp.eq.s32.totalorder %s27, 3
    %p78 = por %p76, %p77
    %p79 = scmp.ne.s32.totalorder %s70, %s71
    %p80 = scmp.eq.s32.totalorder %s27, 0
    %p81 = por %p79, %p80
    %p82 = scmp.ne.s32.totalorder %s70, %s71
    %p83 = scmp.eq.s32.totalorder %s28, 3
    %p84 = por %p82, %p83
    %p86 = scmp.ne.s32.totalorder %s71, %s85
    %p87 = scmp.eq.s32.totalorder %s28, 0
    %p88 = por %p86, %p87
    %s89 = ssub.s32 %s30, %s37
    %p90 = scmp.eq.s32.totalorder %s89, 0
    %s92 = sadd.s32 %s91, 1
    %s93 = scalar_select %p90, %s91, %s92
    %p96 = pneg %p90
    %p97 = scmp.eq.s32.totalorder %s22, 3
    %p98 = por %p96, %p97
    %p99 = scmp.ne.s32.totalorder %s91, %s94
    %p100 = scmp.eq.s32.totalorder %s22, 0
    %p101 = por %p99, %p100
    %p102 = scmp.ne.s32.totalorder %s91, %s94
    %p103 = scmp.eq.s32.totalorder %s27, 3
    %p104 = por %p102, %p103
    %p105 = scmp.ne.s32.totalorder %s94, %s95
    %p106 = scmp.eq.s32.totalorder %s27, 0
    %p107 = por %p105, %p106
    %p108 = scmp.ne.s32.totalorder %s94, %s95
    %p109 = scmp.eq.s32.totalorder %s28, 3
    %p110 = por %p108, %p109
    %p112 = scmp.ne.s32.totalorder %s95, %s111
    %p113 = scmp.eq.s32.totalorder %s28, 0
    %p114 = por %p112, %p113
    %s115 = ssub.s32 %s30, %s37
    %p116 = scmp.eq.s32.totalorder %s115, 0
    %s118 = sadd.s32 %s117, 1
    %s119 = scalar_select %p116, %s117, %s118
    %p122 = pneg %p116
    %p123 = scmp.eq.s32.totalorder %s22, 3
    %p124 = por %p122, %p123
    %p125 = scmp.ne.s32.totalorder %s117, %s120
    %p126 = scmp.eq.s32.totalorder %s22, 0
    %p127 = por %p125, %p126
    %p128 = scmp.ne.s32.totalorder %s117, %s120
    %p129 = scmp.eq.s32.totalorder %s27, 3
    %p130 = por %p128, %p129
    %p131 = scmp.ne.s32.totalorder %s120, %s121
    %p132 = scmp.eq.s32.totalorder %s27, 0
    %p133 = por %p131, %p132
    %p134 = scmp.ne.s32.totalorder %s120, %s121
    %p135 = scmp.eq.s32.totalorder %s28, 3
    %p136 = por %p134, %p135
    %p138 = scmp.ne.s32.totalorder %s121, %s137
    %p139 = scmp.eq.s32.totalorder %s28, 0
    %p140 = por %p138, %p139
    %s141 = ssub.s32 %s30, %s37
    %p142 = scmp.eq.s32.totalorder %s141, 0
    %s144 = sadd.s32 %s143, 1
    %s145 = scalar_select %p142, %s143, %s144
    %p148 = pneg %p142
    %p149 = scmp.eq.s32.totalorder %s22, 3
    %p150 = por %p148, %p149
    %p151 = scmp.ne.s32.totalorder %s143, %s146
    %p152 = scmp.eq.s32.totalorder %s22, 0
    %p153 = por %p151, %p152
    %p154 = scmp.ne.s32.totalorder %s143, %s146
    %p155 = scmp.eq.s32.totalorder %s27, 3
    %p156 = por %p154, %p155
    %p157 = scmp.ne.s32.totalorder %s146, %s147
    %p158 = scmp.eq.s32.totalorder %s27, 0
    %p159 = por %p157, %p158
    %p160 = scmp.ne.s32.totalorder %s146, %s147
    %p161 = scmp.eq.s32.totalorder %s28, 3
    %p162 = por %p160, %p161
    %p164 = scmp.ne.s32.totalorder %s147, %s163
    %p165 = scmp.eq.s32.totalorder %s28, 0
    %p166 = por %p164, %p165
    %s167 = ssub.s32 %s30, %s37
    %p168 = scmp.eq.s32.totalorder %s167, 0
    %s170 = sadd.s32 %s169, 1
    %s171 = scalar_select %p168, %s169, %s170
    %p174 = pneg %p168
    %p175 = scmp.eq.s32.totalorder %s22, 3
    %p176 = por %p174, %p175
    %p177 = scmp.ne.s32.totalorder %s169, %s172
    %p178 = scmp.eq.s32.totalorder %s22, 0
    %p179 = por %p177, %p178
    %p180 = scmp.ne.s32.totalorder %s169, %s172
    %p181 = scmp.eq.s32.totalorder %s27, 3
    %p182 = por %p180, %p181
    %p183 = scmp.ne.s32.totalorder %s172, %s173
    %p184 = scmp.eq.s32.totalorder %s27, 0
    %p185 = por %p183, %p184
    %p186 = scmp.ne.s32.totalorder %s172, %s173
    %p187 = scmp.eq.s32.totalorder %s28, 3
    %p188 = por %p186, %p187
    %p190 = scmp.ne.s32.totalorder %s173, %s189
    %p191 = scmp.eq.s32.totalorder %s28, 0
    %p192 = por %p190, %p191
    %s193 = ssub.s32 %s30, %s37
    %p194 = scmp.eq.s32.totalorder %s193, 0
    %s196 = sadd.s32 %s195, 1
    %s197 = scalar_select %p194, %s195, %s196
    %p200 = pneg %p194
    %p201 = scmp.eq.s32.totalorder %s22, 3
    %p202 = por %p200, %p201
    %p203 = scmp.ne.s32.totalorder %s195, %s198
    %p204 = scmp.eq.s32.totalorder %s22, 0
    %p205 = por %p203, %p204
    %p206 = scmp.ne.s32.totalorder %s195, %s198
    %p207 = scmp.eq.s32.totalorder %s27, 3
    %p208 = por %p206, %p207
    %p209 = scmp.ne.s32.totalorder %s198, %s199
    %p210 = scmp.eq.s32.totalorder %s27, 0
    %p211 = por %p209, %p210
    %p212 = scmp.ne.s32.totalorder %s198, %s199
    %p213 = scmp.eq.s32.totalorder %s28, 3
    %p214 = por %p212, %p213
    %p216 = scmp.ne.s32.totalorder %s199, %s215
    %p217 = scmp.eq.s32.totalorder %s28, 0
    %p218 = por %p216, %p217
    %s219 = ssub.s32 %s30, %s37
    %p220 = scmp.eq.s32.totalorder %s219, 0
    %s222 = sadd.s32 %s221, 1
    %s223 = scalar_select %p220, %s221, %s222
    %p226 = pneg %p220
    %p227 = scmp.eq.s32.totalorder %s22, 3
    %p228 = por %p226, %p227
    %p229 = scmp.ne.s32.totalorder %s221, %s224
    %p230 = scmp.eq.s32.totalorder %s22, 0
    %p231 = por %p229, %p230
    %p232 = scmp.ne.s32.totalorder %s221, %s224
    %p233 = scmp.eq.s32.totalorder %s27, 3
    %p234 = por %p232, %p233
    %p235 = scmp.ne.s32.totalorder %s224, %s225
    %p236 = scmp.eq.s32.totalorder %s27, 0
    %p237 = por %p235, %p236
    %p238 = scmp.ne.s32.totalorder %s224, %s225
    %p239 = scmp.eq.s32.totalorder %s28, 3
    %p240 = por %p238, %p239
    %p242 = scmp.ne.s32.totalorder %s225, %s241
    %p243 = scmp.eq.s32.totalorder %s28, 0
    %p244 = por %p242, %p243
    %s245 = ssub.s32 %s30, %s37
    %p246 = scmp.eq.s32.totalorder %s245, 0
    %s248 = sadd.s32 %s247, 1
    %s249 = scalar_select %p246, %s247, %s248
    %p252 = pneg %p246
    %p253 = scmp.eq.s32.totalorder %s22, 3
    %p254 = por %p252, %p253
    %p255 = scmp.ne.s32.totalorder %s247, %s250
    %p256 = scmp.eq.s32.totalorder %s22, 0
    %p257 = por %p255, %p256
    %p258 = scmp.ne.s32.totalorder %s247, %s250
    %p259 = scmp.eq.s32.totalorder %s27, 3
    %p260 = por %p258, %p259
    %p261 = scmp.ne.s32.totalorder %s250, %s251
    %p262 = scmp.eq.s32.totalorder %s27, 0
    %p263 = por %p261, %p262
    %p264 = scmp.ne.s32.totalorder %s250, %s251
    %p265 = scmp.eq.s32.totalorder %s28, 3
    %p266 = por %p264, %p265
    %p268 = scmp.ne.s32.totalorder %s251, %s267
    %p269 = scmp.eq.s32.totalorder %s28, 0
    %p270 = por %p268, %p269
    %s271 = ssub.s32 %s30, %s37
    %p272 = scmp.eq.s32.totalorder %s271, 0
    %s274 = sadd.s32 %s273, 1
    %s275 = scalar_select %p272, %s273, %s274
    %p278 = pneg %p272
    %p279 = scmp.eq.s32.totalorder %s22, 3
    %p280 = por %p278, %p279
    %p281 = scmp.ne.s32.totalorder %s273, %s276
    %p282 = scmp.eq.s32.totalorder %s22, 0
    %p283 = por %p281, %p282
    %p284 = scmp.ne.s32.totalorder %s273, %s276
    %p285 = scmp.eq.s32.totalorder %s27, 3
    %p286 = por %p284, %p285
    %p287 = scmp.ne.s32.totalorder %s276, %s277
    %p288 = scmp.eq.s32.totalorder %s27, 0
    %p289 = por %p287, %p288
    %p290 = scmp.ne.s32.totalorder %s276, %s277
    %p291 = scmp.eq.s32.totalorder %s28, 3
    %p292 = por %p290, %p291
    %p294 = scmp.ne.s32.totalorder %s277, %s293
    %p295 = scmp.eq.s32.totalorder %s28, 0
    %p296 = por %p294, %p295
    %s297 = ssub.s32 %s30, %s37
    %p298 = scmp.eq.s32.totalorder %s297, 0
    %s300 = sadd.s32 %s299, 1
    %s301 = scalar_select %p298, %s299, %s300
    %p304 = pneg %p298
    %p305 = scmp.eq.s32.totalorder %s22, 3
    %p306 = por %p304, %p305
    %p307 = scmp.ne.s32.totalorder %s299, %s302
    %p308 = scmp.eq.s32.totalorder %s22, 0
    %p309 = por %p307, %p308
    %p310 = scmp.ne.s32.totalorder %s299, %s302
    %p311 = scmp.eq.s32.totalorder %s27, 3
    %p312 = por %p310, %p311
    %p313 = scmp.ne.s32.totalorder %s302, %s303
    %p314 = scmp.eq.s32.totalorder %s27, 0
    %p315 = por %p313, %p314
    %p316 = scmp.ne.s32.totalorder %s302, %s303
    %p317 = scmp.eq.s32.totalorder %s28, 3
    %p318 = por %p316, %p317
    %p320 = scmp.ne.s32.totalorder %s303, %s319
    %p321 = scmp.eq.s32.totalorder %s28, 0
    %p322 = por %p320, %p321
    %s323 = ssub.s32 %s30, %s37
    %p324 = scmp.eq.s32.totalorder %s323, 0
    %s326 = sadd.s32 %s325, 1
    %s327 = scalar_select %p324, %s325, %s326
    %p330 = pneg %p324
    %p331 = scmp.eq.s32.totalorder %s22, 3
    %p332 = por %p330, %p331
    %p333 = scmp.ne.s32.totalorder %s325, %s328
    %p334 = scmp.eq.s32.totalorder %s22, 0
    %p335 = por %p333, %p334
    %p336 = scmp.ne.s32.totalorder %s325, %s328
    %p337 = scmp.eq.s32.totalorder %s27, 3
    %p338 = por %p336, %p337
    %p339 = scmp.ne.s32.totalorder %s328, %s329
    %p340 = scmp.eq.s32.totalorder %s27, 0
    %p341 = por %p339, %p340
    %p342 = scmp.ne.s32.totalorder %s328, %s329
    %p343 = scmp.eq.s32.totalorder %s28, 3
    %p344 = por %p342, %p343
    %p346 = scmp.ne.s32.totalorder %s329, %s345
    %p347 = scmp.eq.s32.totalorder %s28, 0
    %p348 = por %p346, %p347
    %s349 = ssub.s32 %s30, %s37
    %p350 = scmp.eq.s32.totalorder %s349, 0
    %s352 = sadd.s32 %s351, 1
    %s353 = scalar_select %p350, %s351, %s352
    %p356 = pneg %p350
    %p357 = scmp.eq.s32.totalorder %s22, 3
    %p358 = por %p356, %p357
    %p359 = scmp.ne.s32.totalorder %s351, %s354
    %p360 = scmp.eq.s32.totalorder %s22, 0
    %p361 = por %p359, %p360
    %p362 = scmp.ne.s32.totalorder %s351, %s354
    %p363 = scmp.eq.s32.totalorder %s27, 3
    %p364 = por %p362, %p363
    %p365 = scmp.ne.s32.totalorder %s354, %s355
    %p366 = scmp.eq.s32.totalorder %s27, 0
    %p367 = por %p365, %p366
    %p368 = scmp.ne.s32.totalorder %s354, %s355
    %p369 = scmp.eq.s32.totalorder %s28, 3
    %p370 = por %p368, %p369
    %p372 = scmp.ne.s32.totalorder %s355, %s371
    %p373 = scmp.eq.s32.totalorder %s28, 0
    %p374 = por %p372, %p373
    %s375 = ssub.s32 %s30, %s37
    %p376 = scmp.eq.s32.totalorder %s375, 0
    %s378 = sadd.s32 %s377, 1
    %s379 = scalar_select %p376, %s377, %s378
    %p382 = pneg %p376
    %p383 = scmp.eq.s32.totalorder %s22, 3
    %p384 = por %p382, %p383
    %p385 = scmp.ne.s32.totalorder %s377, %s380
    %p386 = scmp.eq.s32.totalorder %s22, 0
    %p387 = por %p385, %p386
    %p388 = scmp.ne.s32.totalorder %s377, %s380
    %p389 = scmp.eq.s32.totalorder %s27, 3
    %p390 = por %p388, %p389
    %p391 = scmp.ne.s32.totalorder %s380, %s381
    %p392 = scmp.eq.s32.totalorder %s27, 0
    %p393 = por %p391, %p392
    %p394 = scmp.ne.s32.totalorder %s380, %s381
    %p395 = scmp.eq.s32.totalorder %s28, 3
    %p396 = por %p394, %p395
    %p398 = scmp.ne.s32.totalorder %s381, %s397
    %p399 = scmp.eq.s32.totalorder %s28, 0
    %p400 = por %p398, %p399
    %s401 = ssub.s32 %s29, %s41
    %s402 = ssub.s32 %s30, %s37
    %s403 = sor.u32 %s401, %s402
    %p404 = scmp.eq.s32.totalorder %s403, 0
    %s406 = sadd.s32 %s405, 1
    %s407 = scalar_select %p404, %s405, %s406
    %p410 = pneg %p404
    %p411 = scmp.eq.s32.totalorder %s22, 3
    %p412 = por %p410, %p411
    %p413 = scmp.ne.s32.totalorder %s405, %s408
    %p414 = scmp.eq.s32.totalorder %s22, 0
    %p415 = por %p413, %p414
    %p416 = scmp.ne.s32.totalorder %s405, %s408
    %p417 = scmp.eq.s32.totalorder %s27, 3
    %p418 = por %p416, %p417
    %p419 = scmp.ne.s32.totalorder %s408, %s409
    %p420 = scmp.eq.s32.totalorder %s27, 0
    %p421 = por %p419, %p420
    %p422 = scmp.ne.s32.totalorder %s408, %s409
    %p423 = scmp.eq.s32.totalorder %s28, 3
    %p424 = por %p422, %p423
    %p426 = scmp.ne.s32.totalorder %s409, %s425
    %p427 = scmp.eq.s32.totalorder %s28, 0
    %p428 = por %p426, %p427
    %s429 = ssub.s32 %s29, %s41
    %p430 = scmp.eq.s32.totalorder %s429, 0
    %s432 = sadd.s32 %s431, 1
    %s433 = scalar_select %p430, %s431, %s432
    %p436 = pneg %p430
    %p437 = scmp.eq.s32.totalorder %s22, 3
    %p438 = por %p436, %p437
    %p439 = scmp.ne.s32.totalorder %s431, %s434
    %p440 = scmp.eq.s32.totalorder %s22, 0
    %p441 = por %p439, %p440
    %p442 = scmp.ne.s32.totalorder %s431, %s434
    %p443 = scmp.eq.s32.totalorder %s27, 3
    %p444 = por %p442, %p443
    %p445 = scmp.ne.s32.totalorder %s434, %s435
    %p446 = scmp.eq.s32.totalorder %s27, 0
    %p447 = por %p445, %p446
    %p448 = scmp.ne.s32.totalorder %s434, %s435
    %p449 = scmp.eq.s32.totalorder %s28, 3
    %p450 = por %p448, %p449
    %p452 = scmp.ne.s32.totalorder %s435, %s451
    %p453 = scmp.eq.s32.totalorder %s28, 0
    %p454 = por %p452, %p453
    %p455 = scmp.le.s32.totalorder 1, %s22
    %p456 = scmp.lt.s32.totalorder %s22, 5
    %p457 = pnand %p455, %p456
    %p458 = pneg %p457
    // Predicated region
    $region9: #{transformer_encoder_forward.1} parent=5 // pred_check
      _
    $region10: #{transformer_encoder_forward.1} parent=5 // pred_check_branch
      %460 = sbr.rel (%p457) target = $region12
    $region11: #{transformer_encoder_forward.1} parent=5 // pred_region
      %s461 = ssub.s32 %s22, 1
      // Predicated region
      $region13: #{transformer_encoder_forward.1} parent=11 // pred_check
        %p462 = pneg %p81
      $region14: #{transformer_encoder_forward.1} parent=11 // pred_check_branch
        %464 = sbr.rel (%p462) target = $region16
      $region15: #{transformer_encoder_forward.1} parent=11 // pred_region
        _
      $region16: #{transformer_encoder_forward.1} parent=11 // pred_fallthru
        _
    $region12: #{transformer_encoder_forward.1} parent=5 // pred_fallthru
      _
    %p465 = scmp.lt.s32.totalorder %s22, 4
    // Predicated region
    $region17: #{transformer_encoder_forward.1} parent=5 // pred_check
      %p466 = pneg %p465
    $region18: #{transformer_encoder_forward.1} parent=5 // pred_check_branch
      %468 = sbr.rel (%p466) target = $region20
    $region19: #{transformer_encoder_forward.1} parent=5 // pred_region
      // Predicated region
      $region21: #{transformer_encoder_forward.1} parent=19 // pred_check
        %p469 = pneg %p54
      $region22: #{transformer_encoder_forward.1} parent=19 // pred_check_branch
        %471 = sbr.rel (%p469) target = $region24
      $region23: #{transformer_encoder_forward.1} parent=19 // pred_region
        %p472 = scmp.lt.s32.totalorder %s29, 1
        %s473 = scalar_select %p472, %s29, 1
        %s474 = smul.addr %s473, 32
        %s475 = smul.addr %s474, 8
        %s476 = scalar_lea.vmem %s0, %s475
      $region24: #{transformer_encoder_forward.1} parent=19 // pred_fallthru
        _
      // Predicated region
      $region25: #{transformer_encoder_forward.1} parent=19 // pred_check
        %p477 = pneg %p101
      $region26: #{transformer_encoder_forward.1} parent=19 // pred_check_branch
        %479 = sbr.rel (%p477) target = $region28
      $region27: #{transformer_encoder_forward.1} parent=19 // pred_region
        %p480 = scmp.lt.s32.totalorder %s30, 1
        %s481 = scalar_select %p480, %s30, 1
        %s482 = smul.addr %s481, 192
        %s483 = smul.addr %s482, 4
        %s484 = scalar_lea.vmem %s2, %s483
      $region28: #{transformer_encoder_forward.1} parent=19 // pred_fallthru
        _
      // Predicated region
      $region29: #{transformer_encoder_forward.1} parent=19 // pred_check
        %p485 = pneg %p127
      $region30: #{transformer_encoder_forward.1} parent=19 // pred_check_branch
        %487 = sbr.rel (%p485) target = $region32
      $region31: #{transformer_encoder_forward.1} parent=19 // pred_region
        %p488 = scmp.lt.s32.totalorder %s30, 1
        %s489 = scalar_select %p488, %s30, 1
        %s490 = smul.addr %s489, 6
        %s491 = scalar_lea.vmem %s3, %s490
      $region32: #{transformer_encoder_forward.1} parent=19 // pred_fallthru
        _
      // Predicated region
      $region33: #{transformer_encoder_forward.1} parent=19 // pred_check
        %p492 = pneg %p153
      $region34: #{transformer_encoder_forward.1} parent=19 // pred_check_branch
        %494 = sbr.rel (%p492) target = $region36
      $region35: #{transformer_encoder_forward.1} parent=19 // pred_region
        %p495 = scmp.lt.s32.totalorder %s30, 1
        %s496 = scalar_select %p495, %s30, 1
        %s497 = smul.addr %s496, 64
        %s498 = smul.addr %s497, 4
        %s499 = scalar_lea.vmem %s4, %s498
      $region36: #{transformer_encoder_forward.1} parent=19 // pred_fallthru
        _
      // Predicated region
      $region37: #{transformer_encoder_forward.1} parent=19 // pred_check
        %p500 = pneg %p179
      $region38: #{transformer_encoder_forward.1} parent=19 // pred_check_branch
        %502 = sbr.rel (%p500) target = $region40
      $region39: #{transformer_encoder_forward.1} parent=19 // pred_region
        %p503 = scmp.lt.s32.totalorder %s30, 1
        %s504 = scalar_select %p503, %s30, 1
        %s505 = smul.addr %s504, 2
        %s506 = scalar_lea.vmem %s5, %s505
      $region40: #{transformer_encoder_forward.1} parent=19 // pred_fallthru
        _
      // Predicated region
      $region41: #{transformer_encoder_forward.1} parent=19 // pred_check
        %p507 = pneg %p205
      $region42: #{transformer_encoder_forward.1} parent=19 // pred_check_branch
        %509 = sbr.rel (%p507) target = $region44
      $region43: #{transformer_encoder_forward.1} parent=19 // pred_region
        %p510 = scmp.lt.s32.totalorder %s30, 1
        %s511 = scalar_select %p510, %s30, 1
        %s512 = smul.addr %s511, 2
        %s513 = scalar_lea.vmem %s6, %s512
      $region44: #{transformer_encoder_forward.1} parent=19 // pred_fallthru
        _
      // Predicated region
      $region45: #{transformer_encoder_forward.1} parent=19 // pred_check
        %p514 = pneg %p231
      $region46: #{transformer_encoder_forward.1} parent=19 // pred_check_branch
        %516 = sbr.rel (%p514) target = $region48
      $region47: #{transformer_encoder_forward.1} parent=19 // pred_region
        %p517 = scmp.lt.s32.totalorder %s30, 1
        %s518 = scalar_select %p517, %s30, 1
        %s519 = smul.addr %s518, 2
        %s520 = scalar_lea.vmem %s7, %s519
      $region48: #{transformer_encoder_forward.1} parent=19 // pred_fallthru
        _
      // Predicated region
      $region49: #{transformer_encoder_forward.1} parent=19 // pred_check
        %p521 = pneg %p257
      $region50: #{transformer_encoder_forward.1} parent=19 // pred_check_branch
        %523 = sbr.rel (%p521) target = $region52
      $region51: #{transformer_encoder_forward.1} parent=19 // pred_region
        %p524 = scmp.lt.s32.totalorder %s30, 1
        %s525 = scalar_select %p524, %s30, 1
        %s526 = smul.addr %s525, 128
        %s527 = smul.addr %s526, 4
        %s528 = scalar_lea.vmem %s8, %s527
      $region52: #{transformer_encoder_forward.1} parent=19 // pred_fallthru
        _
      // Predicated region
      $region53: #{transformer_encoder_forward.1} parent=19 // pred_check
        %p529 = pneg %p283
      $region54: #{transformer_encoder_forward.1} parent=19 // pred_check_branch
        %531 = sbr.rel (%p529) target = $region56
      $region55: #{transformer_encoder_forward.1} parent=19 // pred_region
        %p532 = scmp.lt.s32.totalorder %s30, 1
        %s533 = scalar_select %p532, %s30, 1
        %s534 = smul.addr %s533, 4
        %s535 = scalar_lea.vmem %s9, %s534
      $region56: #{transformer_encoder_forward.1} parent=19 // pred_fallthru
        _
      // Predicated region
      $region57: #{transformer_encoder_forward.1} parent=19 // pred_check
        %p536 = pneg %p309
      $region58: #{transformer_encoder_forward.1} parent=19 // pred_check_branch
        %538 = sbr.rel (%p536) target = $region60
      $region59: #{transformer_encoder_forward.1} parent=19 // pred_region
        %p539 = scmp.lt.s32.totalorder %s30, 1
        %s540 = scalar_select %p539, %s30, 1
        %s541 = smul.addr %s540, 128
        %s542 = smul.addr %s541, 4
        %s543 = scalar_lea.vmem %s10, %s542
      $region60: #{transformer_encoder_forward.1} parent=19 // pred_fallthru
        _
      // Predicated region
      $region61: #{transformer_encoder_forward.1} parent=19 // pred_check
        %p544 = pneg %p335
      $region62: #{transformer_encoder_forward.1} parent=19 // pred_check_branch
        %546 = sbr.rel (%p544) target = $region64
      $region63: #{transformer_encoder_forward.1} parent=19 // pred_region
        %p547 = scmp.lt.s32.totalorder %s30, 1
        %s548 = scalar_select %p547, %s30, 1
        %s549 = smul.addr %s548, 2
        %s550 = scalar_lea.vmem %s11, %s549
      $region64: #{transformer_encoder_forward.1} parent=19 // pred_fallthru
        _
      // Predicated region
      $region65: #{transformer_encoder_forward.1} parent=19 // pred_check
        %p551 = pneg %p361
      $region66: #{transformer_encoder_forward.1} parent=19 // pred_check_branch
        %553 = sbr.rel (%p551) target = $region68
      $region67: #{transformer_encoder_forward.1} parent=19 // pred_region
        %p554 = scmp.lt.s32.totalorder %s30, 1
        %s555 = scalar_select %p554, %s30, 1
        %s556 = smul.addr %s555, 2
        %s557 = scalar_lea.vmem %s12, %s556
      $region68: #{transformer_encoder_forward.1} parent=19 // pred_fallthru
        _
      // Predicated region
      $region69: #{transformer_encoder_forward.1} parent=19 // pred_check
        %p558 = pneg %p387
      $region70: #{transformer_encoder_forward.1} parent=19 // pred_check_branch
        %560 = sbr.rel (%p558) target = $region72
      $region71: #{transformer_encoder_forward.1} parent=19 // pred_region
        %p561 = scmp.lt.s32.totalorder %s30, 1
        %s562 = scalar_select %p561, %s30, 1
        %s563 = smul.addr %s562, 2
        %s564 = scalar_lea.vmem %s13, %s563
      $region72: #{transformer_encoder_forward.1} parent=19 // pred_fallthru
        _
    $region20: #{transformer_encoder_forward.1} parent=5 // pred_fallthru
      _
    %p565 = scmp.le.s32.totalorder 1, %s22
    %p566 = scmp.lt.s32.totalorder %s22, 5
    %p567 = pnand %p565, %p566
    %p568 = pneg %p567
    // Predicated region
    $region73: #{transformer_encoder_forward.1} parent=5 // pred_check
      _
    $region74: #{transformer_encoder_forward.1} parent=5 // pred_check_branch
      %570 = sbr.rel (%p567) target = $region76
    $region75: #{transformer_encoder_forward.1} parent=5 // pred_region
      %s571 = ssub.s32 %s22, 1
      %p572 = scmp.lt.s32.totalorder %s31, 1
      %s573 = scalar_select %p572, %s31, 1
      %s574 = smul.addr %s573, 32
      %s575 = smul.addr %s574, 8
      %s576 = scalar_lea.vmem %s0, %s575
      %p577 = pneg %p60
      %p578 = pneg %p57
      %p579 = pneg %p81
      %p580 = pneg %p78
      %p581 = scmp.lt.s32.totalorder %s32, 1
      %s582 = scalar_select %p581, %s32, 1
      %s583 = smul.addr %s582, 192
      %s584 = smul.addr %s583, 4
      %s585 = scalar_lea.vmem %s2, %s584
      %p586 = pneg %p107
      %p587 = pneg %p104
      %p588 = scmp.lt.s32.totalorder %s32, 1
      %s589 = scalar_select %p588, %s32, 1
      %s590 = smul.addr %s589, 6
      %s591 = scalar_lea.vmem %s3, %s590
      %p592 = pneg %p133
      %p593 = pneg %p130
      %p594 = scmp.lt.s32.totalorder %s32, 1
      %s595 = scalar_select %p594, %s32, 1
      %s596 = smul.addr %s595, 64
      %s597 = smul.addr %s596, 4
      %s598 = scalar_lea.vmem %s4, %s597
      %p599 = pneg %p159
      %p600 = pneg %p156
      %p601 = scmp.lt.s32.totalorder %s32, 1
      %s602 = scalar_select %p601, %s32, 1
      %s603 = smul.addr %s602, 2
      %s604 = scalar_lea.vmem %s5, %s603
      %p605 = pneg %p185
      %p606 = pneg %p182
      %p607 = scmp.lt.s32.totalorder %s32, 1
      %s608 = scalar_select %p607, %s32, 1
      %s609 = smul.addr %s608, 2
      %s610 = scalar_lea.vmem %s6, %s609
      %p611 = pneg %p211
      %p612 = pneg %p208
      %p613 = scmp.lt.s32.totalorder %s32, 1
      %s614 = scalar_select %p613, %s32, 1
      %s615 = smul.addr %s614, 2
      %s616 = scalar_lea.vmem %s7, %s615
      %p617 = pneg %p237
      %p618 = pneg %p234
      %p619 = scmp.lt.s32.totalorder %s32, 1
      %s620 = scalar_select %p619, %s32, 1
      %s621 = smul.addr %s620, 128
      %s622 = smul.addr %s621, 4
      %s623 = scalar_lea.vmem %s8, %s622
      %p624 = pneg %p263
      %p625 = pneg %p260
      %p626 = scmp.lt.s32.totalorder %s32, 1
      %s627 = scalar_select %p626, %s32, 1
      %s628 = smul.addr %s627, 4
      %s629 = scalar_lea.vmem %s9, %s628
      %p630 = pneg %p289
      %p631 = pneg %p286
      %p632 = scmp.lt.s32.totalorder %s32, 1
      %s633 = scalar_select %p632, %s32, 1
      %s634 = smul.addr %s633, 128
      %s635 = smul.addr %s634, 4
      %s636 = scalar_lea.vmem %s10, %s635
      %p637 = pneg %p315
      %p638 = pneg %p312
      %p639 = scmp.lt.s32.totalorder %s32, 1
      %s640 = scalar_select %p639, %s32, 1
      %s641 = smul.addr %s640, 2
      %s642 = scalar_lea.vmem %s11, %s641
      %p643 = pneg %p341
      %p644 = pneg %p338
      %p645 = scmp.lt.s32.totalorder %s32, 1
      %s646 = scalar_select %p645, %s32, 1
      %s647 = smul.addr %s646, 2
      %s648 = scalar_lea.vmem %s12, %s647
      %p649 = pneg %p367
      %p650 = pneg %p364
      %p651 = scmp.lt.s32.totalorder %s32, 1
      %s652 = scalar_select %p651, %s32, 1
      %s653 = smul.addr %s652, 2
      %s654 = scalar_lea.vmem %s13, %s653
      %p655 = pneg %p393
      %p656 = pneg %p390
      %p657 = pneg %p421
      %p658 = pneg %p418
      %p659 = scmp.lt.s32.totalorder %s31, 1
      %s660 = scalar_select %p659, %s31, 1
      %p661 = scmp.lt.s32.totalorder %s32, 1
      %s662 = scalar_select %p661, %s32, 1
      %s663 = smul.addr %s662, 32
      %s664 = smul.addr %s660, 64
      %s665 = sadd.s32 %s663, %s664
      %s666 = smul.addr %s665, 8
      %s667 = scalar_lea.vmem %s14, %s666
      %p668 = pneg %p447
      %p669 = pneg %p444
      %p670 = scmp.lt.s32.totalorder %s31, 1
      %s671 = scalar_select %p670, %s31, 1
      %s672 = smul.addr %s671, 2
      %s673 = scalar_lea.vmem %s15, %s672
      %p674 = scmp.lt.s32.totalorder %s31, 1
      %s675 = scalar_select %p674, %s31, 1
      %s676 = smul.addr %s675, 32
      %s677 = smul.addr %s676, 8
      %s678 = scalar_lea.vmem %s0, %s677
      %p679 = scmp.lt.s32.totalorder %s32, 1
      %s680 = scalar_select %p679, %s32, 1
      %s681 = smul.addr %s680, 192
      %s682 = smul.addr %s681, 4
      %s683 = scalar_lea.vmem %s2, %s682
      %p684 = scmp.lt.s32.totalorder %s32, 1
      %s685 = scalar_select %p684, %s32, 1
      %s686 = smul.addr %s685, 6
      %s687 = scalar_lea.vmem %s3, %s686
      %p688 = scmp.lt.s32.totalorder %s32, 1
      %s689 = scalar_select %p688, %s32, 1
      %s690 = smul.addr %s689, 64
      %s691 = smul.addr %s690, 4
      %s692 = scalar_lea.vmem %s4, %s691
      %p693 = scmp.lt.s32.totalorder %s32, 1
      %s694 = scalar_select %p693, %s32, 1
      %s695 = smul.addr %s694, 2
      %s696 = scalar_lea.vmem %s5, %s695
      %p697 = scmp.lt.s32.totalorder %s32, 1
      %s698 = scalar_select %p697, %s32, 1
      %s699 = smul.addr %s698, 2
      %s700 = scalar_lea.vmem %s6, %s699
      %p701 = scmp.lt.s32.totalorder %s32, 1
      %s702 = scalar_select %p701, %s32, 1
      %s703 = smul.addr %s702, 2
      %s704 = scalar_lea.vmem %s7, %s703
      %p705 = scmp.lt.s32.totalorder %s32, 1
      %s706 = scalar_select %p705, %s32, 1
      %s707 = smul.addr %s706, 128
      %s708 = smul.addr %s707, 4
      %s709 = scalar_lea.vmem %s8, %s708
      %p710 = scmp.lt.s32.totalorder %s32, 1
      %s711 = scalar_select %p710, %s32, 1
      %s712 = smul.addr %s711, 4
      %s713 = scalar_lea.vmem %s9, %s712
      %p714 = scmp.lt.s32.totalorder %s32, 1
      %s715 = scalar_select %p714, %s32, 1
      %s716 = smul.addr %s715, 128
      %s717 = smul.addr %s716, 4
      %s718 = scalar_lea.vmem %s10, %s717
      %p719 = scmp.lt.s32.totalorder %s32, 1
      %s720 = scalar_select %p719, %s32, 1
      %s721 = smul.addr %s720, 2
      %s722 = scalar_lea.vmem %s11, %s721
      %p723 = scmp.lt.s32.totalorder %s32, 1
      %s724 = scalar_select %p723, %s32, 1
      %s725 = smul.addr %s724, 2
      %s726 = scalar_lea.vmem %s12, %s725
      %p727 = scmp.lt.s32.totalorder %s32, 1
      %s728 = scalar_select %p727, %s32, 1
      %s729 = smul.addr %s728, 2
      %s730 = scalar_lea.vmem %s13, %s729
      %p731 = scmp.lt.s32.totalorder %s31, 1
      %s732 = scalar_select %p731, %s31, 1
      %p733 = scmp.lt.s32.totalorder %s32, 1
      %s734 = scalar_select %p733, %s32, 1
      %s735 = smul.addr %s734, 32
      %s736 = smul.addr %s732, 64
      %s737 = sadd.s32 %s735, %s736
      %s738 = smul.addr %s737, 8
      %s739 = scalar_lea.vmem %s14, %s738
      %p740 = scmp.lt.s32.totalorder %s31, 1
      %s741 = scalar_select %p740, %s31, 1
      %s742 = smul.addr %s741, 2
      %s743 = scalar_lea.vmem %s15, %s742
      %p745 = scmp.eq.s32.totalorder %s32, 0
      // Predicated region
      $region77: #{transformer_encoder_forward.1} parent=75 // pred_check
        %p746 = pneg %p745
      $region78: #{transformer_encoder_forward.1} parent=75 // pred_check_branch
        %748 = sbr.rel (%p746) target = $region80
      $region79: #{transformer_encoder_forward.1} parent=75 // pred_region
        %v749 = vld [vmem:[%s678] sm:$0xff]
        %v750 = vld [vmem:[%s678 + $0x8] sm:$0xff]
        %v751 = vld [vmem:[%s678 + $0x10] sm:$0xff]
        %v752 = vld [vmem:[%s678 + $0x18] sm:$0xff]
        %v753 = vld [vmem:[%s678 + $0x20] sm:$0xff]
        %v754 = vld [vmem:[%s678 + $0x28] sm:$0xff]
        %v755 = vld [vmem:[%s678 + $0x30] sm:$0xff]
        %v756 = vld [vmem:[%s678 + $0x38] sm:$0xff]
        %v757 = vld [vmem:[%s678 + $0x40] sm:$0xff]
        %v758 = vld [vmem:[%s678 + $0x48] sm:$0xff]
        %v759 = vld [vmem:[%s678 + $0x50] sm:$0xff]
        %v760 = vld [vmem:[%s678 + $0x58] sm:$0xff]
        %v761 = vld [vmem:[%s678 + $0x60] sm:$0xff]
        %v762 = vld [vmem:[%s678 + $0x68] sm:$0xff]
        %v763 = vld [vmem:[%s678 + $0x70] sm:$0xff]
        %v764 = vld [vmem:[%s678 + $0x78] sm:$0xff]
        %v765 = vld [vmem:[%s678 + $0x80] sm:$0xff]
        %v766 = vld [vmem:[%s678 + $0x88] sm:$0xff]
        %v767 = vld [vmem:[%s678 + $0x90] sm:$0xff]
        %v768 = vld [vmem:[%s678 + $0x98] sm:$0xff]
        %v769 = vld [vmem:[%s678 + $0xa0] sm:$0xff]
        %v770 = vld [vmem:[%s678 + $0xa8] sm:$0xff]
        %v771 = vld [vmem:[%s678 + $0xb0] sm:$0xff]
        %v772 = vld [vmem:[%s678 + $0xb8] sm:$0xff]
        %v773 = vld [vmem:[%s678 + $0xc0] sm:$0xff]
        %v774 = vld [vmem:[%s678 + $0xc8] sm:$0xff]
        %v775 = vld [vmem:[%s678 + $0xd0] sm:$0xff]
        %v776 = vld [vmem:[%s678 + $0xd8] sm:$0xff]
        %v777 = vld [vmem:[%s678 + $0xe0] sm:$0xff]
        %v778 = vld [vmem:[%s678 + $0xe8] sm:$0xff]
        %v779 = vld [vmem:[%s678 + $0xf0] sm:$0xff]
        %v780 = vld [vmem:[%s678 + $0xf8] sm:$0xff]
        %781 = vst [vmem:[#allocation2] sm:$0xff] %v749
        %782 = vst [vmem:[#allocation2 + $0x8] sm:$0xff] %v750
        %783 = vst [vmem:[#allocation2 + $0x10] sm:$0xff] %v751
        %784 = vst [vmem:[#allocation2 + $0x18] sm:$0xff] %v752
        %785 = vst [vmem:[#allocation2 + $0x20] sm:$0xff] %v753
        %786 = vst [vmem:[#allocation2 + $0x28] sm:$0xff] %v754
        %787 = vst [vmem:[#allocation2 + $0x30] sm:$0xff] %v755
        %788 = vst [vmem:[#allocation2 + $0x38] sm:$0xff] %v756
        %789 = vst [vmem:[#allocation2 + $0x40] sm:$0xff] %v757
        %790 = vst [vmem:[#allocation2 + $0x48] sm:$0xff] %v758
        %791 = vst [vmem:[#allocation2 + $0x50] sm:$0xff] %v759
        %792 = vst [vmem:[#allocation2 + $0x58] sm:$0xff] %v760
        %793 = vst [vmem:[#allocation2 + $0x60] sm:$0xff] %v761
        %794 = vst [vmem:[#allocation2 + $0x68] sm:$0xff] %v762
        %795 = vst [vmem:[#allocation2 + $0x70] sm:$0xff] %v763
        %796 = vst [vmem:[#allocation2 + $0x78] sm:$0xff] %v764
        %797 = vst [vmem:[#allocation2 + $0x80] sm:$0xff] %v765
        %798 = vst [vmem:[#allocation2 + $0x88] sm:$0xff] %v766
        %799 = vst [vmem:[#allocation2 + $0x90] sm:$0xff] %v767
        %800 = vst [vmem:[#allocation2 + $0x98] sm:$0xff] %v768
        %801 = vst [vmem:[#allocation2 + $0xa0] sm:$0xff] %v769
        %802 = vst [vmem:[#allocation2 + $0xa8] sm:$0xff] %v770
        %803 = vst [vmem:[#allocation2 + $0xb0] sm:$0xff] %v771
        %804 = vst [vmem:[#allocation2 + $0xb8] sm:$0xff] %v772
        %805 = vst [vmem:[#allocation2 + $0xc0] sm:$0xff] %v773
        %806 = vst [vmem:[#allocation2 + $0xc8] sm:$0xff] %v774
        %807 = vst [vmem:[#allocation2 + $0xd0] sm:$0xff] %v775
        %808 = vst [vmem:[#allocation2 + $0xd8] sm:$0xff] %v776
        %809 = vst [vmem:[#allocation2 + $0xe0] sm:$0xff] %v777
        %810 = vst [vmem:[#allocation2 + $0xe8] sm:$0xff] %v778
        %811 = vst [vmem:[#allocation2 + $0xf0] sm:$0xff] %v779
        %812 = vst [vmem:[#allocation2 + $0xf8] sm:$0xff] %v780
      $region80: #{transformer_encoder_forward.1} parent=75 // pred_fallthru
        _
      %v813 = vld [vmem:[#allocation2] sm:$0xff]
      %v814 = vld [vmem:[#allocation2 + $0x8] sm:$0xff]
      %v815 = vld [vmem:[#allocation2 + $0x10] sm:$0xff]
      %v816 = vld [vmem:[#allocation2 + $0x18] sm:$0xff]
      %v817 = vld [vmem:[#allocation2 + $0x20] sm:$0xff]
      %v818 = vld [vmem:[#allocation2 + $0x28] sm:$0xff]
      %v819 = vld [vmem:[#allocation2 + $0x30] sm:$0xff]
      %v820 = vld [vmem:[#allocation2 + $0x38] sm:$0xff]
      %v821 = vld [vmem:[#allocation2 + $0x40] sm:$0xff]
      %v822 = vld [vmem:[#allocation2 + $0x48] sm:$0xff]
      %v823 = vld [vmem:[#allocation2 + $0x50] sm:$0xff]
      %v824 = vld [vmem:[#allocation2 + $0x58] sm:$0xff]
      %v825 = vld [vmem:[#allocation2 + $0x60] sm:$0xff]
      %v826 = vld [vmem:[#allocation2 + $0x68] sm:$0xff]
      %v827 = vld [vmem:[#allocation2 + $0x70] sm:$0xff]
      %v828 = vld [vmem:[#allocation2 + $0x78] sm:$0xff]
      %v829 = vld [vmem:[#allocation2 + $0x80] sm:$0xff]
      %v830 = vld [vmem:[#allocation2 + $0x88] sm:$0xff]
      %v831 = vld [vmem:[#allocation2 + $0x90] sm:$0xff]
      %v832 = vld [vmem:[#allocation2 + $0x98] sm:$0xff]
      %v833 = vld [vmem:[#allocation2 + $0xa0] sm:$0xff]
      %v834 = vld [vmem:[#allocation2 + $0xa8] sm:$0xff]
      %v835 = vld [vmem:[#allocation2 + $0xb0] sm:$0xff]
      %v836 = vld [vmem:[#allocation2 + $0xb8] sm:$0xff]
      %v837 = vld [vmem:[#allocation2 + $0xc0] sm:$0xff]
      %v838 = vld [vmem:[#allocation2 + $0xc8] sm:$0xff]
      %v839 = vld [vmem:[#allocation2 + $0xd0] sm:$0xff]
      %v840 = vld [vmem:[#allocation2 + $0xd8] sm:$0xff]
      %v841 = vld [vmem:[#allocation2 + $0xe0] sm:$0xff]
      %v842 = vld [vmem:[#allocation2 + $0xe8] sm:$0xff]
      %v843 = vld [vmem:[#allocation2 + $0xf0] sm:$0xff]
      %v844 = vld [vmem:[#allocation2 + $0xf8] sm:$0xff]
      %v845 = vpack.c.bf16 %v815, %v813
      %v846 = vpack.c.bf16 %v816, %v814
      %v847 = vpack.c.bf16 %v819, %v817
      %v848 = vpack.c.bf16 %v820, %v818
      %v849 = vpack.c.bf16 %v823, %v821
      %v850 = vpack.c.bf16 %v824, %v822
      %v851 = vpack.c.bf16 %v827, %v825
      %v852 = vpack.c.bf16 %v828, %v826
      %v853 = vpack.c.bf16 %v831, %v829
      %v854 = vpack.c.bf16 %v832, %v830
      %v855 = vpack.c.bf16 %v835, %v833
      %v856 = vpack.c.bf16 %v836, %v834
      %v857 = vpack.c.bf16 %v839, %v837
      %v858 = vpack.c.bf16 %v840, %v838
      %v859 = vpack.c.bf16 %v843, %v841
      %v860 = vpack.c.bf16 %v844, %v842
      %v861 = vld [vmem:[%s683] sm:$0xff]
      %v862 = vld [vmem:[%s683 + $0x8] sm:$0xff]
      %v863 = vld [vmem:[%s683 + $0x10] sm:$0xff]
      %v864 = vld [vmem:[%s683 + $0x18] sm:$0xff]
      %v865 = vld [vmem:[%s683 + $0x20] sm:$0xff]
      %v866 = vld [vmem:[%s683 + $0x28] sm:$0xff]
      %v867 = vld [vmem:[%s683 + $0x30] sm:$0xff]
      %v868 = vld [vmem:[%s683 + $0x38] sm:$0xff]
      %v869 = vld [vmem:[%s683 + $0x40] sm:$0xff]
      %v870 = vld [vmem:[%s683 + $0x48] sm:$0xff]
      %v871 = vld [vmem:[%s683 + $0x50] sm:$0xff]
      %v872 = vld [vmem:[%s683 + $0x58] sm:$0xff]
      %v873 = vld [vmem:[%s683 + $0x60] sm:$0xff]
      %v874 = vld [vmem:[%s683 + $0x68] sm:$0xff]
      %v875 = vld [vmem:[%s683 + $0x70] sm:$0xff]
      %v876 = vld [vmem:[%s683 + $0x78] sm:$0xff]
      %v877 = vld [vmem:[%s683 + $0x80] sm:$0xff]
      %v878 = vld [vmem:[%s683 + $0x88] sm:$0xff]
      %v879 = vld [vmem:[%s683 + $0x90] sm:$0xff]
      %v880 = vld [vmem:[%s683 + $0x98] sm:$0xff]
      %v881 = vld [vmem:[%s683 + $0xa0] sm:$0xff]
      %v882 = vld [vmem:[%s683 + $0xa8] sm:$0xff]
      %v883 = vld [vmem:[%s683 + $0xb0] sm:$0xff]
      %v884 = vld [vmem:[%s683 + $0xb8] sm:$0xff]
      %v885 = vld [vmem:[%s683 + $0xc0] sm:$0xff]
      %v886 = vld [vmem:[%s683 + $0xc8] sm:$0xff]
      %v887 = vld [vmem:[%s683 + $0xd0] sm:$0xff]
      %v888 = vld [vmem:[%s683 + $0xd8] sm:$0xff]
      %v889 = vld [vmem:[%s683 + $0xe0] sm:$0xff]
      %v890 = vld [vmem:[%s683 + $0xe8] sm:$0xff]
      %v891 = vld [vmem:[%s683 + $0xf0] sm:$0xff]
      %v892 = vld [vmem:[%s683 + $0xf8] sm:$0xff]
      %v893 = vld [vmem:[%s683 + $0x100] sm:$0xff]
      %v894 = vld [vmem:[%s683 + $0x108] sm:$0xff]
      %v895 = vld [vmem:[%s683 + $0x110] sm:$0xff]
      %v896 = vld [vmem:[%s683 + $0x118] sm:$0xff]
      %v897 = vld [vmem:[%s683 + $0x120] sm:$0xff]
      %v898 = vld [vmem:[%s683 + $0x128] sm:$0xff]
      %v899 = vld [vmem:[%s683 + $0x130] sm:$0xff]
      %v900 = vld [vmem:[%s683 + $0x138] sm:$0xff]
      %v901 = vld [vmem:[%s683 + $0x140] sm:$0xff]
      %v902 = vld [vmem:[%s683 + $0x148] sm:$0xff]
      %v903 = vld [vmem:[%s683 + $0x150] sm:$0xff]
      %v904 = vld [vmem:[%s683 + $0x158] sm:$0xff]
      %v905 = vld [vmem:[%s683 + $0x160] sm:$0xff]
      %v906 = vld [vmem:[%s683 + $0x168] sm:$0xff]
      %v907 = vld [vmem:[%s683 + $0x170] sm:$0xff]
      %v908 = vld [vmem:[%s683 + $0x178] sm:$0xff]
      %v909 = vld [vmem:[%s683 + $0x180] sm:$0xff]
      %v910 = vld [vmem:[%s683 + $0x188] sm:$0xff]
      %v911 = vld [vmem:[%s683 + $0x190] sm:$0xff]
      %v912 = vld [vmem:[%s683 + $0x198] sm:$0xff]
      %v913 = vld [vmem:[%s683 + $0x1a0] sm:$0xff]
      %v914 = vld [vmem:[%s683 + $0x1a8] sm:$0xff]
      %v915 = vld [vmem:[%s683 + $0x1b0] sm:$0xff]
      %v916 = vld [vmem:[%s683 + $0x1b8] sm:$0xff]
      %v917 = vld [vmem:[%s683 + $0x1c0] sm:$0xff]
      %v918 = vld [vmem:[%s683 + $0x1c8] sm:$0xff]
      %v919 = vld [vmem:[%s683 + $0x1d0] sm:$0xff]
      %v920 = vld [vmem:[%s683 + $0x1d8] sm:$0xff]
      %v921 = vld [vmem:[%s683 + $0x1e0] sm:$0xff]
      %v922 = vld [vmem:[%s683 + $0x1e8] sm:$0xff]
      %v923 = vld [vmem:[%s683 + $0x1f0] sm:$0xff]
      %v924 = vld [vmem:[%s683 + $0x1f8] sm:$0xff]
      %v925 = vld [vmem:[%s683 + $0x200] sm:$0xff]
      %v926 = vld [vmem:[%s683 + $0x208] sm:$0xff]
      %v927 = vld [vmem:[%s683 + $0x210] sm:$0xff]
      %v928 = vld [vmem:[%s683 + $0x218] sm:$0xff]
      %v929 = vld [vmem:[%s683 + $0x220] sm:$0xff]
      %v930 = vld [vmem:[%s683 + $0x228] sm:$0xff]
      %v931 = vld [vmem:[%s683 + $0x230] sm:$0xff]
      %v932 = vld [vmem:[%s683 + $0x238] sm:$0xff]
      %v933 = vld [vmem:[%s683 + $0x240] sm:$0xff]
      %v934 = vld [vmem:[%s683 + $0x248] sm:$0xff]
      %v935 = vld [vmem:[%s683 + $0x250] sm:$0xff]
      %v936 = vld [vmem:[%s683 + $0x258] sm:$0xff]
      %v937 = vld [vmem:[%s683 + $0x260] sm:$0xff]
      %v938 = vld [vmem:[%s683 + $0x268] sm:$0xff]
      %v939 = vld [vmem:[%s683 + $0x270] sm:$0xff]
      %v940 = vld [vmem:[%s683 + $0x278] sm:$0xff]
      %v941 = vld [vmem:[%s683 + $0x280] sm:$0xff]
      %v942 = vld [vmem:[%s683 + $0x288] sm:$0xff]
      %v943 = vld [vmem:[%s683 + $0x290] sm:$0xff]
      %v944 = vld [vmem:[%s683 + $0x298] sm:$0xff]
      %v945 = vld [vmem:[%s683 + $0x2a0] sm:$0xff]
      %v946 = vld [vmem:[%s683 + $0x2a8] sm:$0xff]
      %v947 = vld [vmem:[%s683 + $0x2b0] sm:$0xff]
      %v948 = vld [vmem:[%s683 + $0x2b8] sm:$0xff]
      %v949 = vld [vmem:[%s683 + $0x2c0] sm:$0xff]
      %v950 = vld [vmem:[%s683 + $0x2c8] sm:$0xff]
      %v951 = vld [vmem:[%s683 + $0x2d0] sm:$0xff]
      %v952 = vld [vmem:[%s683 + $0x2d8] sm:$0xff]
      %v953 = vld [vmem:[%s683 + $0x2e0] sm:$0xff]
      %v954 = vld [vmem:[%s683 + $0x2e8] sm:$0xff]
      %v955 = vld [vmem:[%s683 + $0x2f0] sm:$0xff]
      %v956 = vld [vmem:[%s683 + $0x2f8] sm:$0xff]
      %v957 = vld [vmem:[%s687] sm:$0x3f]
      %v959 = vlaneseq
      %v960 = vshrl.u32 %v959, 7
      %v961 = vsub.s32 0, %v960
      %v962 = vrot.slane %v957, %v961
      %v963 = vlaneseq
      %v964 = vshrl.u32 %v963, 7
      %v965 = vsub.s32 1, %v964
      %v966 = vrot.slane %v957, %v965
      %v967 = vlaneseq
      %v968 = vshrl.u32 %v967, 7
      %v969 = vsub.s32 2, %v968
      %v970 = vrot.slane %v957, %v969
      %v971 = vlaneseq
      %v972 = vshrl.u32 %v971, 7
      %v973 = vsub.s32 3, %v972
      %v974 = vrot.slane %v957, %v973
      %v975 = vlaneseq
      %v976 = vshrl.u32 %v975, 7
      %v977 = vsub.s32 4, %v976
      %v978 = vrot.slane %v957, %v977
      %v979 = vlaneseq
      %v980 = vshrl.u32 %v979, 7
      %v981 = vsub.s32 5, %v980
      %v982 = vrot.slane %v957, %v981
      %v1085 = vunpack.c.l.b16 %v861
      %v1086 = vunpack.c.h.b16 %v861
      %v1087 = vunpack.c.l.b16 %v862
      %v1088 = vunpack.c.h.b16 %v862
      %v1089 = vunpack.c.l.b16 %v863
      %v1090 = vunpack.c.h.b16 %v863
      %v1091 = vunpack.c.l.b16 %v864
      %v1092 = vunpack.c.h.b16 %v864
      %v1093 = vunpack.c.l.b16 %v865
      %v1094 = vunpack.c.h.b16 %v865
      %v1095 = vunpack.c.l.b16 %v866
      %v1096 = vunpack.c.h.b16 %v866
      %v1097 = vunpack.c.l.b16 %v867
      %v1098 = vunpack.c.h.b16 %v867
      %v1099 = vunpack.c.l.b16 %v868
      %v1100 = vunpack.c.h.b16 %v868
      %v1101 = vunpack.c.l.b16 %v869
      %v1102 = vunpack.c.h.b16 %v869
      %v1103 = vunpack.c.l.b16 %v870
      %v1104 = vunpack.c.h.b16 %v870
      %v1105 = vunpack.c.l.b16 %v871
      %v1106 = vunpack.c.h.b16 %v871
      %v1107 = vunpack.c.l.b16 %v872
      %v1108 = vunpack.c.h.b16 %v872
      %v1109 = vunpack.c.l.b16 %v873
      %v1110 = vunpack.c.h.b16 %v873
      %v1111 = vunpack.c.l.b16 %v874
      %v1112 = vunpack.c.h.b16 %v874
      %v1113 = vunpack.c.l.b16 %v875
      %v1114 = vunpack.c.h.b16 %v875
      %v1115 = vunpack.c.l.b16 %v876
      %v1116 = vunpack.c.h.b16 %v876
      %v1117 = vunpack.c.l.b16 %v877
      %v1118 = vunpack.c.h.b16 %v877
      %v1119 = vunpack.c.l.b16 %v878
      %v1120 = vunpack.c.h.b16 %v878
      %v1121 = vunpack.c.l.b16 %v879
      %v1122 = vunpack.c.h.b16 %v879
      %v1123 = vunpack.c.l.b16 %v880
      %v1124 = vunpack.c.h.b16 %v880
      %v1125 = vunpack.c.l.b16 %v881
      %v1126 = vunpack.c.h.b16 %v881
      %v1127 = vunpack.c.l.b16 %v882
      %v1128 = vunpack.c.h.b16 %v882
      %v1129 = vunpack.c.l.b16 %v883
      %v1130 = vunpack.c.h.b16 %v883
      %v1131 = vunpack.c.l.b16 %v884
      %v1132 = vunpack.c.h.b16 %v884
      %v1133 = vunpack.c.l.b16 %v885
      %v1134 = vunpack.c.h.b16 %v885
      %v1135 = vunpack.c.l.b16 %v886
      %v1136 = vunpack.c.h.b16 %v886
      %v1137 = vunpack.c.l.b16 %v887
      %v1138 = vunpack.c.h.b16 %v887
      %v1139 = vunpack.c.l.b16 %v888
      %v1140 = vunpack.c.h.b16 %v888
      %v1141 = vunpack.c.l.b16 %v889
      %v1142 = vunpack.c.h.b16 %v889
      %v1143 = vunpack.c.l.b16 %v890
      %v1144 = vunpack.c.h.b16 %v890
      %v1145 = vunpack.c.l.b16 %v891
      %v1146 = vunpack.c.h.b16 %v891
      %v1147 = vunpack.c.l.b16 %v892
      %v1148 = vunpack.c.h.b16 %v892
      %v1149 = vunpack.c.l.b16 %v893
      %v1150 = vunpack.c.h.b16 %v893
      %v1151 = vunpack.c.l.b16 %v894
      %v1152 = vunpack.c.h.b16 %v894
      %v1153 = vunpack.c.l.b16 %v895
      %v1154 = vunpack.c.h.b16 %v895
      %v1155 = vunpack.c.l.b16 %v896
      %v1156 = vunpack.c.h.b16 %v896
      %v1157 = vunpack.c.l.b16 %v897
      %v1158 = vunpack.c.h.b16 %v897
      %v1159 = vunpack.c.l.b16 %v898
      %v1160 = vunpack.c.h.b16 %v898
      %v1161 = vunpack.c.l.b16 %v899
      %v1162 = vunpack.c.h.b16 %v899
      %v1163 = vunpack.c.l.b16 %v900
      %v1164 = vunpack.c.h.b16 %v900
      %v1165 = vunpack.c.l.b16 %v901
      %v1166 = vunpack.c.h.b16 %v901
      %v1167 = vunpack.c.l.b16 %v902
      %v1168 = vunpack.c.h.b16 %v902
      %v1169 = vunpack.c.l.b16 %v903
      %v1170 = vunpack.c.h.b16 %v903
      %v1171 = vunpack.c.l.b16 %v904
      %v1172 = vunpack.c.h.b16 %v904
      %v1173 = vunpack.c.l.b16 %v905
      %v1174 = vunpack.c.h.b16 %v905
      %v1175 = vunpack.c.l.b16 %v906
      %v1176 = vunpack.c.h.b16 %v906
      %v1177 = vunpack.c.l.b16 %v907
      %v1178 = vunpack.c.h.b16 %v907
      %v1179 = vunpack.c.l.b16 %v908
      %v1180 = vunpack.c.h.b16 %v908
      %v1181 = vunpack.c.l.b16 %v909
      %v1182 = vunpack.c.h.b16 %v909
      %v1183 = vunpack.c.l.b16 %v910
      %v1184 = vunpack.c.h.b16 %v910
      %v1185 = vunpack.c.l.b16 %v911
      %v1186 = vunpack.c.h.b16 %v911
      %v1187 = vunpack.c.l.b16 %v912
      %v1188 = vunpack.c.h.b16 %v912
      %v1189 = vunpack.c.l.b16 %v913
      %v1190 = vunpack.c.h.b16 %v913
      %v1191 = vunpack.c.l.b16 %v914
      %v1192 = vunpack.c.h.b16 %v914
      %v1193 = vunpack.c.l.b16 %v915
      %v1194 = vunpack.c.h.b16 %v915
      %v1195 = vunpack.c.l.b16 %v916
      %v1196 = vunpack.c.h.b16 %v916
      %v1197 = vunpack.c.l.b16 %v917
      %v1198 = vunpack.c.h.b16 %v917
      %v1199 = vunpack.c.l.b16 %v918
      %v1200 = vunpack.c.h.b16 %v918
      %v1201 = vunpack.c.l.b16 %v919
      %v1202 = vunpack.c.h.b16 %v919
      %v1203 = vunpack.c.l.b16 %v920
      %v1204 = vunpack.c.h.b16 %v920
      %v1205 = vunpack.c.l.b16 %v921
      %v1206 = vunpack.c.h.b16 %v921
      %v1207 = vunpack.c.l.b16 %v922
      %v1208 = vunpack.c.h.b16 %v922
      %v1209 = vunpack.c.l.b16 %v923
      %v1210 = vunpack.c.h.b16 %v923
      %v1211 = vunpack.c.l.b16 %v924
      %v1212 = vunpack.c.h.b16 %v924
      %v1213 = vunpack.c.l.b16 %v925
      %v1214 = vunpack.c.h.b16 %v925
      %v1215 = vunpack.c.l.b16 %v926
      %v1216 = vunpack.c.h.b16 %v926
      %v1217 = vunpack.c.l.b16 %v927
      %v1218 = vunpack.c.h.b16 %v927
      %v1219 = vunpack.c.l.b16 %v928
      %v1220 = vunpack.c.h.b16 %v928
      %v1221 = vunpack.c.l.b16 %v929
      %v1222 = vunpack.c.h.b16 %v929
      %v1223 = vunpack.c.l.b16 %v930
      %v1224 = vunpack.c.h.b16 %v930
      %v1225 = vunpack.c.l.b16 %v931
      %v1226 = vunpack.c.h.b16 %v931
      %v1227 = vunpack.c.l.b16 %v932
      %v1228 = vunpack.c.h.b16 %v932
      %v1229 = vunpack.c.l.b16 %v933
      %v1230 = vunpack.c.h.b16 %v933
      %v1231 = vunpack.c.l.b16 %v934
      %v1232 = vunpack.c.h.b16 %v934
      %v1233 = vunpack.c.l.b16 %v935
      %v1234 = vunpack.c.h.b16 %v935
      %v1235 = vunpack.c.l.b16 %v936
      %v1236 = vunpack.c.h.b16 %v936
      %v1237 = vunpack.c.l.b16 %v937
      %v1238 = vunpack.c.h.b16 %v937
      %v1239 = vunpack.c.l.b16 %v938
      %v1240 = vunpack.c.h.b16 %v938
      %v1241 = vunpack.c.l.b16 %v939
      %v1242 = vunpack.c.h.b16 %v939
      %v1243 = vunpack.c.l.b16 %v940
      %v1244 = vunpack.c.h.b16 %v940
      %v1245 = vunpack.c.l.b16 %v941
      %v1246 = vunpack.c.h.b16 %v941
      %v1247 = vunpack.c.l.b16 %v942
      %v1248 = vunpack.c.h.b16 %v942
      %v1249 = vunpack.c.l.b16 %v943
      %v1250 = vunpack.c.h.b16 %v943
      %v1251 = vunpack.c.l.b16 %v944
      %v1252 = vunpack.c.h.b16 %v944
      %v1253 = vunpack.c.l.b16 %v945
      %v1254 = vunpack.c.h.b16 %v945
      %v1255 = vunpack.c.l.b16 %v946
      %v1256 = vunpack.c.h.b16 %v946
      %v1257 = vunpack.c.l.b16 %v947
      %v1258 = vunpack.c.h.b16 %v947
      %v1259 = vunpack.c.l.b16 %v948
      %v1260 = vunpack.c.h.b16 %v948
      %v1261 = vunpack.c.l.b16 %v949
      %v1262 = vunpack.c.h.b16 %v949
      %v1263 = vunpack.c.l.b16 %v950
      %v1264 = vunpack.c.h.b16 %v950
      %v1265 = vunpack.c.l.b16 %v951
      %v1266 = vunpack.c.h.b16 %v951
      %v1267 = vunpack.c.l.b16 %v952
      %v1268 = vunpack.c.h.b16 %v952
      %v1269 = vunpack.c.l.b16 %v953
      %v1270 = vunpack.c.h.b16 %v953
      %v1271 = vunpack.c.l.b16 %v954
      %v1272 = vunpack.c.h.b16 %v954
      %v1273 = vunpack.c.l.b16 %v955
      %v1274 = vunpack.c.h.b16 %v955
      %v1275 = vunpack.c.l.b16 %v956
      %v1276 = vunpack.c.h.b16 %v956
      %v1277 = vpack.c.b16 %v1091, %v1085
      %v1278 = vpack.c.b16 %v1092, %v1086
      %v1279 = vpack.c.b16 %v1093, %v1087
      %v1280 = vpack.c.b16 %v1094, %v1088
      %v1281 = vpack.c.b16 %v1095, %v1089
      %v1282 = vpack.c.b16 %v1096, %v1090
      %v1283 = vpack.c.b16 %v1103, %v1097
      %v1284 = vpack.c.b16 %v1104, %v1098
      %v1285 = vpack.c.b16 %v1105, %v1099
      %v1286 = vpack.c.b16 %v1106, %v1100
      %v1287 = vpack.c.b16 %v1107, %v1101
      %v1288 = vpack.c.b16 %v1108, %v1102
      %v1289 = vpack.c.b16 %v1115, %v1109
      %v1290 = vpack.c.b16 %v1116, %v1110
      %v1291 = vpack.c.b16 %v1117, %v1111
      %v1292 = vpack.c.b16 %v1118, %v1112
      %v1293 = vpack.c.b16 %v1119, %v1113
      %v1294 = vpack.c.b16 %v1120, %v1114
      %v1295 = vpack.c.b16 %v1127, %v1121
      %v1296 = vpack.c.b16 %v1128, %v1122
      %v1297 = vpack.c.b16 %v1129, %v1123
      %v1298 = vpack.c.b16 %v1130, %v1124
      %v1299 = vpack.c.b16 %v1131, %v1125
      %v1300 = vpack.c.b16 %v1132, %v1126
      %v1301 = vpack.c.b16 %v1139, %v1133
      %v1302 = vpack.c.b16 %v1140, %v1134
      %v1303 = vpack.c.b16 %v1141, %v1135
      %v1304 = vpack.c.b16 %v1142, %v1136
      %v1305 = vpack.c.b16 %v1143, %v1137
      %v1306 = vpack.c.b16 %v1144, %v1138
      %v1307 = vpack.c.b16 %v1151, %v1145
      %v1308 = vpack.c.b16 %v1152, %v1146
      %v1309 = vpack.c.b16 %v1153, %v1147
      %v1310 = vpack.c.b16 %v1154, %v1148
      %v1311 = vpack.c.b16 %v1155, %v1149
      %v1312 = vpack.c.b16 %v1156, %v1150
      %v1313 = vpack.c.b16 %v1163, %v1157
      %v1314 = vpack.c.b16 %v1164, %v1158
      %v1315 = vpack.c.b16 %v1165, %v1159
      %v1316 = vpack.c.b16 %v1166, %v1160
      %v1317 = vpack.c.b16 %v1167, %v1161
      %v1318 = vpack.c.b16 %v1168, %v1162
      %v1319 = vpack.c.b16 %v1175, %v1169
      %v1320 = vpack.c.b16 %v1176, %v1170
      %v1321 = vpack.c.b16 %v1177, %v1171
      %v1322 = vpack.c.b16 %v1178, %v1172
      %v1323 = vpack.c.b16 %v1179, %v1173
      %v1324 = vpack.c.b16 %v1180, %v1174
      %v1325 = vpack.c.b16 %v1187, %v1181
      %v1326 = vpack.c.b16 %v1188, %v1182
      %v1327 = vpack.c.b16 %v1189, %v1183
      %v1328 = vpack.c.b16 %v1190, %v1184
      %v1329 = vpack.c.b16 %v1191, %v1185
      %v1330 = vpack.c.b16 %v1192, %v1186
      %v1331 = vpack.c.b16 %v1199, %v1193
      %v1332 = vpack.c.b16 %v1200, %v1194
      %v1333 = vpack.c.b16 %v1201, %v1195
      %v1334 = vpack.c.b16 %v1202, %v1196
      %v1335 = vpack.c.b16 %v1203, %v1197
      %v1336 = vpack.c.b16 %v1204, %v1198
      %v1337 = vpack.c.b16 %v1211, %v1205
      %v1338 = vpack.c.b16 %v1212, %v1206
      %v1339 = vpack.c.b16 %v1213, %v1207
      %v1340 = vpack.c.b16 %v1214, %v1208
      %v1341 = vpack.c.b16 %v1215, %v1209
      %v1342 = vpack.c.b16 %v1216, %v1210
      %v1343 = vpack.c.b16 %v1223, %v1217
      %v1344 = vpack.c.b16 %v1224, %v1218
      %v1345 = vpack.c.b16 %v1225, %v1219
      %v1346 = vpack.c.b16 %v1226, %v1220
      %v1347 = vpack.c.b16 %v1227, %v1221
      %v1348 = vpack.c.b16 %v1228, %v1222
      %v1349 = vpack.c.b16 %v1235, %v1229
      %v1350 = vpack.c.b16 %v1236, %v1230
      %v1351 = vpack.c.b16 %v1237, %v1231
      %v1352 = vpack.c.b16 %v1238, %v1232
      %v1353 = vpack.c.b16 %v1239, %v1233
      %v1354 = vpack.c.b16 %v1240, %v1234
      %v1355 = vpack.c.b16 %v1247, %v1241
      %v1356 = vpack.c.b16 %v1248, %v1242
      %v1357 = vpack.c.b16 %v1249, %v1243
      %v1358 = vpack.c.b16 %v1250, %v1244
      %v1359 = vpack.c.b16 %v1251, %v1245
      %v1360 = vpack.c.b16 %v1252, %v1246
      %v1361 = vpack.c.b16 %v1259, %v1253
      %v1362 = vpack.c.b16 %v1260, %v1254
      %v1363 = vpack.c.b16 %v1261, %v1255
      %v1364 = vpack.c.b16 %v1262, %v1256
      %v1365 = vpack.c.b16 %v1263, %v1257
      %v1366 = vpack.c.b16 %v1264, %v1258
      %v1367 = vpack.c.b16 %v1271, %v1265
      %v1368 = vpack.c.b16 %v1272, %v1266
      %v1369 = vpack.c.b16 %v1273, %v1267
      %v1370 = vpack.c.b16 %v1274, %v1268
      %v1371 = vpack.c.b16 %v1275, %v1269
      %v1372 = vpack.c.b16 %v1276, %v1270
      %1469 = vmatprep.subr.bf16.mxu0 %v1320
      %1470 = vmatpush1.bf16.msra.mxu0 %v1319
      %1471 = vmatprep.subr.bf16.mxu0 %v1314
      %1472 = vmatpush1.bf16.msra.mxu0 %v1313
      %1473 = vmatprep.subr.bf16.mxu0 %v1308
      %1474 = vmatpush1.bf16.msra.mxu0 %v1307
      %1475 = vmatprep.subr.bf16.mxu0 %v1302
      %1476 = vmatpush1.bf16.msra.mxu0 %v1301
      %1477 = vmatprep.subr.bf16.mxu0 %v1296
      %1478 = vmatpush1.bf16.msra.mxu0 %v1295
      %1479 = vmatprep.subr.bf16.mxu0 %v1290
      %1480 = vmatpush1.bf16.msra.mxu0 %v1289
      %1481 = vmatprep.subr.bf16.mxu0 %v1284
      %1482 = vmatpush1.bf16.msra.mxu0 %v1283
      %1483 = vmatprep.subr.bf16.mxu0 %v1278
      %1484 = vmatpush1.bf16.msra.mxu0 %v1277
      %1485 = vmatprep.subr.bf16.mxu0 %v1368
      %1486 = vmatpush2.bf16.msra.mxu0 %v1367
      %1487 = vmatprep.subr.bf16.mxu0 %v1362
      %1488 = vmatpush2.bf16.msra.mxu0 %v1361
      %1489 = vmatprep.subr.bf16.mxu0 %v1356
      %1490 = vmatpush2.bf16.msra.mxu0 %v1355
      %1491 = vmatprep.subr.bf16.mxu0 %v1350
      %1492 = vmatpush2.bf16.msra.mxu0 %v1349
      %1493 = vmatprep.subr.bf16.mxu0 %v1344
      %1494 = vmatpush2.bf16.msra.mxu0 %v1343
      %1495 = vmatprep.subr.bf16.mxu0 %v1338
      %1496 = vmatpush2.bf16.msra.mxu0 %v1337
      %1497 = vmatprep.subr.bf16.mxu0 %v1332
      %1498 = vmatpush2.bf16.msra.mxu0 %v1331
      %1499 = vmatprep.subr.bf16.mxu0 %v1326
      %1500 = vmatpush2.bf16.msra.mxu0 %v1325
      %1501 = vmatprep.mubr.bf16.mxu0 %v846
      %1502 = vmatmul.mubr.bf16.gmra.mxu0 %v845
      %v1503 = vpop.f32.mrf.mxu0
      %v1504 = vadd.f32 %v962, %v1503
      %v1505 = vpop.f32.mrf.mxu0
      %v1506 = vadd.f32 %v966, %v1505
      %v1507 = vpop.f32.mrf.mxu0
      %v1508 = vadd.f32 %v962, %v1507
      %v1509 = vpop.f32.mrf.mxu0
      %v1510 = vadd.f32 %v966, %v1509
      %1511 = vmatprep.mubr.bf16.mxu0 %v848
      %1512 = vmatmul.mubr.bf16.gmra.mxu0 %v847
      %v1513 = vpop.f32.mrf.mxu0
      %v1514 = vadd.f32 %v962, %v1513
      %v1515 = vpop.f32.mrf.mxu0
      %v1516 = vadd.f32 %v966, %v1515
      %v1517 = vpop.f32.mrf.mxu0
      %v1518 = vadd.f32 %v962, %v1517
      %v1519 = vpop.f32.mrf.mxu0
      %v1520 = vadd.f32 %v966, %v1519
      %1521 = vmatprep.mubr.bf16.mxu0 %v850
      %1522 = vmatmul.mubr.bf16.gmra.mxu0 %v849
      %v1523 = vpop.f32.mrf.mxu0
      %v1524 = vadd.f32 %v962, %v1523
      %v1525 = vpop.f32.mrf.mxu0
      %v1526 = vadd.f32 %v966, %v1525
      %v1527 = vpop.f32.mrf.mxu0
      %v1528 = vadd.f32 %v962, %v1527
      %v1529 = vpop.f32.mrf.mxu0
      %v1530 = vadd.f32 %v966, %v1529
      %1531 = vmatprep.mubr.bf16.mxu0 %v852
      %1532 = vmatmul.mubr.bf16.gmra.mxu0 %v851
      %v1533 = vpop.f32.mrf.mxu0
      %v1534 = vadd.f32 %v962, %v1533
      %v1535 = vpop.f32.mrf.mxu0
      %v1536 = vadd.f32 %v966, %v1535
      %v1537 = vpop.f32.mrf.mxu0
      %v1538 = vadd.f32 %v962, %v1537
      %v1539 = vpop.f32.mrf.mxu0
      %v1540 = vadd.f32 %v966, %v1539
      %1541 = vmatprep.mubr.bf16.mxu0 %v854
      %1542 = vmatmul.mubr.bf16.gmra.mxu0 %v853
      %v1543 = vpop.f32.mrf.mxu0
      %v1544 = vadd.f32 %v962, %v1543
      %v1545 = vpop.f32.mrf.mxu0
      %v1546 = vadd.f32 %v966, %v1545
      %v1547 = vpop.f32.mrf.mxu0
      %v1548 = vadd.f32 %v962, %v1547
      %v1549 = vpop.f32.mrf.mxu0
      %v1550 = vadd.f32 %v966, %v1549
      %1551 = vmatprep.mubr.bf16.mxu0 %v856
      %1552 = vmatmul.mubr.bf16.gmra.mxu0 %v855
      %v1553 = vpop.f32.mrf.mxu0
      %v1554 = vadd.f32 %v962, %v1553
      %v1555 = vpop.f32.mrf.mxu0
      %v1556 = vadd.f32 %v966, %v1555
      %v1557 = vpop.f32.mrf.mxu0
      %v1558 = vadd.f32 %v962, %v1557
      %v1559 = vpop.f32.mrf.mxu0
      %v1560 = vadd.f32 %v966, %v1559
      %1561 = vmatprep.mubr.bf16.mxu0 %v858
      %1562 = vmatmul.mubr.bf16.gmra.mxu0 %v857
      %v1563 = vpop.f32.mrf.mxu0
      %v1564 = vadd.f32 %v962, %v1563
      %v1565 = vpop.f32.mrf.mxu0
      %v1566 = vadd.f32 %v966, %v1565
      %v1567 = vpop.f32.mrf.mxu0
      %v1568 = vadd.f32 %v962, %v1567
      %v1569 = vpop.f32.mrf.mxu0
      %v1570 = vadd.f32 %v966, %v1569
      %1571 = vmatprep.mubr.bf16.mxu0 %v860
      %1572 = vmatmul.mubr.bf16.gmra.mxu0 %v859
      %v1573 = vpop.f32.mrf.mxu0
      %v1574 = vadd.f32 %v962, %v1573
      %v1575 = vpop.f32.mrf.mxu0
      %v1576 = vadd.f32 %v966, %v1575
      %v1577 = vpop.f32.mrf.mxu0
      %v1578 = vadd.f32 %v962, %v1577
      %v1579 = vpop.f32.mrf.mxu0
      %v1580 = vadd.f32 %v966, %v1579
      %1581 = vdwg.mxu0
      %1582 = vmatprep.subr.bf16.mxu0 %v1322
      %1583 = vmatpush1.bf16.msra.mxu0 %v1321
      %1584 = vmatprep.subr.bf16.mxu0 %v1316
      %1585 = vmatpush1.bf16.msra.mxu0 %v1315
      %1586 = vmatprep.subr.bf16.mxu0 %v1310
      %1587 = vmatpush1.bf16.msra.mxu0 %v1309
      %1588 = vmatprep.subr.bf16.mxu0 %v1304
      %1589 = vmatpush1.bf16.msra.mxu0 %v1303
      %1590 = vmatprep.subr.bf16.mxu0 %v1298
      %1591 = vmatpush1.bf16.msra.mxu0 %v1297
      %1592 = vmatprep.subr.bf16.mxu0 %v1292
      %1593 = vmatpush1.bf16.msra.mxu0 %v1291
      %1594 = vmatprep.subr.bf16.mxu0 %v1286
      %1595 = vmatpush1.bf16.msra.mxu0 %v1285
      %1596 = vmatprep.subr.bf16.mxu0 %v1280
      %1597 = vmatpush1.bf16.msra.mxu0 %v1279
      %1598 = vmatprep.subr.bf16.mxu0 %v1370
      %1599 = vmatpush2.bf16.msra.mxu0 %v1369
      %1600 = vmatprep.subr.bf16.mxu0 %v1364
      %1601 = vmatpush2.bf16.msra.mxu0 %v1363
      %1602 = vmatprep.subr.bf16.mxu0 %v1358
      %1603 = vmatpush2.bf16.msra.mxu0 %v1357
      %1604 = vmatprep.subr.bf16.mxu0 %v1352
      %1605 = vmatpush2.bf16.msra.mxu0 %v1351
      %1606 = vmatprep.subr.bf16.mxu0 %v1346
      %1607 = vmatpush2.bf16.msra.mxu0 %v1345
      %1608 = vmatprep.subr.bf16.mxu0 %v1340
      %1609 = vmatpush2.bf16.msra.mxu0 %v1339
      %1610 = vmatprep.subr.bf16.mxu0 %v1334
      %1611 = vmatpush2.bf16.msra.mxu0 %v1333
      %1612 = vmatprep.subr.bf16.mxu0 %v1328
      %1613 = vmatpush2.bf16.msra.mxu0 %v1327
      %1614 = vmatprep.mubr.bf16.mxu0 %v846
      %1615 = vmatmul.mubr.bf16.gmra.mxu0 %v845
      %v1616 = vpop.f32.mrf.mxu0
      %v1617 = vadd.f32 %v970, %v1616
      %v1618 = vpop.f32.mrf.mxu0
      %v1619 = vadd.f32 %v974, %v1618
      %v1620 = vpop.f32.mrf.mxu0
      %v1621 = vadd.f32 %v970, %v1620
      %v1622 = vpop.f32.mrf.mxu0
      %v1623 = vadd.f32 %v974, %v1622
      %1624 = vmatprep.mubr.bf16.mxu0 %v848
      %1625 = vmatmul.mubr.bf16.gmra.mxu0 %v847
      %v1626 = vpop.f32.mrf.mxu0
      %v1627 = vadd.f32 %v970, %v1626
      %v1628 = vpop.f32.mrf.mxu0
      %v1629 = vadd.f32 %v974, %v1628
      %v1630 = vpop.f32.mrf.mxu0
      %v1631 = vadd.f32 %v970, %v1630
      %v1632 = vpop.f32.mrf.mxu0
      %v1633 = vadd.f32 %v974, %v1632
      %1634 = vmatprep.mubr.bf16.mxu0 %v850
      %1635 = vmatmul.mubr.bf16.gmra.mxu0 %v849
      %v1636 = vpop.f32.mrf.mxu0
      %v1637 = vadd.f32 %v970, %v1636
      %v1638 = vpop.f32.mrf.mxu0
      %v1639 = vadd.f32 %v974, %v1638
      %v1640 = vpop.f32.mrf.mxu0
      %v1641 = vadd.f32 %v970, %v1640
      %v1642 = vpop.f32.mrf.mxu0
      %v1643 = vadd.f32 %v974, %v1642
      %1644 = vmatprep.mubr.bf16.mxu0 %v852
      %1645 = vmatmul.mubr.bf16.gmra.mxu0 %v851
      %v1646 = vpop.f32.mrf.mxu0
      %v1647 = vadd.f32 %v970, %v1646
      %v1648 = vpop.f32.mrf.mxu0
      %v1649 = vadd.f32 %v974, %v1648
      %v1650 = vpop.f32.mrf.mxu0
      %v1651 = vadd.f32 %v970, %v1650
      %v1652 = vpop.f32.mrf.mxu0
      %v1653 = vadd.f32 %v974, %v1652
      %1654 = vmatprep.mubr.bf16.mxu0 %v854
      %1655 = vmatmul.mubr.bf16.gmra.mxu0 %v853
      %v1656 = vpop.f32.mrf.mxu0
      %v1657 = vadd.f32 %v970, %v1656
      %v1658 = vpop.f32.mrf.mxu0
      %v1659 = vadd.f32 %v974, %v1658
      %v1660 = vpop.f32.mrf.mxu0
      %v1661 = vadd.f32 %v970, %v1660
      %v1662 = vpop.f32.mrf.mxu0
      %v1663 = vadd.f32 %v974, %v1662
      %1664 = vmatprep.mubr.bf16.mxu0 %v856
      %1665 = vmatmul.mubr.bf16.gmra.mxu0 %v855
      %v1666 = vpop.f32.mrf.mxu0
      %v1667 = vadd.f32 %v970, %v1666
      %v1668 = vpop.f32.mrf.mxu0
      %v1669 = vadd.f32 %v974, %v1668
      %v1670 = vpop.f32.mrf.mxu0
      %v1671 = vadd.f32 %v970, %v1670
      %v1672 = vpop.f32.mrf.mxu0
      %v1673 = vadd.f32 %v974, %v1672
      %1674 = vmatprep.mubr.bf16.mxu0 %v858
      %1675 = vmatmul.mubr.bf16.gmra.mxu0 %v857
      %v1676 = vpop.f32.mrf.mxu0
      %v1677 = vadd.f32 %v970, %v1676
      %v1678 = vpop.f32.mrf.mxu0
      %v1679 = vadd.f32 %v974, %v1678
      %v1680 = vpop.f32.mrf.mxu0
      %v1681 = vadd.f32 %v970, %v1680
      %v1682 = vpop.f32.mrf.mxu0
      %v1683 = vadd.f32 %v974, %v1682
      %1684 = vmatprep.mubr.bf16.mxu0 %v860
      %1685 = vmatmul.mubr.bf16.gmra.mxu0 %v859
      %v1686 = vpop.f32.mrf.mxu0
      %v1687 = vadd.f32 %v970, %v1686
      %v1688 = vpop.f32.mrf.mxu0
      %v1689 = vadd.f32 %v974, %v1688
      %v1690 = vpop.f32.mrf.mxu0
      %v1691 = vadd.f32 %v970, %v1690
      %v1692 = vpop.f32.mrf.mxu0
      %v1693 = vadd.f32 %v974, %v1692
      %1694 = vdwg.mxu0
      %1695 = vmatprep.subr.bf16.mxu0 %v1324
      %1696 = vmatpush1.bf16.msra.mxu0 %v1323
      %1697 = vmatprep.subr.bf16.mxu0 %v1318
      %1698 = vmatpush1.bf16.msra.mxu0 %v1317
      %1699 = vmatprep.subr.bf16.mxu0 %v1312
      %1700 = vmatpush1.bf16.msra.mxu0 %v1311
      %1701 = vmatprep.subr.bf16.mxu0 %v1306
      %1702 = vmatpush1.bf16.msra.mxu0 %v1305
      %1703 = vmatprep.subr.bf16.mxu0 %v1300
      %1704 = vmatpush1.bf16.msra.mxu0 %v1299
      %1705 = vmatprep.subr.bf16.mxu0 %v1294
      %1706 = vmatpush1.bf16.msra.mxu0 %v1293
      %1707 = vmatprep.subr.bf16.mxu0 %v1288
      %1708 = vmatpush1.bf16.msra.mxu0 %v1287
      %1709 = vmatprep.subr.bf16.mxu0 %v1282
      %1710 = vmatpush1.bf16.msra.mxu0 %v1281
      %1711 = vmatprep.subr.bf16.mxu0 %v1372
      %1712 = vmatpush2.bf16.msra.mxu0 %v1371
      %1713 = vmatprep.subr.bf16.mxu0 %v1366
      %1714 = vmatpush2.bf16.msra.mxu0 %v1365
      %1715 = vmatprep.subr.bf16.mxu0 %v1360
      %1716 = vmatpush2.bf16.msra.mxu0 %v1359
      %1717 = vmatprep.subr.bf16.mxu0 %v1354
      %1718 = vmatpush2.bf16.msra.mxu0 %v1353
      %1719 = vmatprep.subr.bf16.mxu0 %v1348
      %1720 = vmatpush2.bf16.msra.mxu0 %v1347
      %1721 = vmatprep.subr.bf16.mxu0 %v1342
      %1722 = vmatpush2.bf16.msra.mxu0 %v1341
      %1723 = vmatprep.subr.bf16.mxu0 %v1336
      %1724 = vmatpush2.bf16.msra.mxu0 %v1335
      %1725 = vmatprep.subr.bf16.mxu0 %v1330
      %1726 = vmatpush2.bf16.msra.mxu0 %v1329
      %1727 = vmatprep.mubr.bf16.mxu0 %v846
      %1728 = vmatmul.mubr.bf16.gmra.mxu0 %v845
      %v1729 = vpop.f32.mrf.mxu0
      %v1730 = vadd.f32 %v978, %v1729
      %v1731 = vpop.f32.mrf.mxu0
      %v1732 = vadd.f32 %v982, %v1731
      %v1733 = vpop.f32.mrf.mxu0
      %v1734 = vadd.f32 %v978, %v1733
      %v1735 = vpop.f32.mrf.mxu0
      %v1736 = vadd.f32 %v982, %v1735
      %1737 = vmatprep.mubr.bf16.mxu0 %v848
      %1738 = vmatmul.mubr.bf16.gmra.mxu0 %v847
      %v1739 = vpop.f32.mrf.mxu0
      %v1740 = vadd.f32 %v978, %v1739
      %v1741 = vpop.f32.mrf.mxu0
      %v1742 = vadd.f32 %v982, %v1741
      %v1743 = vpop.f32.mrf.mxu0
      %v1744 = vadd.f32 %v978, %v1743
      %v1745 = vpop.f32.mrf.mxu0
      %v1746 = vadd.f32 %v982, %v1745
      %1747 = vmatprep.mubr.bf16.mxu0 %v850
      %1748 = vmatmul.mubr.bf16.gmra.mxu0 %v849
      %v1749 = vpop.f32.mrf.mxu0
      %v1750 = vadd.f32 %v978, %v1749
      %v1751 = vpop.f32.mrf.mxu0
      %v1752 = vadd.f32 %v982, %v1751
      %v1753 = vpop.f32.mrf.mxu0
      %v1754 = vadd.f32 %v978, %v1753
      %v1755 = vpop.f32.mrf.mxu0
      %v1756 = vadd.f32 %v982, %v1755
      %1757 = vmatprep.mubr.bf16.mxu0 %v852
      %1758 = vmatmul.mubr.bf16.gmra.mxu0 %v851
      %v1759 = vpop.f32.mrf.mxu0
      %v1760 = vadd.f32 %v978, %v1759
      %v1761 = vpop.f32.mrf.mxu0
      %v1762 = vadd.f32 %v982, %v1761
      %v1763 = vpop.f32.mrf.mxu0
      %v1764 = vadd.f32 %v978, %v1763
      %v1765 = vpop.f32.mrf.mxu0
      %v1766 = vadd.f32 %v982, %v1765
      %1767 = vmatprep.mubr.bf16.mxu0 %v854
      %1768 = vmatmul.mubr.bf16.gmra.mxu0 %v853
      %v1769 = vpop.f32.mrf.mxu0
      %v1770 = vadd.f32 %v978, %v1769
      %v1771 = vpop.f32.mrf.mxu0
      %v1772 = vadd.f32 %v982, %v1771
      %v1773 = vpop.f32.mrf.mxu0
      %v1774 = vadd.f32 %v978, %v1773
      %v1775 = vpop.f32.mrf.mxu0
      %v1776 = vadd.f32 %v982, %v1775
      %1777 = vmatprep.mubr.bf16.mxu0 %v856
      %1778 = vmatmul.mubr.bf16.gmra.mxu0 %v855
      %v1779 = vpop.f32.mrf.mxu0
      %v1780 = vadd.f32 %v978, %v1779
      %v1781 = vpop.f32.mrf.mxu0
      %v1782 = vadd.f32 %v982, %v1781
      %v1783 = vpop.f32.mrf.mxu0
      %v1784 = vadd.f32 %v978, %v1783
      %v1785 = vpop.f32.mrf.mxu0
      %v1786 = vadd.f32 %v982, %v1785
      %1787 = vmatprep.mubr.bf16.mxu0 %v858
      %1788 = vmatmul.mubr.bf16.gmra.mxu0 %v857
      %v1789 = vpop.f32.mrf.mxu0
      %v1790 = vadd.f32 %v978, %v1789
      %v1791 = vpop.f32.mrf.mxu0
      %v1792 = vadd.f32 %v982, %v1791
      %v1793 = vpop.f32.mrf.mxu0
      %v1794 = vadd.f32 %v978, %v1793
      %v1795 = vpop.f32.mrf.mxu0
      %v1796 = vadd.f32 %v982, %v1795
      %1797 = vmatprep.mubr.bf16.mxu0 %v860
      %1798 = vmatmul.mubr.bf16.gmra.mxu0 %v859
      %v1799 = vpop.f32.mrf.mxu0
      %v1800 = vadd.f32 %v978, %v1799
      %v1801 = vpop.f32.mrf.mxu0
      %v1802 = vadd.f32 %v982, %v1801
      %v1803 = vpop.f32.mrf.mxu0
      %v1804 = vadd.f32 %v978, %v1803
      %v1805 = vpop.f32.mrf.mxu0
      %v1806 = vadd.f32 %v982, %v1805
      %1807 = vdwg.mxu0
      %v1808 = vpack.c.bf16 %v1508, %v1504
      %v1809 = vpack.c.bf16 %v1518, %v1514
      %v1810 = vpack.c.bf16 %v1528, %v1524
      %v1811 = vpack.c.bf16 %v1538, %v1534
      %v1812 = vpack.c.bf16 %v1548, %v1544
      %v1813 = vpack.c.bf16 %v1558, %v1554
      %v1814 = vpack.c.bf16 %v1568, %v1564
      %v1815 = vpack.c.bf16 %v1578, %v1574
      %v1816 = vpack.c.bf16 %v1510, %v1506
      %v1817 = vpack.c.bf16 %v1520, %v1516
      %v1818 = vpack.c.bf16 %v1530, %v1526
      %v1819 = vpack.c.bf16 %v1540, %v1536
      %v1820 = vpack.c.bf16 %v1550, %v1546
      %v1821 = vpack.c.bf16 %v1560, %v1556
      %v1822 = vpack.c.bf16 %v1570, %v1566
      %v1823 = vpack.c.bf16 %v1580, %v1576
      %v1824 = vpack.c.bf16 %v1621, %v1617
      %v1825 = vpack.c.bf16 %v1631, %v1627
      %v1826 = vpack.c.bf16 %v1641, %v1637
      %v1827 = vpack.c.bf16 %v1651, %v1647
      %v1828 = vpack.c.bf16 %v1661, %v1657
      %v1829 = vpack.c.bf16 %v1671, %v1667
      %v1830 = vpack.c.bf16 %v1681, %v1677
      %v1831 = vpack.c.bf16 %v1691, %v1687
      %v1832 = vld [vmem:[%s1] sm:$0xff]
      %v1833 = vld [vmem:[%s1 + $0x8] sm:$0xff]
      %v1834 = vld [vmem:[%s1 + $0x10] sm:$0xff]
      %v1835 = vld [vmem:[%s1 + $0x18] sm:$0xff]
      %v1836 = vld [vmem:[%s1 + $0x20] sm:$0xff]
      %v1837 = vld [vmem:[%s1 + $0x28] sm:$0xff]
      %v1838 = vld [vmem:[%s1 + $0x30] sm:$0xff]
      %v1839 = vld [vmem:[%s1 + $0x38] sm:$0xff]
      %v1840 = vld [vmem:[%s1 + $0x40] sm:$0xff]
      %v1841 = vld [vmem:[%s1 + $0x48] sm:$0xff]
      %v1842 = vld [vmem:[%s1 + $0x50] sm:$0xff]
      %v1843 = vld [vmem:[%s1 + $0x58] sm:$0xff]
      %v1844 = vld [vmem:[%s1 + $0x60] sm:$0xff]
      %v1845 = vld [vmem:[%s1 + $0x68] sm:$0xff]
      %v1846 = vld [vmem:[%s1 + $0x70] sm:$0xff]
      %v1847 = vld [vmem:[%s1 + $0x78] sm:$0xff]
      %1848 = vmatprep.subr.bf16.mxu0 0
      %1849 = vmatpush1.bf16.xpose.msra.mxu0 %v1823
      %1850 = vmatprep.subr.bf16.mxu0 0
      %1851 = vmatpush1.bf16.xpose.msra.mxu0 %v1822
      %1852 = vmatprep.subr.bf16.mxu0 0
      %1853 = vmatpush1.bf16.xpose.msra.mxu0 %v1821
      %1854 = vmatprep.subr.bf16.mxu0 0
      %1855 = vmatpush1.bf16.xpose.msra.mxu0 %v1820
      %1856 = vmatprep.subr.bf16.mxu0 0
      %1857 = vmatpush1.bf16.xpose.msra.mxu0 %v1819
      %1858 = vmatprep.subr.bf16.mxu0 0
      %1859 = vmatpush1.bf16.xpose.msra.mxu0 %v1818
      %1860 = vmatprep.subr.bf16.mxu0 0
      %1861 = vmatpush1.bf16.xpose.msra.mxu0 %v1817
      %1862 = vmatprep.subr.bf16.mxu0 0
      %1863 = vmatpush1.bf16.xpose.msra.mxu0 %v1816
      %1864 = vmatprep.subr.bf16.mxu0 0
      %1865 = vmatpush2.bf16.xpose.msra.mxu0 0
      %1866 = vmatprep.subr.bf16.mxu0 0
      %1867 = vmatpush2.bf16.xpose.msra.mxu0 0
      %1868 = vmatprep.subr.bf16.mxu0 0
      %1869 = vmatpush2.bf16.xpose.msra.mxu0 0
      %1870 = vmatprep.subr.bf16.mxu0 0
      %1871 = vmatpush2.bf16.xpose.msra.mxu0 0
      %1872 = vmatprep.subr.bf16.mxu0 0
      %1873 = vmatpush2.bf16.xpose.msra.mxu0 0
      %1874 = vmatprep.subr.bf16.mxu0 0
      %1875 = vmatpush2.bf16.xpose.msra.mxu0 0
      %1876 = vmatprep.subr.bf16.mxu0 0
      %1877 = vmatpush2.bf16.xpose.msra.mxu0 0
      %1878 = vmatprep.subr.bf16.mxu0 0
      %1879 = vmatpush2.bf16.xpose.msra.mxu0 0
      %1880 = vmatprep.mubr.bf16.mxu0 0
      %1881 = vmatmul.mubr.bf16.gmra.mxu0 %v1808
      %v1882 = vpop.f32.mrf.mxu0
      %v1883 = vadd.f32 %v1832, %v1882
      %v1884 = vpop.f32.mrf.mxu0
      %v1885 = vpop.f32.mrf.mxu0
      %v1886 = vadd.f32 %v1833, %v1885
      %v1887 = vpop.f32.mrf.mxu0
      %1888 = vmatprep.mubr.bf16.mxu0 0
      %1889 = vmatmul.mubr.bf16.gmra.mxu0 %v1809
      %v1890 = vpop.f32.mrf.mxu0
      %v1891 = vadd.f32 %v1834, %v1890
      %v1892 = vpop.f32.mrf.mxu0
      %v1893 = vpop.f32.mrf.mxu0
      %v1894 = vadd.f32 %v1835, %v1893
      %v1895 = vpop.f32.mrf.mxu0
      %1896 = vmatprep.mubr.bf16.mxu0 0
      %1897 = vmatmul.mubr.bf16.gmra.mxu0 %v1810
      %v1898 = vpop.f32.mrf.mxu0
      %v1899 = vadd.f32 %v1836, %v1898
      %v1900 = vpop.f32.mrf.mxu0
      %v1901 = vpop.f32.mrf.mxu0
      %v1902 = vadd.f32 %v1837, %v1901
      %v1903 = vpop.f32.mrf.mxu0
      %1904 = vmatprep.mubr.bf16.mxu0 0
      %1905 = vmatmul.mubr.bf16.gmra.mxu0 %v1811
      %v1906 = vpop.f32.mrf.mxu0
      %v1907 = vadd.f32 %v1838, %v1906
      %v1908 = vpop.f32.mrf.mxu0
      %v1909 = vpop.f32.mrf.mxu0
      %v1910 = vadd.f32 %v1839, %v1909
      %v1911 = vpop.f32.mrf.mxu0
      %1912 = vmatprep.mubr.bf16.mxu0 0
      %1913 = vmatmul.mubr.bf16.gmra.mxu0 %v1812
      %v1914 = vpop.f32.mrf.mxu0
      %v1915 = vadd.f32 %v1840, %v1914
      %v1916 = vpop.f32.mrf.mxu0
      %v1917 = vpop.f32.mrf.mxu0
      %v1918 = vadd.f32 %v1841, %v1917
      %v1919 = vpop.f32.mrf.mxu0
      %1920 = vmatprep.mubr.bf16.mxu0 0
      %1921 = vmatmul.mubr.bf16.gmra.mxu0 %v1813
      %v1922 = vpop.f32.mrf.mxu0
      %v1923 = vadd.f32 %v1842, %v1922
      %v1924 = vpop.f32.mrf.mxu0
      %v1925 = vpop.f32.mrf.mxu0
      %v1926 = vadd.f32 %v1843, %v1925
      %v1927 = vpop.f32.mrf.mxu0
      %1928 = vmatprep.mubr.bf16.mxu0 0
      %1929 = vmatmul.mubr.bf16.gmra.mxu0 %v1814
      %v1930 = vpop.f32.mrf.mxu0
      %v1931 = vadd.f32 %v1844, %v1930
      %v1932 = vpop.f32.mrf.mxu0
      %v1933 = vpop.f32.mrf.mxu0
      %v1934 = vadd.f32 %v1845, %v1933
      %v1935 = vpop.f32.mrf.mxu0
      %1936 = vmatprep.mubr.bf16.mxu0 0
      %1937 = vmatmul.mubr.bf16.gmra.mxu0 %v1815
      %v1938 = vpop.f32.mrf.mxu0
      %v1939 = vadd.f32 %v1846, %v1938
      %v1940 = vpop.f32.mrf.mxu0
      %v1941 = vpop.f32.mrf.mxu0
      %v1942 = vadd.f32 %v1847, %v1941
      %v1943 = vpop.f32.mrf.mxu0
      %1944 = vdwg.mxu0
      %1945 = vmax.xlane.f32.xlu0 %v1883
      %v1946 = vpop.xlane.xlu0 %1945
      %1947 = vmax.xlane.f32.xlu0 %v1886
      %v1948 = vpop.xlane.xlu0 %1947
      %1949 = vmax.xlane.f32.xlu0 %v1891
      %v1950 = vpop.xlane.xlu0 %1949
      %1951 = vmax.xlane.f32.xlu0 %v1894
      %v1952 = vpop.xlane.xlu0 %1951
      %1953 = vmax.xlane.f32.xlu0 %v1899
      %v1954 = vpop.xlane.xlu0 %1953
      %1955 = vmax.xlane.f32.xlu0 %v1902
      %v1956 = vpop.xlane.xlu0 %1955
      %1957 = vmax.xlane.f32.xlu0 %v1907
      %v1958 = vpop.xlane.xlu0 %1957
      %1959 = vmax.xlane.f32.xlu0 %v1910
      %v1960 = vpop.xlane.xlu0 %1959
      %1961 = vmax.xlane.f32.xlu0 %v1915
      %v1962 = vpop.xlane.xlu0 %1961
      %1963 = vmax.xlane.f32.xlu0 %v1918
      %v1964 = vpop.xlane.xlu0 %1963
      %1965 = vmax.xlane.f32.xlu0 %v1923
      %v1966 = vpop.xlane.xlu0 %1965
      %1967 = vmax.xlane.f32.xlu0 %v1926
      %v1968 = vpop.xlane.xlu0 %1967
      %1969 = vmax.xlane.f32.xlu0 %v1931
      %v1970 = vpop.xlane.xlu0 %1969
      %1971 = vmax.xlane.f32.xlu0 %v1934
      %v1972 = vpop.xlane.xlu0 %1971
      %1973 = vmax.xlane.f32.xlu0 %v1939
      %v1974 = vpop.xlane.xlu0 %1973
      %1975 = vmax.xlane.f32.xlu0 %v1942
      %v1976 = vpop.xlane.xlu0 %1975
      %v1977 = vsub.f32 %v1883, %v1946
      %v1978 = vsub.f32 %v1886, %v1948
      %v1979 = vsub.f32 %v1891, %v1950
      %v1980 = vsub.f32 %v1894, %v1952
      %v1981 = vsub.f32 %v1899, %v1954
      %v1982 = vsub.f32 %v1902, %v1956
      %v1983 = vsub.f32 %v1907, %v1958
      %v1984 = vsub.f32 %v1910, %v1960
      %v1985 = vsub.f32 %v1915, %v1962
      %v1986 = vsub.f32 %v1918, %v1964
      %v1987 = vsub.f32 %v1923, %v1966
      %v1988 = vsub.f32 %v1926, %v1968
      %v1989 = vsub.f32 %v1931, %v1970
      %v1990 = vsub.f32 %v1934, %v1972
      %v1991 = vsub.f32 %v1939, %v1974
      %v1992 = vsub.f32 %v1942, %v1976
      %v1993 = vmul.f32 %v1977, 1.442695
      %v1994 = vpow.pop %v1993
      %v1995 = vmul.f32 %v1978, 1.442695
      %v1996 = vpow.pop %v1995
      %v1997 = vmul.f32 %v1979, 1.442695
      %v1998 = vpow.pop %v1997
      %v1999 = vmul.f32 %v1980, 1.442695
      %v2000 = vpow.pop %v1999
      %v2001 = vmul.f32 %v1981, 1.442695
      %v2002 = vpow.pop %v2001
      %v2003 = vmul.f32 %v1982, 1.442695
      %v2004 = vpow.pop %v2003
      %v2005 = vmul.f32 %v1983, 1.442695
      %v2006 = vpow.pop %v2005
      %v2007 = vmul.f32 %v1984, 1.442695
      %v2008 = vpow.pop %v2007
      %v2009 = vmul.f32 %v1985, 1.442695
      %v2010 = vpow.pop %v2009
      %v2011 = vmul.f32 %v1986, 1.442695
      %v2012 = vpow.pop %v2011
      %v2013 = vmul.f32 %v1987, 1.442695
      %v2014 = vpow.pop %v2013
      %v2015 = vmul.f32 %v1988, 1.442695
      %v2016 = vpow.pop %v2015
      %v2017 = vmul.f32 %v1989, 1.442695
      %v2018 = vpow.pop %v2017
      %v2019 = vmul.f32 %v1990, 1.442695
      %v2020 = vpow.pop %v2019
      %v2021 = vmul.f32 %v1991, 1.442695
      %v2022 = vpow.pop %v2021
      %v2023 = vmul.f32 %v1992, 1.442695
      %v2024 = vpow.pop %v2023
      %2025 = vadd.xlane.f32.xlu0 %v1994
      %v2026 = vpop.xlane.xlu0 %2025
      %2027 = vadd.xlane.f32.xlu0 %v1996
      %v2028 = vpop.xlane.xlu0 %2027
      %2029 = vadd.xlane.f32.xlu0 %v1998
      %v2030 = vpop.xlane.xlu0 %2029
      %2031 = vadd.xlane.f32.xlu0 %v2000
      %v2032 = vpop.xlane.xlu0 %2031
      %2033 = vadd.xlane.f32.xlu0 %v2002
      %v2034 = vpop.xlane.xlu0 %2033
      %2035 = vadd.xlane.f32.xlu0 %v2004
      %v2036 = vpop.xlane.xlu0 %2035
      %2037 = vadd.xlane.f32.xlu0 %v2006
      %v2038 = vpop.xlane.xlu0 %2037
      %2039 = vadd.xlane.f32.xlu0 %v2008
      %v2040 = vpop.xlane.xlu0 %2039
      %2041 = vadd.xlane.f32.xlu0 %v2010
      %v2042 = vpop.xlane.xlu0 %2041
      %2043 = vadd.xlane.f32.xlu0 %v2012
      %v2044 = vpop.xlane.xlu0 %2043
      %2045 = vadd.xlane.f32.xlu0 %v2014
      %v2046 = vpop.xlane.xlu0 %2045
      %2047 = vadd.xlane.f32.xlu0 %v2016
      %v2048 = vpop.xlane.xlu0 %2047
      %2049 = vadd.xlane.f32.xlu0 %v2018
      %v2050 = vpop.xlane.xlu0 %2049
      %2051 = vadd.xlane.f32.xlu0 %v2020
      %v2052 = vpop.xlane.xlu0 %2051
      %2053 = vadd.xlane.f32.xlu0 %v2022
      %v2054 = vpop.xlane.xlu0 %2053
      %2055 = vadd.xlane.f32.xlu0 %v2024
      %v2056 = vpop.xlane.xlu0 %2055
      %v2057 = vrcp.pop %v2026
      %v2058 = vmul.f32 %v1994, %v2057
      %v2059 = vrcp.pop %v2028
      %v2060 = vmul.f32 %v1996, %v2059
      %v2061 = vrcp.pop %v2030
      %v2062 = vmul.f32 %v1998, %v2061
      %v2063 = vrcp.pop %v2032
      %v2064 = vmul.f32 %v2000, %v2063
      %v2065 = vrcp.pop %v2034
      %v2066 = vmul.f32 %v2002, %v2065
      %v2067 = vrcp.pop %v2036
      %v2068 = vmul.f32 %v2004, %v2067
      %v2069 = vrcp.pop %v2038
      %v2070 = vmul.f32 %v2006, %v2069
      %v2071 = vrcp.pop %v2040
      %v2072 = vmul.f32 %v2008, %v2071
      %v2073 = vrcp.pop %v2042
      %v2074 = vmul.f32 %v2010, %v2073
      %v2075 = vrcp.pop %v2044
      %v2076 = vmul.f32 %v2012, %v2075
      %v2077 = vrcp.pop %v2046
      %v2078 = vmul.f32 %v2014, %v2077
      %v2079 = vrcp.pop %v2048
      %v2080 = vmul.f32 %v2016, %v2079
      %v2081 = vrcp.pop %v2050
      %v2082 = vmul.f32 %v2018, %v2081
      %v2083 = vrcp.pop %v2052
      %v2084 = vmul.f32 %v2020, %v2083
      %v2085 = vrcp.pop %v2054
      %v2086 = vmul.f32 %v2022, %v2085
      %v2087 = vrcp.pop %v2056
      %v2088 = vmul.f32 %v2024, %v2087
      %2089 = vst [vmem:[%s739] sm:$0xff] %v2058
      %2090 = vst [vmem:[%s739 + $0x8] sm:$0xff] %v2060
      %2091 = vst [vmem:[%s739 + $0x10] sm:$0xff] %v2062
      %2092 = vst [vmem:[%s739 + $0x18] sm:$0xff] %v2064
      %2093 = vst [vmem:[%s739 + $0x20] sm:$0xff] %v2066
      %2094 = vst [vmem:[%s739 + $0x28] sm:$0xff] %v2068
      %2095 = vst [vmem:[%s739 + $0x30] sm:$0xff] %v2070
      %2096 = vst [vmem:[%s739 + $0x38] sm:$0xff] %v2072
      %2097 = vst [vmem:[%s739 + $0x40] sm:$0xff] %v2074
      %2098 = vst [vmem:[%s739 + $0x48] sm:$0xff] %v2076
      %2099 = vst [vmem:[%s739 + $0x50] sm:$0xff] %v2078
      %2100 = vst [vmem:[%s739 + $0x58] sm:$0xff] %v2080
      %2101 = vst [vmem:[%s739 + $0x60] sm:$0xff] %v2082
      %2102 = vst [vmem:[%s739 + $0x68] sm:$0xff] %v2084
      %2103 = vst [vmem:[%s739 + $0x70] sm:$0xff] %v2086
      %2104 = vst [vmem:[%s739 + $0x78] sm:$0xff] %v2088
      %v2105 = vpack.c.bf16 %v2060, %v2058
      %v2106 = vpack.c.bf16 %v2064, %v2062
      %v2107 = vpack.c.bf16 %v2068, %v2066
      %v2108 = vpack.c.bf16 %v2072, %v2070
      %v2109 = vpack.c.bf16 %v2076, %v2074
      %v2110 = vpack.c.bf16 %v2080, %v2078
      %v2111 = vpack.c.bf16 %v2084, %v2082
      %v2112 = vpack.c.bf16 %v2088, %v2086
      %2113 = vmatprep.subr.bf16.mxu0 0
      %2114 = vmatpush1.bf16.msra.mxu0 %v1831
      %2115 = vmatprep.subr.bf16.mxu0 0
      %2116 = vmatpush1.bf16.msra.mxu0 %v1830
      %2117 = vmatprep.subr.bf16.mxu0 0
      %2118 = vmatpush1.bf16.msra.mxu0 %v1829
      %2119 = vmatprep.subr.bf16.mxu0 0
      %2120 = vmatpush1.bf16.msra.mxu0 %v1828
      %2121 = vmatprep.subr.bf16.mxu0 0
      %2122 = vmatpush1.bf16.msra.mxu0 %v1827
      %2123 = vmatprep.subr.bf16.mxu0 0
      %2124 = vmatpush1.bf16.msra.mxu0 %v1826
      %2125 = vmatprep.subr.bf16.mxu0 0
      %2126 = vmatpush1.bf16.msra.mxu0 %v1825
      %2127 = vmatprep.subr.bf16.mxu0 0
      %2128 = vmatpush1.bf16.msra.mxu0 %v1824
      %2129 = vmatprep.subr.bf16.mxu0 0
      %2130 = vmatpush2.bf16.msra.mxu0 0
      %2131 = vmatprep.subr.bf16.mxu0 0
      %2132 = vmatpush2.bf16.msra.mxu0 0
      %2133 = vmatprep.subr.bf16.mxu0 0
      %2134 = vmatpush2.bf16.msra.mxu0 0
      %2135 = vmatprep.subr.bf16.mxu0 0
      %2136 = vmatpush2.bf16.msra.mxu0 0
      %2137 = vmatprep.subr.bf16.mxu0 0
      %2138 = vmatpush2.bf16.msra.mxu0 0
      %2139 = vmatprep.subr.bf16.mxu0 0
      %2140 = vmatpush2.bf16.msra.mxu0 0
      %2141 = vmatprep.subr.bf16.mxu0 0
      %2142 = vmatpush2.bf16.msra.mxu0 0
      %2143 = vmatprep.subr.bf16.mxu0 0
      %2144 = vmatpush2.bf16.msra.mxu0 0
      %2145 = vmatprep.mubr.bf16.mxu0 0
      %2146 = vmatmul.mubr.bf16.gmra.mxu0 %v2105
      %v2147 = vpop.f32.mrf.mxu0
      %v2148 = vadd.f32 0.0, %v2147
      %v2149 = vpop.f32.mrf.mxu0
      %v2150 = vpop.f32.mrf.mxu0
      %v2151 = vadd.f32 0.0, %v2150
      %v2152 = vpop.f32.mrf.mxu0
      %2153 = vmatprep.mubr.bf16.mxu0 0
      %2154 = vmatmul.mubr.bf16.gmra.mxu0 %v2106
      %v2155 = vpop.f32.mrf.mxu0
      %v2156 = vadd.f32 0.0, %v2155
      %v2157 = vpop.f32.mrf.mxu0
      %v2158 = vpop.f32.mrf.mxu0
      %v2159 = vadd.f32 0.0, %v2158
      %v2160 = vpop.f32.mrf.mxu0
      %2161 = vmatprep.mubr.bf16.mxu0 0
      %2162 = vmatmul.mubr.bf16.gmra.mxu0 %v2107
      %v2163 = vpop.f32.mrf.mxu0
      %v2164 = vadd.f32 0.0, %v2163
      %v2165 = vpop.f32.mrf.mxu0
      %v2166 = vpop.f32.mrf.mxu0
      %v2167 = vadd.f32 0.0, %v2166
      %v2168 = vpop.f32.mrf.mxu0
      %2169 = vmatprep.mubr.bf16.mxu0 0
      %2170 = vmatmul.mubr.bf16.gmra.mxu0 %v2108
      %v2171 = vpop.f32.mrf.mxu0
      %v2172 = vadd.f32 0.0, %v2171
      %v2173 = vpop.f32.mrf.mxu0
      %v2174 = vpop.f32.mrf.mxu0
      %v2175 = vadd.f32 0.0, %v2174
      %v2176 = vpop.f32.mrf.mxu0
      %2177 = vmatprep.mubr.bf16.mxu0 0
      %2178 = vmatmul.mubr.bf16.gmra.mxu0 %v2109
      %v2179 = vpop.f32.mrf.mxu0
      %v2180 = vadd.f32 0.0, %v2179
      %v2181 = vpop.f32.mrf.mxu0
      %v2182 = vpop.f32.mrf.mxu0
      %v2183 = vadd.f32 0.0, %v2182
      %v2184 = vpop.f32.mrf.mxu0
      %2185 = vmatprep.mubr.bf16.mxu0 0
      %2186 = vmatmul.mubr.bf16.gmra.mxu0 %v2110
      %v2187 = vpop.f32.mrf.mxu0
      %v2188 = vadd.f32 0.0, %v2187
      %v2189 = vpop.f32.mrf.mxu0
      %v2190 = vpop.f32.mrf.mxu0
      %v2191 = vadd.f32 0.0, %v2190
      %v2192 = vpop.f32.mrf.mxu0
      %2193 = vmatprep.mubr.bf16.mxu0 0
      %2194 = vmatmul.mubr.bf16.gmra.mxu0 %v2111
      %v2195 = vpop.f32.mrf.mxu0
      %v2196 = vadd.f32 0.0, %v2195
      %v2197 = vpop.f32.mrf.mxu0
      %v2198 = vpop.f32.mrf.mxu0
      %v2199 = vadd.f32 0.0, %v2198
      %v2200 = vpop.f32.mrf.mxu0
      %2201 = vmatprep.mubr.bf16.mxu0 0
      %2202 = vmatmul.mubr.bf16.gmra.mxu0 %v2112
      %v2203 = vpop.f32.mrf.mxu0
      %v2204 = vadd.f32 0.0, %v2203
      %v2205 = vpop.f32.mrf.mxu0
      %v2206 = vpop.f32.mrf.mxu0
      %v2207 = vadd.f32 0.0, %v2206
      %v2208 = vpop.f32.mrf.mxu0
      %2209 = vdwg.mxu0
      %v2210 = vpack.c.bf16 %v1623, %v1619
      %v2211 = vpack.c.bf16 %v1633, %v1629
      %v2212 = vpack.c.bf16 %v1643, %v1639
      %v2213 = vpack.c.bf16 %v1653, %v1649
      %v2214 = vpack.c.bf16 %v1663, %v1659
      %v2215 = vpack.c.bf16 %v1673, %v1669
      %v2216 = vpack.c.bf16 %v1683, %v1679
      %v2217 = vpack.c.bf16 %v1693, %v1689
      %v2218 = vpack.c.bf16 %v1734, %v1730
      %v2219 = vpack.c.bf16 %v1744, %v1740
      %v2220 = vpack.c.bf16 %v1754, %v1750
      %v2221 = vpack.c.bf16 %v1764, %v1760
      %v2222 = vpack.c.bf16 %v1774, %v1770
      %v2223 = vpack.c.bf16 %v1784, %v1780
      %v2224 = vpack.c.bf16 %v1794, %v1790
      %v2225 = vpack.c.bf16 %v1804, %v1800
      %v2226 = vpack.c.bf16 %v1736, %v1732
      %v2227 = vpack.c.bf16 %v1746, %v1742
      %v2228 = vpack.c.bf16 %v1756, %v1752
      %v2229 = vpack.c.bf16 %v1766, %v1762
      %v2230 = vpack.c.bf16 %v1776, %v1772
      %v2231 = vpack.c.bf16 %v1786, %v1782
      %v2232 = vpack.c.bf16 %v1796, %v1792
      %v2233 = vpack.c.bf16 %v1806, %v1802
      %s2234 = scalar_lea.vmem %s1, 128
      %v2235 = vld [vmem:[%s2234] sm:$0xff]
      %v2236 = vld [vmem:[%s2234 + $0x8] sm:$0xff]
      %v2237 = vld [vmem:[%s2234 + $0x10] sm:$0xff]
      %v2238 = vld [vmem:[%s2234 + $0x18] sm:$0xff]
      %v2239 = vld [vmem:[%s2234 + $0x20] sm:$0xff]
      %v2240 = vld [vmem:[%s2234 + $0x28] sm:$0xff]
      %v2241 = vld [vmem:[%s2234 + $0x30] sm:$0xff]
      %v2242 = vld [vmem:[%s2234 + $0x38] sm:$0xff]
      %v2243 = vld [vmem:[%s2234 + $0x40] sm:$0xff]
      %v2244 = vld [vmem:[%s2234 + $0x48] sm:$0xff]
      %v2245 = vld [vmem:[%s2234 + $0x50] sm:$0xff]
      %v2246 = vld [vmem:[%s2234 + $0x58] sm:$0xff]
      %v2247 = vld [vmem:[%s2234 + $0x60] sm:$0xff]
      %v2248 = vld [vmem:[%s2234 + $0x68] sm:$0xff]
      %v2249 = vld [vmem:[%s2234 + $0x70] sm:$0xff]
      %v2250 = vld [vmem:[%s2234 + $0x78] sm:$0xff]
      %2251 = vmatprep.subr.bf16.mxu0 0
      %2252 = vmatpush1.bf16.xpose.msra.mxu0 %v2225
      %2253 = vmatprep.subr.bf16.mxu0 0
      %2254 = vmatpush1.bf16.xpose.msra.mxu0 %v2224
      %2255 = vmatprep.subr.bf16.mxu0 0
      %2256 = vmatpush1.bf16.xpose.msra.mxu0 %v2223
      %2257 = vmatprep.subr.bf16.mxu0 0
      %2258 = vmatpush1.bf16.xpose.msra.mxu0 %v2222
      %2259 = vmatprep.subr.bf16.mxu0 0
      %2260 = vmatpush1.bf16.xpose.msra.mxu0 %v2221
      %2261 = vmatprep.subr.bf16.mxu0 0
      %2262 = vmatpush1.bf16.xpose.msra.mxu0 %v2220
      %2263 = vmatprep.subr.bf16.mxu0 0
      %2264 = vmatpush1.bf16.xpose.msra.mxu0 %v2219
      %2265 = vmatprep.subr.bf16.mxu0 0
      %2266 = vmatpush1.bf16.xpose.msra.mxu0 %v2218
      %2267 = vmatprep.subr.bf16.mxu0 0
      %2268 = vmatpush2.bf16.xpose.msra.mxu0 0
      %2269 = vmatprep.subr.bf16.mxu0 0
      %2270 = vmatpush2.bf16.xpose.msra.mxu0 0
      %2271 = vmatprep.subr.bf16.mxu0 0
      %2272 = vmatpush2.bf16.xpose.msra.mxu0 0
      %2273 = vmatprep.subr.bf16.mxu0 0
      %2274 = vmatpush2.bf16.xpose.msra.mxu0 0
      %2275 = vmatprep.subr.bf16.mxu0 0
      %2276 = vmatpush2.bf16.xpose.msra.mxu0 0
      %2277 = vmatprep.subr.bf16.mxu0 0
      %2278 = vmatpush2.bf16.xpose.msra.mxu0 0
      %2279 = vmatprep.subr.bf16.mxu0 0
      %2280 = vmatpush2.bf16.xpose.msra.mxu0 0
      %2281 = vmatprep.subr.bf16.mxu0 0
      %2282 = vmatpush2.bf16.xpose.msra.mxu0 0
      %2283 = vmatprep.mubr.bf16.mxu0 0
      %2284 = vmatmul.mubr.bf16.gmra.mxu0 %v2210
      %v2285 = vpop.f32.mrf.mxu0
      %v2286 = vadd.f32 %v2235, %v2285
      %v2287 = vpop.f32.mrf.mxu0
      %v2288 = vpop.f32.mrf.mxu0
      %v2289 = vadd.f32 %v2236, %v2288
      %v2290 = vpop.f32.mrf.mxu0
      %2291 = vmatprep.mubr.bf16.mxu0 0
      %2292 = vmatmul.mubr.bf16.gmra.mxu0 %v2211
      %v2293 = vpop.f32.mrf.mxu0
      %v2294 = vadd.f32 %v2237, %v2293
      %v2295 = vpop.f32.mrf.mxu0
      %v2296 = vpop.f32.mrf.mxu0
      %v2297 = vadd.f32 %v2238, %v2296
      %v2298 = vpop.f32.mrf.mxu0
      %2299 = vmatprep.mubr.bf16.mxu0 0
      %2300 = vmatmul.mubr.bf16.gmra.mxu0 %v2212
      %v2301 = vpop.f32.mrf.mxu0
      %v2302 = vadd.f32 %v2239, %v2301
      %v2303 = vpop.f32.mrf.mxu0
      %v2304 = vpop.f32.mrf.mxu0
      %v2305 = vadd.f32 %v2240, %v2304
      %v2306 = vpop.f32.mrf.mxu0
      %2307 = vmatprep.mubr.bf16.mxu0 0
      %2308 = vmatmul.mubr.bf16.gmra.mxu0 %v2213
      %v2309 = vpop.f32.mrf.mxu0
      %v2310 = vadd.f32 %v2241, %v2309
      %v2311 = vpop.f32.mrf.mxu0
      %v2312 = vpop.f32.mrf.mxu0
      %v2313 = vadd.f32 %v2242, %v2312
      %v2314 = vpop.f32.mrf.mxu0
      %2315 = vmatprep.mubr.bf16.mxu0 0
      %2316 = vmatmul.mubr.bf16.gmra.mxu0 %v2214
      %v2317 = vpop.f32.mrf.mxu0
      %v2318 = vadd.f32 %v2243, %v2317
      %v2319 = vpop.f32.mrf.mxu0
      %v2320 = vpop.f32.mrf.mxu0
      %v2321 = vadd.f32 %v2244, %v2320
      %v2322 = vpop.f32.mrf.mxu0
      %2323 = vmatprep.mubr.bf16.mxu0 0
      %2324 = vmatmul.mubr.bf16.gmra.mxu0 %v2215
      %v2325 = vpop.f32.mrf.mxu0
      %v2326 = vadd.f32 %v2245, %v2325
      %v2327 = vpop.f32.mrf.mxu0
      %v2328 = vpop.f32.mrf.mxu0
      %v2329 = vadd.f32 %v2246, %v2328
      %v2330 = vpop.f32.mrf.mxu0
      %2331 = vmatprep.mubr.bf16.mxu0 0
      %2332 = vmatmul.mubr.bf16.gmra.mxu0 %v2216
      %v2333 = vpop.f32.mrf.mxu0
      %v2334 = vadd.f32 %v2247, %v2333
      %v2335 = vpop.f32.mrf.mxu0
      %v2336 = vpop.f32.mrf.mxu0
      %v2337 = vadd.f32 %v2248, %v2336
      %v2338 = vpop.f32.mrf.mxu0
      %2339 = vmatprep.mubr.bf16.mxu0 0
      %2340 = vmatmul.mubr.bf16.gmra.mxu0 %v2217
      %v2341 = vpop.f32.mrf.mxu0
      %v2342 = vadd.f32 %v2249, %v2341
      %v2343 = vpop.f32.mrf.mxu0
      %v2344 = vpop.f32.mrf.mxu0
      %v2345 = vadd.f32 %v2250, %v2344
      %v2346 = vpop.f32.mrf.mxu0
      %2347 = vdwg.mxu0
      %2348 = vmax.xlane.f32.xlu0 %v2286
      %v2349 = vpop.xlane.xlu0 %2348
      %2350 = vmax.xlane.f32.xlu0 %v2289
      %v2351 = vpop.xlane.xlu0 %2350
      %2352 = vmax.xlane.f32.xlu0 %v2294
      %v2353 = vpop.xlane.xlu0 %2352
      %2354 = vmax.xlane.f32.xlu0 %v2297
      %v2355 = vpop.xlane.xlu0 %2354
      %2356 = vmax.xlane.f32.xlu0 %v2302
      %v2357 = vpop.xlane.xlu0 %2356
      %2358 = vmax.xlane.f32.xlu0 %v2305
      %v2359 = vpop.xlane.xlu0 %2358
      %2360 = vmax.xlane.f32.xlu0 %v2310
      %v2361 = vpop.xlane.xlu0 %2360
      %2362 = vmax.xlane.f32.xlu0 %v2313
      %v2363 = vpop.xlane.xlu0 %2362
      %2364 = vmax.xlane.f32.xlu0 %v2318
      %v2365 = vpop.xlane.xlu0 %2364
      %2366 = vmax.xlane.f32.xlu0 %v2321
      %v2367 = vpop.xlane.xlu0 %2366
      %2368 = vmax.xlane.f32.xlu0 %v2326
      %v2369 = vpop.xlane.xlu0 %2368
      %2370 = vmax.xlane.f32.xlu0 %v2329
      %v2371 = vpop.xlane.xlu0 %2370
      %2372 = vmax.xlane.f32.xlu0 %v2334
      %v2373 = vpop.xlane.xlu0 %2372
      %2374 = vmax.xlane.f32.xlu0 %v2337
      %v2375 = vpop.xlane.xlu0 %2374
      %2376 = vmax.xlane.f32.xlu0 %v2342
      %v2377 = vpop.xlane.xlu0 %2376
      %2378 = vmax.xlane.f32.xlu0 %v2345
      %v2379 = vpop.xlane.xlu0 %2378
      %v2380 = vsub.f32 %v2286, %v2349
      %v2381 = vsub.f32 %v2289, %v2351
      %v2382 = vsub.f32 %v2294, %v2353
      %v2383 = vsub.f32 %v2297, %v2355
      %v2384 = vsub.f32 %v2302, %v2357
      %v2385 = vsub.f32 %v2305, %v2359
      %v2386 = vsub.f32 %v2310, %v2361
      %v2387 = vsub.f32 %v2313, %v2363
      %v2388 = vsub.f32 %v2318, %v2365
      %v2389 = vsub.f32 %v2321, %v2367
      %v2390 = vsub.f32 %v2326, %v2369
      %v2391 = vsub.f32 %v2329, %v2371
      %v2392 = vsub.f32 %v2334, %v2373
      %v2393 = vsub.f32 %v2337, %v2375
      %v2394 = vsub.f32 %v2342, %v2377
      %v2395 = vsub.f32 %v2345, %v2379
      %v2396 = vmul.f32 %v2380, 1.442695
      %v2397 = vpow.pop %v2396
      %v2398 = vmul.f32 %v2381, 1.442695
      %v2399 = vpow.pop %v2398
      %v2400 = vmul.f32 %v2382, 1.442695
      %v2401 = vpow.pop %v2400
      %v2402 = vmul.f32 %v2383, 1.442695
      %v2403 = vpow.pop %v2402
      %v2404 = vmul.f32 %v2384, 1.442695
      %v2405 = vpow.pop %v2404
      %v2406 = vmul.f32 %v2385, 1.442695
      %v2407 = vpow.pop %v2406
      %v2408 = vmul.f32 %v2386, 1.442695
      %v2409 = vpow.pop %v2408
      %v2410 = vmul.f32 %v2387, 1.442695
      %v2411 = vpow.pop %v2410
      %v2412 = vmul.f32 %v2388, 1.442695
      %v2413 = vpow.pop %v2412
      %v2414 = vmul.f32 %v2389, 1.442695
      %v2415 = vpow.pop %v2414
      %v2416 = vmul.f32 %v2390, 1.442695
      %v2417 = vpow.pop %v2416
      %v2418 = vmul.f32 %v2391, 1.442695
      %v2419 = vpow.pop %v2418
      %v2420 = vmul.f32 %v2392, 1.442695
      %v2421 = vpow.pop %v2420
      %v2422 = vmul.f32 %v2393, 1.442695
      %v2423 = vpow.pop %v2422
      %v2424 = vmul.f32 %v2394, 1.442695
      %v2425 = vpow.pop %v2424
      %v2426 = vmul.f32 %v2395, 1.442695
      %v2427 = vpow.pop %v2426
      %2428 = vadd.xlane.f32.xlu0 %v2397
      %v2429 = vpop.xlane.xlu0 %2428
      %2430 = vadd.xlane.f32.xlu0 %v2399
      %v2431 = vpop.xlane.xlu0 %2430
      %2432 = vadd.xlane.f32.xlu0 %v2401
      %v2433 = vpop.xlane.xlu0 %2432
      %2434 = vadd.xlane.f32.xlu0 %v2403
      %v2435 = vpop.xlane.xlu0 %2434
      %2436 = vadd.xlane.f32.xlu0 %v2405
      %v2437 = vpop.xlane.xlu0 %2436
      %2438 = vadd.xlane.f32.xlu0 %v2407
      %v2439 = vpop.xlane.xlu0 %2438
      %2440 = vadd.xlane.f32.xlu0 %v2409
      %v2441 = vpop.xlane.xlu0 %2440
      %2442 = vadd.xlane.f32.xlu0 %v2411
      %v2443 = vpop.xlane.xlu0 %2442
      %2444 = vadd.xlane.f32.xlu0 %v2413
      %v2445 = vpop.xlane.xlu0 %2444
      %2446 = vadd.xlane.f32.xlu0 %v2415
      %v2447 = vpop.xlane.xlu0 %2446
      %2448 = vadd.xlane.f32.xlu0 %v2417
      %v2449 = vpop.xlane.xlu0 %2448
      %2450 = vadd.xlane.f32.xlu0 %v2419
      %v2451 = vpop.xlane.xlu0 %2450
      %2452 = vadd.xlane.f32.xlu0 %v2421
      %v2453 = vpop.xlane.xlu0 %2452
      %2454 = vadd.xlane.f32.xlu0 %v2423
      %v2455 = vpop.xlane.xlu0 %2454
      %2456 = vadd.xlane.f32.xlu0 %v2425
      %v2457 = vpop.xlane.xlu0 %2456
      %2458 = vadd.xlane.f32.xlu0 %v2427
      %v2459 = vpop.xlane.xlu0 %2458
      %v2460 = vrcp.pop %v2429
      %v2461 = vmul.f32 %v2397, %v2460
      %v2462 = vrcp.pop %v2431
      %v2463 = vmul.f32 %v2399, %v2462
      %v2464 = vrcp.pop %v2433
      %v2465 = vmul.f32 %v2401, %v2464
      %v2466 = vrcp.pop %v2435
      %v2467 = vmul.f32 %v2403, %v2466
      %v2468 = vrcp.pop %v2437
      %v2469 = vmul.f32 %v2405, %v2468
      %v2470 = vrcp.pop %v2439
      %v2471 = vmul.f32 %v2407, %v2470
      %v2472 = vrcp.pop %v2441
      %v2473 = vmul.f32 %v2409, %v2472
      %v2474 = vrcp.pop %v2443
      %v2475 = vmul.f32 %v2411, %v2474
      %v2476 = vrcp.pop %v2445
      %v2477 = vmul.f32 %v2413, %v2476
      %v2478 = vrcp.pop %v2447
      %v2479 = vmul.f32 %v2415, %v2478
      %v2480 = vrcp.pop %v2449
      %v2481 = vmul.f32 %v2417, %v2480
      %v2482 = vrcp.pop %v2451
      %v2483 = vmul.f32 %v2419, %v2482
      %v2484 = vrcp.pop %v2453
      %v2485 = vmul.f32 %v2421, %v2484
      %v2486 = vrcp.pop %v2455
      %v2487 = vmul.f32 %v2423, %v2486
      %v2488 = vrcp.pop %v2457
      %v2489 = vmul.f32 %v2425, %v2488
      %v2490 = vrcp.pop %v2459
      %v2491 = vmul.f32 %v2427, %v2490
      %s2492 = scalar_lea.vmem %s739, 128
      %2493 = vst [vmem:[%s2492] sm:$0xff] %v2461
      %2494 = vst [vmem:[%s2492 + $0x8] sm:$0xff] %v2463
      %2495 = vst [vmem:[%s2492 + $0x10] sm:$0xff] %v2465
      %2496 = vst [vmem:[%s2492 + $0x18] sm:$0xff] %v2467
      %2497 = vst [vmem:[%s2492 + $0x20] sm:$0xff] %v2469
      %2498 = vst [vmem:[%s2492 + $0x28] sm:$0xff] %v2471
      %2499 = vst [vmem:[%s2492 + $0x30] sm:$0xff] %v2473
      %2500 = vst [vmem:[%s2492 + $0x38] sm:$0xff] %v2475
      %2501 = vst [vmem:[%s2492 + $0x40] sm:$0xff] %v2477
      %2502 = vst [vmem:[%s2492 + $0x48] sm:$0xff] %v2479
      %2503 = vst [vmem:[%s2492 + $0x50] sm:$0xff] %v2481
      %2504 = vst [vmem:[%s2492 + $0x58] sm:$0xff] %v2483
      %2505 = vst [vmem:[%s2492 + $0x60] sm:$0xff] %v2485
      %2506 = vst [vmem:[%s2492 + $0x68] sm:$0xff] %v2487
      %2507 = vst [vmem:[%s2492 + $0x70] sm:$0xff] %v2489
      %2508 = vst [vmem:[%s2492 + $0x78] sm:$0xff] %v2491
      %v2509 = vpack.c.bf16 %v2463, %v2461
      %v2510 = vpack.c.bf16 %v2467, %v2465
      %v2511 = vpack.c.bf16 %v2471, %v2469
      %v2512 = vpack.c.bf16 %v2475, %v2473
      %v2513 = vpack.c.bf16 %v2479, %v2477
      %v2514 = vpack.c.bf16 %v2483, %v2481
      %v2515 = vpack.c.bf16 %v2487, %v2485
      %v2516 = vpack.c.bf16 %v2491, %v2489
      %2517 = vmatprep.subr.bf16.mxu0 0
      %2518 = vmatpush1.bf16.msra.mxu0 %v2233
      %2519 = vmatprep.subr.bf16.mxu0 0
      %2520 = vmatpush1.bf16.msra.mxu0 %v2232
      %2521 = vmatprep.subr.bf16.mxu0 0
      %2522 = vmatpush1.bf16.msra.mxu0 %v2231
      %2523 = vmatprep.subr.bf16.mxu0 0
      %2524 = vmatpush1.bf16.msra.mxu0 %v2230
      %2525 = vmatprep.subr.bf16.mxu0 0
      %2526 = vmatpush1.bf16.msra.mxu0 %v2229
      %2527 = vmatprep.subr.bf16.mxu0 0
      %2528 = vmatpush1.bf16.msra.mxu0 %v2228
      %2529 = vmatprep.subr.bf16.mxu0 0
      %2530 = vmatpush1.bf16.msra.mxu0 %v2227
      %2531 = vmatprep.subr.bf16.mxu0 0
      %2532 = vmatpush1.bf16.msra.mxu0 %v2226
      %2533 = vmatprep.subr.bf16.mxu0 0
      %2534 = vmatpush2.bf16.msra.mxu0 0
      %2535 = vmatprep.subr.bf16.mxu0 0
      %2536 = vmatpush2.bf16.msra.mxu0 0
      %2537 = vmatprep.subr.bf16.mxu0 0
      %2538 = vmatpush2.bf16.msra.mxu0 0
      %2539 = vmatprep.subr.bf16.mxu0 0
      %2540 = vmatpush2.bf16.msra.mxu0 0
      %2541 = vmatprep.subr.bf16.mxu0 0
      %2542 = vmatpush2.bf16.msra.mxu0 0
      %2543 = vmatprep.subr.bf16.mxu0 0
      %2544 = vmatpush2.bf16.msra.mxu0 0
      %2545 = vmatprep.subr.bf16.mxu0 0
      %2546 = vmatpush2.bf16.msra.mxu0 0
      %2547 = vmatprep.subr.bf16.mxu0 0
      %2548 = vmatpush2.bf16.msra.mxu0 0
      %2549 = vmatprep.mubr.bf16.mxu0 0
      %2550 = vmatmul.mubr.bf16.gmra.mxu0 %v2509
      %v2551 = vpop.f32.mrf.mxu0
      %v2552 = vadd.f32 0.0, %v2551
      %v2553 = vpop.f32.mrf.mxu0
      %v2554 = vpop.f32.mrf.mxu0
      %v2555 = vadd.f32 0.0, %v2554
      %v2556 = vpop.f32.mrf.mxu0
      %2557 = vmatprep.mubr.bf16.mxu0 0
      %2558 = vmatmul.mubr.bf16.gmra.mxu0 %v2510
      %v2559 = vpop.f32.mrf.mxu0
      %v2560 = vadd.f32 0.0, %v2559
      %v2561 = vpop.f32.mrf.mxu0
      %v2562 = vpop.f32.mrf.mxu0
      %v2563 = vadd.f32 0.0, %v2562
      %v2564 = vpop.f32.mrf.mxu0
      %2565 = vmatprep.mubr.bf16.mxu0 0
      %2566 = vmatmul.mubr.bf16.gmra.mxu0 %v2511
      %v2567 = vpop.f32.mrf.mxu0
      %v2568 = vadd.f32 0.0, %v2567
      %v2569 = vpop.f32.mrf.mxu0
      %v2570 = vpop.f32.mrf.mxu0
      %v2571 = vadd.f32 0.0, %v2570
      %v2572 = vpop.f32.mrf.mxu0
      %2573 = vmatprep.mubr.bf16.mxu0 0
      %2574 = vmatmul.mubr.bf16.gmra.mxu0 %v2512
      %v2575 = vpop.f32.mrf.mxu0
      %v2576 = vadd.f32 0.0, %v2575
      %v2577 = vpop.f32.mrf.mxu0
      %v2578 = vpop.f32.mrf.mxu0
      %v2579 = vadd.f32 0.0, %v2578
      %v2580 = vpop.f32.mrf.mxu0
      %2581 = vmatprep.mubr.bf16.mxu0 0
      %2582 = vmatmul.mubr.bf16.gmra.mxu0 %v2513
      %v2583 = vpop.f32.mrf.mxu0
      %v2584 = vadd.f32 0.0, %v2583
      %v2585 = vpop.f32.mrf.mxu0
      %v2586 = vpop.f32.mrf.mxu0
      %v2587 = vadd.f32 0.0, %v2586
      %v2588 = vpop.f32.mrf.mxu0
      %2589 = vmatprep.mubr.bf16.mxu0 0
      %2590 = vmatmul.mubr.bf16.gmra.mxu0 %v2514
      %v2591 = vpop.f32.mrf.mxu0
      %v2592 = vadd.f32 0.0, %v2591
      %v2593 = vpop.f32.mrf.mxu0
      %v2594 = vpop.f32.mrf.mxu0
      %v2595 = vadd.f32 0.0, %v2594
      %v2596 = vpop.f32.mrf.mxu0
      %2597 = vmatprep.mubr.bf16.mxu0 0
      %2598 = vmatmul.mubr.bf16.gmra.mxu0 %v2515
      %v2599 = vpop.f32.mrf.mxu0
      %v2600 = vadd.f32 0.0, %v2599
      %v2601 = vpop.f32.mrf.mxu0
      %v2602 = vpop.f32.mrf.mxu0
      %v2603 = vadd.f32 0.0, %v2602
      %v2604 = vpop.f32.mrf.mxu0
      %2605 = vmatprep.mubr.bf16.mxu0 0
      %2606 = vmatmul.mubr.bf16.gmra.mxu0 %v2516
      %v2607 = vpop.f32.mrf.mxu0
      %v2608 = vadd.f32 0.0, %v2607
      %v2609 = vpop.f32.mrf.mxu0
      %v2610 = vpop.f32.mrf.mxu0
      %v2611 = vadd.f32 0.0, %v2610
      %v2612 = vpop.f32.mrf.mxu0
      %2613 = vdwg.mxu0
      %v2614 = vpack.c.bf16 %v2151, %v2148
      %v2615 = vpack.c.bf16 %v2555, %v2552
      %v2616 = vpack.c.bf16 %v2159, %v2156
      %v2617 = vpack.c.bf16 %v2563, %v2560
      %v2618 = vpack.c.bf16 %v2167, %v2164
      %v2619 = vpack.c.bf16 %v2571, %v2568
      %v2620 = vpack.c.bf16 %v2175, %v2172
      %v2621 = vpack.c.bf16 %v2579, %v2576
      %v2622 = vpack.c.bf16 %v2183, %v2180
      %v2623 = vpack.c.bf16 %v2587, %v2584
      %v2624 = vpack.c.bf16 %v2191, %v2188
      %v2625 = vpack.c.bf16 %v2595, %v2592
      %v2626 = vpack.c.bf16 %v2199, %v2196
      %v2627 = vpack.c.bf16 %v2603, %v2600
      %v2628 = vpack.c.bf16 %v2207, %v2204
      %v2629 = vpack.c.bf16 %v2611, %v2608
      %v2630 = vld [vmem:[%s692] sm:$0xff]
      %v2631 = vld [vmem:[%s692 + $0x8] sm:$0xff]
      %v2632 = vld [vmem:[%s692 + $0x10] sm:$0xff]
      %v2633 = vld [vmem:[%s692 + $0x18] sm:$0xff]
      %v2634 = vld [vmem:[%s692 + $0x20] sm:$0xff]
      %v2635 = vld [vmem:[%s692 + $0x28] sm:$0xff]
      %v2636 = vld [vmem:[%s692 + $0x30] sm:$0xff]
      %v2637 = vld [vmem:[%s692 + $0x38] sm:$0xff]
      %v2638 = vld [vmem:[%s692 + $0x40] sm:$0xff]
      %v2639 = vld [vmem:[%s692 + $0x48] sm:$0xff]
      %v2640 = vld [vmem:[%s692 + $0x50] sm:$0xff]
      %v2641 = vld [vmem:[%s692 + $0x58] sm:$0xff]
      %v2642 = vld [vmem:[%s692 + $0x60] sm:$0xff]
      %v2643 = vld [vmem:[%s692 + $0x68] sm:$0xff]
      %v2644 = vld [vmem:[%s692 + $0x70] sm:$0xff]
      %v2645 = vld [vmem:[%s692 + $0x78] sm:$0xff]
      %v2646 = vld [vmem:[%s692 + $0x80] sm:$0xff]
      %v2647 = vld [vmem:[%s692 + $0x88] sm:$0xff]
      %v2648 = vld [vmem:[%s692 + $0x90] sm:$0xff]
      %v2649 = vld [vmem:[%s692 + $0x98] sm:$0xff]
      %v2650 = vld [vmem:[%s692 + $0xa0] sm:$0xff]
      %v2651 = vld [vmem:[%s692 + $0xa8] sm:$0xff]
      %v2652 = vld [vmem:[%s692 + $0xb0] sm:$0xff]
      %v2653 = vld [vmem:[%s692 + $0xb8] sm:$0xff]
      %v2654 = vld [vmem:[%s692 + $0xc0] sm:$0xff]
      %v2655 = vld [vmem:[%s692 + $0xc8] sm:$0xff]
      %v2656 = vld [vmem:[%s692 + $0xd0] sm:$0xff]
      %v2657 = vld [vmem:[%s692 + $0xd8] sm:$0xff]
      %v2658 = vld [vmem:[%s692 + $0xe0] sm:$0xff]
      %v2659 = vld [vmem:[%s692 + $0xe8] sm:$0xff]
      %v2660 = vld [vmem:[%s692 + $0xf0] sm:$0xff]
      %v2661 = vld [vmem:[%s692 + $0xf8] sm:$0xff]
      %v2662 = vld [vmem:[%s696] sm:$0x3]
      %v2664 = vlaneseq
      %v2665 = vshrl.u32 %v2664, 7
      %v2666 = vsub.s32 0, %v2665
      %v2667 = vrot.slane %v2662, %v2666
      %v2668 = vlaneseq
      %v2669 = vshrl.u32 %v2668, 7
      %v2670 = vsub.s32 1, %v2669
      %v2671 = vrot.slane %v2662, %v2670
      %v2706 = vunpack.c.l.b16 %v2630
      %v2707 = vunpack.c.h.b16 %v2630
      %v2708 = vunpack.c.l.b16 %v2631
      %v2709 = vunpack.c.h.b16 %v2631
      %v2710 = vunpack.c.l.b16 %v2632
      %v2711 = vunpack.c.h.b16 %v2632
      %v2712 = vunpack.c.l.b16 %v2633
      %v2713 = vunpack.c.h.b16 %v2633
      %v2714 = vunpack.c.l.b16 %v2634
      %v2715 = vunpack.c.h.b16 %v2634
      %v2716 = vunpack.c.l.b16 %v2635
      %v2717 = vunpack.c.h.b16 %v2635
      %v2718 = vunpack.c.l.b16 %v2636
      %v2719 = vunpack.c.h.b16 %v2636
      %v2720 = vunpack.c.l.b16 %v2637
      %v2721 = vunpack.c.h.b16 %v2637
      %v2722 = vunpack.c.l.b16 %v2638
      %v2723 = vunpack.c.h.b16 %v2638
      %v2724 = vunpack.c.l.b16 %v2639
      %v2725 = vunpack.c.h.b16 %v2639
      %v2726 = vunpack.c.l.b16 %v2640
      %v2727 = vunpack.c.h.b16 %v2640
      %v2728 = vunpack.c.l.b16 %v2641
      %v2729 = vunpack.c.h.b16 %v2641
      %v2730 = vunpack.c.l.b16 %v2642
      %v2731 = vunpack.c.h.b16 %v2642
      %v2732 = vunpack.c.l.b16 %v2643
      %v2733 = vunpack.c.h.b16 %v2643
      %v2734 = vunpack.c.l.b16 %v2644
      %v2735 = vunpack.c.h.b16 %v2644
      %v2736 = vunpack.c.l.b16 %v2645
      %v2737 = vunpack.c.h.b16 %v2645
      %v2738 = vunpack.c.l.b16 %v2646
      %v2739 = vunpack.c.h.b16 %v2646
      %v2740 = vunpack.c.l.b16 %v2647
      %v2741 = vunpack.c.h.b16 %v2647
      %v2742 = vunpack.c.l.b16 %v2648
      %v2743 = vunpack.c.h.b16 %v2648
      %v2744 = vunpack.c.l.b16 %v2649
      %v2745 = vunpack.c.h.b16 %v2649
      %v2746 = vunpack.c.l.b16 %v2650
      %v2747 = vunpack.c.h.b16 %v2650
      %v2748 = vunpack.c.l.b16 %v2651
      %v2749 = vunpack.c.h.b16 %v2651
      %v2750 = vunpack.c.l.b16 %v2652
      %v2751 = vunpack.c.h.b16 %v2652
      %v2752 = vunpack.c.l.b16 %v2653
      %v2753 = vunpack.c.h.b16 %v2653
      %v2754 = vunpack.c.l.b16 %v2654
      %v2755 = vunpack.c.h.b16 %v2654
      %v2756 = vunpack.c.l.b16 %v2655
      %v2757 = vunpack.c.h.b16 %v2655
      %v2758 = vunpack.c.l.b16 %v2656
      %v2759 = vunpack.c.h.b16 %v2656
      %v2760 = vunpack.c.l.b16 %v2657
      %v2761 = vunpack.c.h.b16 %v2657
      %v2762 = vunpack.c.l.b16 %v2658
      %v2763 = vunpack.c.h.b16 %v2658
      %v2764 = vunpack.c.l.b16 %v2659
      %v2765 = vunpack.c.h.b16 %v2659
      %v2766 = vunpack.c.l.b16 %v2660
      %v2767 = vunpack.c.h.b16 %v2660
      %v2768 = vunpack.c.l.b16 %v2661
      %v2769 = vunpack.c.h.b16 %v2661
      %v2770 = vpack.c.b16 %v2708, %v2706
      %v2771 = vpack.c.b16 %v2709, %v2707
      %v2772 = vpack.c.b16 %v2712, %v2710
      %v2773 = vpack.c.b16 %v2713, %v2711
      %v2774 = vpack.c.b16 %v2716, %v2714
      %v2775 = vpack.c.b16 %v2717, %v2715
      %v2776 = vpack.c.b16 %v2720, %v2718
      %v2777 = vpack.c.b16 %v2721, %v2719
      %v2778 = vpack.c.b16 %v2724, %v2722
      %v2779 = vpack.c.b16 %v2725, %v2723
      %v2780 = vpack.c.b16 %v2728, %v2726
      %v2781 = vpack.c.b16 %v2729, %v2727
      %v2782 = vpack.c.b16 %v2732, %v2730
      %v2783 = vpack.c.b16 %v2733, %v2731
      %v2784 = vpack.c.b16 %v2736, %v2734
      %v2785 = vpack.c.b16 %v2737, %v2735
      %v2786 = vpack.c.b16 %v2740, %v2738
      %v2787 = vpack.c.b16 %v2741, %v2739
      %v2788 = vpack.c.b16 %v2744, %v2742
      %v2789 = vpack.c.b16 %v2745, %v2743
      %v2790 = vpack.c.b16 %v2748, %v2746
      %v2791 = vpack.c.b16 %v2749, %v2747
      %v2792 = vpack.c.b16 %v2752, %v2750
      %v2793 = vpack.c.b16 %v2753, %v2751
      %v2794 = vpack.c.b16 %v2756, %v2754
      %v2795 = vpack.c.b16 %v2757, %v2755
      %v2796 = vpack.c.b16 %v2760, %v2758
      %v2797 = vpack.c.b16 %v2761, %v2759
      %v2798 = vpack.c.b16 %v2764, %v2762
      %v2799 = vpack.c.b16 %v2765, %v2763
      %v2800 = vpack.c.b16 %v2768, %v2766
      %v2801 = vpack.c.b16 %v2769, %v2767
      %2834 = vmatprep.subr.bf16.mxu0 %v2785
      %2835 = vmatpush1.bf16.msra.mxu0 %v2784
      %2836 = vmatprep.subr.bf16.mxu0 %v2783
      %2837 = vmatpush1.bf16.msra.mxu0 %v2782
      %2838 = vmatprep.subr.bf16.mxu0 %v2781
      %2839 = vmatpush1.bf16.msra.mxu0 %v2780
      %2840 = vmatprep.subr.bf16.mxu0 %v2779
      %2841 = vmatpush1.bf16.msra.mxu0 %v2778
      %2842 = vmatprep.subr.bf16.mxu0 %v2777
      %2843 = vmatpush1.bf16.msra.mxu0 %v2776
      %2844 = vmatprep.subr.bf16.mxu0 %v2775
      %2845 = vmatpush1.bf16.msra.mxu0 %v2774
      %2846 = vmatprep.subr.bf16.mxu0 %v2773
      %2847 = vmatpush1.bf16.msra.mxu0 %v2772
      %2848 = vmatprep.subr.bf16.mxu0 %v2771
      %2849 = vmatpush1.bf16.msra.mxu0 %v2770
      %2850 = vmatprep.subr.bf16.mxu0 %v2801
      %2851 = vmatpush2.bf16.msra.mxu0 %v2800
      %2852 = vmatprep.subr.bf16.mxu0 %v2799
      %2853 = vmatpush2.bf16.msra.mxu0 %v2798
      %2854 = vmatprep.subr.bf16.mxu0 %v2797
      %2855 = vmatpush2.bf16.msra.mxu0 %v2796
      %2856 = vmatprep.subr.bf16.mxu0 %v2795
      %2857 = vmatpush2.bf16.msra.mxu0 %v2794
      %2858 = vmatprep.subr.bf16.mxu0 %v2793
      %2859 = vmatpush2.bf16.msra.mxu0 %v2792
      %2860 = vmatprep.subr.bf16.mxu0 %v2791
      %2861 = vmatpush2.bf16.msra.mxu0 %v2790
      %2862 = vmatprep.subr.bf16.mxu0 %v2789
      %2863 = vmatpush2.bf16.msra.mxu0 %v2788
      %2864 = vmatprep.subr.bf16.mxu0 %v2787
      %2865 = vmatpush2.bf16.msra.mxu0 %v2786
      %2866 = vmatprep.mubr.bf16.mxu0 %v2615
      %2867 = vmatmul.mubr.bf16.gmra.mxu0 %v2614
      %v2868 = vpop.f32.mrf.mxu0
      %v2869 = vadd.f32 %v2667, %v2868
      %v2870 = vpop.f32.mrf.mxu0
      %v2871 = vadd.f32 %v2671, %v2870
      %v2872 = vpop.f32.mrf.mxu0
      %v2873 = vadd.f32 %v2667, %v2872
      %v2874 = vpop.f32.mrf.mxu0
      %v2875 = vadd.f32 %v2671, %v2874
      %2876 = vmatprep.mubr.bf16.mxu0 %v2617
      %2877 = vmatmul.mubr.bf16.gmra.mxu0 %v2616
      %v2878 = vpop.f32.mrf.mxu0
      %v2879 = vadd.f32 %v2667, %v2878
      %v2880 = vpop.f32.mrf.mxu0
      %v2881 = vadd.f32 %v2671, %v2880
      %v2882 = vpop.f32.mrf.mxu0
      %v2883 = vadd.f32 %v2667, %v2882
      %v2884 = vpop.f32.mrf.mxu0
      %v2885 = vadd.f32 %v2671, %v2884
      %2886 = vmatprep.mubr.bf16.mxu0 %v2619
      %2887 = vmatmul.mubr.bf16.gmra.mxu0 %v2618
      %v2888 = vpop.f32.mrf.mxu0
      %v2889 = vadd.f32 %v2667, %v2888
      %v2890 = vpop.f32.mrf.mxu0
      %v2891 = vadd.f32 %v2671, %v2890
      %v2892 = vpop.f32.mrf.mxu0
      %v2893 = vadd.f32 %v2667, %v2892
      %v2894 = vpop.f32.mrf.mxu0
      %v2895 = vadd.f32 %v2671, %v2894
      %2896 = vmatprep.mubr.bf16.mxu0 %v2621
      %2897 = vmatmul.mubr.bf16.gmra.mxu0 %v2620
      %v2898 = vpop.f32.mrf.mxu0
      %v2899 = vadd.f32 %v2667, %v2898
      %v2900 = vpop.f32.mrf.mxu0
      %v2901 = vadd.f32 %v2671, %v2900
      %v2902 = vpop.f32.mrf.mxu0
      %v2903 = vadd.f32 %v2667, %v2902
      %v2904 = vpop.f32.mrf.mxu0
      %v2905 = vadd.f32 %v2671, %v2904
      %2906 = vmatprep.mubr.bf16.mxu0 %v2623
      %2907 = vmatmul.mubr.bf16.gmra.mxu0 %v2622
      %v2908 = vpop.f32.mrf.mxu0
      %v2909 = vadd.f32 %v2667, %v2908
      %v2910 = vpop.f32.mrf.mxu0
      %v2911 = vadd.f32 %v2671, %v2910
      %v2912 = vpop.f32.mrf.mxu0
      %v2913 = vadd.f32 %v2667, %v2912
      %v2914 = vpop.f32.mrf.mxu0
      %v2915 = vadd.f32 %v2671, %v2914
      %2916 = vmatprep.mubr.bf16.mxu0 %v2625
      %2917 = vmatmul.mubr.bf16.gmra.mxu0 %v2624
      %v2918 = vpop.f32.mrf.mxu0
      %v2919 = vadd.f32 %v2667, %v2918
      %v2920 = vpop.f32.mrf.mxu0
      %v2921 = vadd.f32 %v2671, %v2920
      %v2922 = vpop.f32.mrf.mxu0
      %v2923 = vadd.f32 %v2667, %v2922
      %v2924 = vpop.f32.mrf.mxu0
      %v2925 = vadd.f32 %v2671, %v2924
      %2926 = vmatprep.mubr.bf16.mxu0 %v2627
      %2927 = vmatmul.mubr.bf16.gmra.mxu0 %v2626
      %v2928 = vpop.f32.mrf.mxu0
      %v2929 = vadd.f32 %v2667, %v2928
      %v2930 = vpop.f32.mrf.mxu0
      %v2931 = vadd.f32 %v2671, %v2930
      %v2932 = vpop.f32.mrf.mxu0
      %v2933 = vadd.f32 %v2667, %v2932
      %v2934 = vpop.f32.mrf.mxu0
      %v2935 = vadd.f32 %v2671, %v2934
      %2936 = vmatprep.mubr.bf16.mxu0 %v2629
      %2937 = vmatmul.mubr.bf16.gmra.mxu0 %v2628
      %v2938 = vpop.f32.mrf.mxu0
      %v2939 = vadd.f32 %v2667, %v2938
      %v2940 = vpop.f32.mrf.mxu0
      %v2941 = vadd.f32 %v2671, %v2940
      %v2942 = vpop.f32.mrf.mxu0
      %v2943 = vadd.f32 %v2667, %v2942
      %v2944 = vpop.f32.mrf.mxu0
      %v2945 = vadd.f32 %v2671, %v2944
      %2946 = vdwg.mxu0
      %v2947 = vadd.f32 %v813, %v2869
      %v2948 = vadd.f32 %v814, %v2871
      %v2949 = vadd.f32 %v815, %v2873
      %v2950 = vadd.f32 %v816, %v2875
      %v2951 = vadd.f32 %v817, %v2879
      %v2952 = vadd.f32 %v818, %v2881
      %v2953 = vadd.f32 %v819, %v2883
      %v2954 = vadd.f32 %v820, %v2885
      %v2955 = vadd.f32 %v821, %v2889
      %v2956 = vadd.f32 %v822, %v2891
      %v2957 = vadd.f32 %v823, %v2893
      %v2958 = vadd.f32 %v824, %v2895
      %v2959 = vadd.f32 %v825, %v2899
      %v2960 = vadd.f32 %v826, %v2901
      %v2961 = vadd.f32 %v827, %v2903
      %v2962 = vadd.f32 %v828, %v2905
      %v2963 = vadd.f32 %v829, %v2909
      %v2964 = vadd.f32 %v830, %v2911
      %v2965 = vadd.f32 %v831, %v2913
      %v2966 = vadd.f32 %v832, %v2915
      %v2967 = vadd.f32 %v833, %v2919
      %v2968 = vadd.f32 %v834, %v2921
      %v2969 = vadd.f32 %v835, %v2923
      %v2970 = vadd.f32 %v836, %v2925
      %v2971 = vadd.f32 %v837, %v2929
      %v2972 = vadd.f32 %v838, %v2931
      %v2973 = vadd.f32 %v839, %v2933
      %v2974 = vadd.f32 %v840, %v2935
      %v2975 = vadd.f32 %v841, %v2939
      %v2976 = vadd.f32 %v842, %v2941
      %v2977 = vadd.f32 %v843, %v2943
      %v2978 = vadd.f32 %v844, %v2945
      %v2979 = vld [vmem:[%s700] sm:$0x3]
      %v2980 = vld [vmem:[%s704] sm:$0x3]
      %v2981 = vadd.f32 %v2947, %v2948
      %2982 = vadd.xlane.f32.xlu0 %v2981
      %v2983 = vpop.xlane.xlu0 %2982
      %v2984 = vadd.f32 %v2949, %v2950
      %2985 = vadd.xlane.f32.xlu0 %v2984
      %v2986 = vpop.xlane.xlu0 %2985
      %v2987 = vadd.f32 %v2951, %v2952
      %2988 = vadd.xlane.f32.xlu0 %v2987
      %v2989 = vpop.xlane.xlu0 %2988
      %v2990 = vadd.f32 %v2953, %v2954
      %2991 = vadd.xlane.f32.xlu0 %v2990
      %v2992 = vpop.xlane.xlu0 %2991
      %v2993 = vadd.f32 %v2955, %v2956
      %2994 = vadd.xlane.f32.xlu0 %v2993
      %v2995 = vpop.xlane.xlu0 %2994
      %v2996 = vadd.f32 %v2957, %v2958
      %2997 = vadd.xlane.f32.xlu0 %v2996
      %v2998 = vpop.xlane.xlu0 %2997
      %v2999 = vadd.f32 %v2959, %v2960
      %3000 = vadd.xlane.f32.xlu0 %v2999
      %v3001 = vpop.xlane.xlu0 %3000
      %v3002 = vadd.f32 %v2961, %v2962
      %3003 = vadd.xlane.f32.xlu0 %v3002
      %v3004 = vpop.xlane.xlu0 %3003
      %v3005 = vadd.f32 %v2963, %v2964
      %3006 = vadd.xlane.f32.xlu0 %v3005
      %v3007 = vpop.xlane.xlu0 %3006
      %v3008 = vadd.f32 %v2965, %v2966
      %3009 = vadd.xlane.f32.xlu0 %v3008
      %v3010 = vpop.xlane.xlu0 %3009
      %v3011 = vadd.f32 %v2967, %v2968
      %3012 = vadd.xlane.f32.xlu0 %v3011
      %v3013 = vpop.xlane.xlu0 %3012
      %v3014 = vadd.f32 %v2969, %v2970
      %3015 = vadd.xlane.f32.xlu0 %v3014
      %v3016 = vpop.xlane.xlu0 %3015
      %v3017 = vadd.f32 %v2971, %v2972
      %3018 = vadd.xlane.f32.xlu0 %v3017
      %v3019 = vpop.xlane.xlu0 %3018
      %v3020 = vadd.f32 %v2973, %v2974
      %3021 = vadd.xlane.f32.xlu0 %v3020
      %v3022 = vpop.xlane.xlu0 %3021
      %v3023 = vadd.f32 %v2975, %v2976
      %3024 = vadd.xlane.f32.xlu0 %v3023
      %v3025 = vpop.xlane.xlu0 %3024
      %v3026 = vadd.f32 %v2977, %v2978
      %3027 = vadd.xlane.f32.xlu0 %v3026
      %v3028 = vpop.xlane.xlu0 %3027
      %v3029 = vrcp.pop 256.0
      %v3030 = vmul.f32 %v2983, %v3029
      %v3031 = vmul.f32 %v2986, %v3029
      %v3032 = vmul.f32 %v2989, %v3029
      %v3033 = vmul.f32 %v2992, %v3029
      %v3034 = vmul.f32 %v2995, %v3029
      %v3035 = vmul.f32 %v2998, %v3029
      %v3036 = vmul.f32 %v3001, %v3029
      %v3037 = vmul.f32 %v3004, %v3029
      %v3038 = vmul.f32 %v3007, %v3029
      %v3039 = vmul.f32 %v3010, %v3029
      %v3040 = vmul.f32 %v3013, %v3029
      %v3041 = vmul.f32 %v3016, %v3029
      %v3042 = vmul.f32 %v3019, %v3029
      %v3043 = vmul.f32 %v3022, %v3029
      %v3044 = vmul.f32 %v3025, %v3029
      %v3045 = vmul.f32 %v3028, %v3029
      %v3046 = vsub.f32 %v2947, %v3030
      %v3047 = vsub.f32 %v2948, %v3030
      %v3048 = vsub.f32 %v2949, %v3031
      %v3049 = vsub.f32 %v2950, %v3031
      %v3050 = vsub.f32 %v2951, %v3032
      %v3051 = vsub.f32 %v2952, %v3032
      %v3052 = vsub.f32 %v2953, %v3033
      %v3053 = vsub.f32 %v2954, %v3033
      %v3054 = vsub.f32 %v2955, %v3034
      %v3055 = vsub.f32 %v2956, %v3034
      %v3056 = vsub.f32 %v2957, %v3035
      %v3057 = vsub.f32 %v2958, %v3035
      %v3058 = vsub.f32 %v2959, %v3036
      %v3059 = vsub.f32 %v2960, %v3036
      %v3060 = vsub.f32 %v2961, %v3037
      %v3061 = vsub.f32 %v2962, %v3037
      %v3062 = vsub.f32 %v2963, %v3038
      %v3063 = vsub.f32 %v2964, %v3038
      %v3064 = vsub.f32 %v2965, %v3039
      %v3065 = vsub.f32 %v2966, %v3039
      %v3066 = vsub.f32 %v2967, %v3040
      %v3067 = vsub.f32 %v2968, %v3040
      %v3068 = vsub.f32 %v2969, %v3041
      %v3069 = vsub.f32 %v2970, %v3041
      %v3070 = vsub.f32 %v2971, %v3042
      %v3071 = vsub.f32 %v2972, %v3042
      %v3072 = vsub.f32 %v2973, %v3043
      %v3073 = vsub.f32 %v2974, %v3043
      %v3074 = vsub.f32 %v2975, %v3044
      %v3075 = vsub.f32 %v2976, %v3044
      %v3076 = vsub.f32 %v2977, %v3045
      %v3077 = vsub.f32 %v2978, %v3045
      %v3078 = vmul.f32 %v3046, %v3046
      %v3079 = vmul.f32 %v3047, %v3047
      %v3080 = vmul.f32 %v3048, %v3048
      %v3081 = vmul.f32 %v3049, %v3049
      %v3082 = vmul.f32 %v3050, %v3050
      %v3083 = vmul.f32 %v3051, %v3051
      %v3084 = vmul.f32 %v3052, %v3052
      %v3085 = vmul.f32 %v3053, %v3053
      %v3086 = vmul.f32 %v3054, %v3054
      %v3087 = vmul.f32 %v3055, %v3055
      %v3088 = vmul.f32 %v3056, %v3056
      %v3089 = vmul.f32 %v3057, %v3057
      %v3090 = vmul.f32 %v3058, %v3058
      %v3091 = vmul.f32 %v3059, %v3059
      %v3092 = vmul.f32 %v3060, %v3060
      %v3093 = vmul.f32 %v3061, %v3061
      %v3094 = vmul.f32 %v3062, %v3062
      %v3095 = vmul.f32 %v3063, %v3063
      %v3096 = vmul.f32 %v3064, %v3064
      %v3097 = vmul.f32 %v3065, %v3065
      %v3098 = vmul.f32 %v3066, %v3066
      %v3099 = vmul.f32 %v3067, %v3067
      %v3100 = vmul.f32 %v3068, %v3068
      %v3101 = vmul.f32 %v3069, %v3069
      %v3102 = vmul.f32 %v3070, %v3070
      %v3103 = vmul.f32 %v3071, %v3071
      %v3104 = vmul.f32 %v3072, %v3072
      %v3105 = vmul.f32 %v3073, %v3073
      %v3106 = vmul.f32 %v3074, %v3074
      %v3107 = vmul.f32 %v3075, %v3075
      %v3108 = vmul.f32 %v3076, %v3076
      %v3109 = vmul.f32 %v3077, %v3077
      %v3110 = vadd.f32 %v3078, %v3079
      %3111 = vadd.xlane.f32.xlu0 %v3110
      %v3112 = vpop.xlane.xlu0 %3111
      %v3113 = vadd.f32 %v3080, %v3081
      %3114 = vadd.xlane.f32.xlu0 %v3113
      %v3115 = vpop.xlane.xlu0 %3114
      %v3116 = vadd.f32 %v3082, %v3083
      %3117 = vadd.xlane.f32.xlu0 %v3116
      %v3118 = vpop.xlane.xlu0 %3117
      %v3119 = vadd.f32 %v3084, %v3085
      %3120 = vadd.xlane.f32.xlu0 %v3119
      %v3121 = vpop.xlane.xlu0 %3120
      %v3122 = vadd.f32 %v3086, %v3087
      %3123 = vadd.xlane.f32.xlu0 %v3122
      %v3124 = vpop.xlane.xlu0 %3123
      %v3125 = vadd.f32 %v3088, %v3089
      %3126 = vadd.xlane.f32.xlu0 %v3125
      %v3127 = vpop.xlane.xlu0 %3126
      %v3128 = vadd.f32 %v3090, %v3091
      %3129 = vadd.xlane.f32.xlu0 %v3128
      %v3130 = vpop.xlane.xlu0 %3129
      %v3131 = vadd.f32 %v3092, %v3093
      %3132 = vadd.xlane.f32.xlu0 %v3131
      %v3133 = vpop.xlane.xlu0 %3132
      %v3134 = vadd.f32 %v3094, %v3095
      %3135 = vadd.xlane.f32.xlu0 %v3134
      %v3136 = vpop.xlane.xlu0 %3135
      %v3137 = vadd.f32 %v3096, %v3097
      %3138 = vadd.xlane.f32.xlu0 %v3137
      %v3139 = vpop.xlane.xlu0 %3138
      %v3140 = vadd.f32 %v3098, %v3099
      %3141 = vadd.xlane.f32.xlu0 %v3140
      %v3142 = vpop.xlane.xlu0 %3141
      %v3143 = vadd.f32 %v3100, %v3101
      %3144 = vadd.xlane.f32.xlu0 %v3143
      %v3145 = vpop.xlane.xlu0 %3144
      %v3146 = vadd.f32 %v3102, %v3103
      %3147 = vadd.xlane.f32.xlu0 %v3146
      %v3148 = vpop.xlane.xlu0 %3147
      %v3149 = vadd.f32 %v3104, %v3105
      %3150 = vadd.xlane.f32.xlu0 %v3149
      %v3151 = vpop.xlane.xlu0 %3150
      %v3152 = vadd.f32 %v3106, %v3107
      %3153 = vadd.xlane.f32.xlu0 %v3152
      %v3154 = vpop.xlane.xlu0 %3153
      %v3155 = vadd.f32 %v3108, %v3109
      %3156 = vadd.xlane.f32.xlu0 %v3155
      %v3157 = vpop.xlane.xlu0 %3156
      %v3158 = vmul.f32 %v3112, %v3029
      %v3159 = vmul.f32 %v3115, %v3029
      %v3160 = vmul.f32 %v3118, %v3029
      %v3161 = vmul.f32 %v3121, %v3029
      %v3162 = vmul.f32 %v3124, %v3029
      %v3163 = vmul.f32 %v3127, %v3029
      %v3164 = vmul.f32 %v3130, %v3029
      %v3165 = vmul.f32 %v3133, %v3029
      %v3166 = vmul.f32 %v3136, %v3029
      %v3167 = vmul.f32 %v3139, %v3029
      %v3168 = vmul.f32 %v3142, %v3029
      %v3169 = vmul.f32 %v3145, %v3029
      %v3170 = vmul.f32 %v3148, %v3029
      %v3171 = vmul.f32 %v3151, %v3029
      %v3172 = vmul.f32 %v3154, %v3029
      %v3173 = vmul.f32 %v3157, %v3029
      %v3174 = vadd.f32 %v3158, 1e-05
      %v3175 = vadd.f32 %v3159, 1e-05
      %v3176 = vadd.f32 %v3160, 1e-05
      %v3177 = vadd.f32 %v3161, 1e-05
      %v3178 = vadd.f32 %v3162, 1e-05
      %v3179 = vadd.f32 %v3163, 1e-05
      %v3180 = vadd.f32 %v3164, 1e-05
      %v3181 = vadd.f32 %v3165, 1e-05
      %v3182 = vadd.f32 %v3166, 1e-05
      %v3183 = vadd.f32 %v3167, 1e-05
      %v3184 = vadd.f32 %v3168, 1e-05
      %v3185 = vadd.f32 %v3169, 1e-05
      %v3186 = vadd.f32 %v3170, 1e-05
      %v3187 = vadd.f32 %v3171, 1e-05
      %v3188 = vadd.f32 %v3172, 1e-05
      %v3189 = vadd.f32 %v3173, 1e-05
      %v3190 = vrsqrt.pop %v3174
      %v3191 = vrsqrt.pop %v3175
      %v3192 = vrsqrt.pop %v3176
      %v3193 = vrsqrt.pop %v3177
      %v3194 = vrsqrt.pop %v3178
      %v3195 = vrsqrt.pop %v3179
      %v3196 = vrsqrt.pop %v3180
      %v3197 = vrsqrt.pop %v3181
      %v3198 = vrsqrt.pop %v3182
      %v3199 = vrsqrt.pop %v3183
      %v3200 = vrsqrt.pop %v3184
      %v3201 = vrsqrt.pop %v3185
      %v3202 = vrsqrt.pop %v3186
      %v3203 = vrsqrt.pop %v3187
      %v3204 = vrsqrt.pop %v3188
      %v3205 = vrsqrt.pop %v3189
      %v3206 = vmul.f32 %v3046, %v3190
      %v3207 = vmul.f32 %v3047, %v3190
      %v3208 = vmul.f32 %v3048, %v3191
      %v3209 = vmul.f32 %v3049, %v3191
      %v3210 = vmul.f32 %v3050, %v3192
      %v3211 = vmul.f32 %v3051, %v3192
      %v3212 = vmul.f32 %v3052, %v3193
      %v3213 = vmul.f32 %v3053, %v3193
      %v3214 = vmul.f32 %v3054, %v3194
      %v3215 = vmul.f32 %v3055, %v3194
      %v3216 = vmul.f32 %v3056, %v3195
      %v3217 = vmul.f32 %v3057, %v3195
      %v3218 = vmul.f32 %v3058, %v3196
      %v3219 = vmul.f32 %v3059, %v3196
      %v3220 = vmul.f32 %v3060, %v3197
      %v3221 = vmul.f32 %v3061, %v3197
      %v3222 = vmul.f32 %v3062, %v3198
      %v3223 = vmul.f32 %v3063, %v3198
      %v3224 = vmul.f32 %v3064, %v3199
      %v3225 = vmul.f32 %v3065, %v3199
      %v3226 = vmul.f32 %v3066, %v3200
      %v3227 = vmul.f32 %v3067, %v3200
      %v3228 = vmul.f32 %v3068, %v3201
      %v3229 = vmul.f32 %v3069, %v3201
      %v3230 = vmul.f32 %v3070, %v3202
      %v3231 = vmul.f32 %v3071, %v3202
      %v3232 = vmul.f32 %v3072, %v3203
      %v3233 = vmul.f32 %v3073, %v3203
      %v3234 = vmul.f32 %v3074, %v3204
      %v3235 = vmul.f32 %v3075, %v3204
      %v3236 = vmul.f32 %v3076, %v3205
      %v3237 = vmul.f32 %v3077, %v3205
      %v3239 = vlaneseq
      %v3240 = vshrl.u32 %v3239, 7
      %v3241 = vsub.s32 0, %v3240
      %v3242 = vrot.slane %v2979, %v3241
      %v3243 = vlaneseq
      %v3244 = vshrl.u32 %v3243, 7
      %v3245 = vsub.s32 1, %v3244
      %v3246 = vrot.slane %v2979, %v3245
      %v3249 = vmul.f32 %v3206, %v3242
      %v3250 = vmul.f32 %v3207, %v3246
      %v3251 = vmul.f32 %v3208, %v3242
      %v3252 = vmul.f32 %v3209, %v3246
      %v3253 = vmul.f32 %v3210, %v3242
      %v3254 = vmul.f32 %v3211, %v3246
      %v3255 = vmul.f32 %v3212, %v3242
      %v3256 = vmul.f32 %v3213, %v3246
      %v3257 = vmul.f32 %v3214, %v3242
      %v3258 = vmul.f32 %v3215, %v3246
      %v3259 = vmul.f32 %v3216, %v3242
      %v3260 = vmul.f32 %v3217, %v3246
      %v3261 = vmul.f32 %v3218, %v3242
      %v3262 = vmul.f32 %v3219, %v3246
      %v3263 = vmul.f32 %v3220, %v3242
      %v3264 = vmul.f32 %v3221, %v3246
      %v3265 = vmul.f32 %v3222, %v3242
      %v3266 = vmul.f32 %v3223, %v3246
      %v3267 = vmul.f32 %v3224, %v3242
      %v3268 = vmul.f32 %v3225, %v3246
      %v3269 = vmul.f32 %v3226, %v3242
      %v3270 = vmul.f32 %v3227, %v3246
      %v3271 = vmul.f32 %v3228, %v3242
      %v3272 = vmul.f32 %v3229, %v3246
      %v3273 = vmul.f32 %v3230, %v3242
      %v3274 = vmul.f32 %v3231, %v3246
      %v3275 = vmul.f32 %v3232, %v3242
      %v3276 = vmul.f32 %v3233, %v3246
      %v3277 = vmul.f32 %v3234, %v3242
      %v3278 = vmul.f32 %v3235, %v3246
      %v3279 = vmul.f32 %v3236, %v3242
      %v3280 = vmul.f32 %v3237, %v3246
      %v3282 = vlaneseq
      %v3283 = vshrl.u32 %v3282, 7
      %v3284 = vsub.s32 0, %v3283
      %v3285 = vrot.slane %v2980, %v3284
      %v3286 = vlaneseq
      %v3287 = vshrl.u32 %v3286, 7
      %v3288 = vsub.s32 1, %v3287
      %v3289 = vrot.slane %v2980, %v3288
      %v3292 = vadd.f32 %v3249, %v3285
      %v3293 = vadd.f32 %v3250, %v3289
      %v3294 = vadd.f32 %v3251, %v3285
      %v3295 = vadd.f32 %v3252, %v3289
      %v3296 = vadd.f32 %v3253, %v3285
      %v3297 = vadd.f32 %v3254, %v3289
      %v3298 = vadd.f32 %v3255, %v3285
      %v3299 = vadd.f32 %v3256, %v3289
      %v3300 = vadd.f32 %v3257, %v3285
      %v3301 = vadd.f32 %v3258, %v3289
      %v3302 = vadd.f32 %v3259, %v3285
      %v3303 = vadd.f32 %v3260, %v3289
      %v3304 = vadd.f32 %v3261, %v3285
      %v3305 = vadd.f32 %v3262, %v3289
      %v3306 = vadd.f32 %v3263, %v3285
      %v3307 = vadd.f32 %v3264, %v3289
      %v3308 = vadd.f32 %v3265, %v3285
      %v3309 = vadd.f32 %v3266, %v3289
      %v3310 = vadd.f32 %v3267, %v3285
      %v3311 = vadd.f32 %v3268, %v3289
      %v3312 = vadd.f32 %v3269, %v3285
      %v3313 = vadd.f32 %v3270, %v3289
      %v3314 = vadd.f32 %v3271, %v3285
      %v3315 = vadd.f32 %v3272, %v3289
      %v3316 = vadd.f32 %v3273, %v3285
      %v3317 = vadd.f32 %v3274, %v3289
      %v3318 = vadd.f32 %v3275, %v3285
      %v3319 = vadd.f32 %v3276, %v3289
      %v3320 = vadd.f32 %v3277, %v3285
      %v3321 = vadd.f32 %v3278, %v3289
      %v3322 = vadd.f32 %v3279, %v3285
      %v3323 = vadd.f32 %v3280, %v3289
      %v3324 = vpack.c.bf16 %v3294, %v3292
      %v3325 = vpack.c.bf16 %v3295, %v3293
      %v3326 = vpack.c.bf16 %v3298, %v3296
      %v3327 = vpack.c.bf16 %v3299, %v3297
      %v3328 = vpack.c.bf16 %v3302, %v3300
      %v3329 = vpack.c.bf16 %v3303, %v3301
      %v3330 = vpack.c.bf16 %v3306, %v3304
      %v3331 = vpack.c.bf16 %v3307, %v3305
      %v3332 = vpack.c.bf16 %v3310, %v3308
      %v3333 = vpack.c.bf16 %v3311, %v3309
      %v3334 = vpack.c.bf16 %v3314, %v3312
      %v3335 = vpack.c.bf16 %v3315, %v3313
      %v3336 = vpack.c.bf16 %v3318, %v3316
      %v3337 = vpack.c.bf16 %v3319, %v3317
      %v3338 = vpack.c.bf16 %v3322, %v3320
      %v3339 = vpack.c.bf16 %v3323, %v3321
      %v3340 = vld [vmem:[%s709] sm:$0xff]
      %v3341 = vld [vmem:[%s709 + $0x8] sm:$0xff]
      %v3342 = vld [vmem:[%s709 + $0x10] sm:$0xff]
      %v3343 = vld [vmem:[%s709 + $0x18] sm:$0xff]
      %v3344 = vld [vmem:[%s709 + $0x20] sm:$0xff]
      %v3345 = vld [vmem:[%s709 + $0x28] sm:$0xff]
      %v3346 = vld [vmem:[%s709 + $0x30] sm:$0xff]
      %v3347 = vld [vmem:[%s709 + $0x38] sm:$0xff]
      %v3348 = vld [vmem:[%s709 + $0x40] sm:$0xff]
      %v3349 = vld [vmem:[%s709 + $0x48] sm:$0xff]
      %v3350 = vld [vmem:[%s709 + $0x50] sm:$0xff]
      %v3351 = vld [vmem:[%s709 + $0x58] sm:$0xff]
      %v3352 = vld [vmem:[%s709 + $0x60] sm:$0xff]
      %v3353 = vld [vmem:[%s709 + $0x68] sm:$0xff]
      %v3354 = vld [vmem:[%s709 + $0x70] sm:$0xff]
      %v3355 = vld [vmem:[%s709 + $0x78] sm:$0xff]
      %v3356 = vld [vmem:[%s709 + $0x80] sm:$0xff]
      %v3357 = vld [vmem:[%s709 + $0x88] sm:$0xff]
      %v3358 = vld [vmem:[%s709 + $0x90] sm:$0xff]
      %v3359 = vld [vmem:[%s709 + $0x98] sm:$0xff]
      %v3360 = vld [vmem:[%s709 + $0xa0] sm:$0xff]
      %v3361 = vld [vmem:[%s709 + $0xa8] sm:$0xff]
      %v3362 = vld [vmem:[%s709 + $0xb0] sm:$0xff]
      %v3363 = vld [vmem:[%s709 + $0xb8] sm:$0xff]
      %v3364 = vld [vmem:[%s709 + $0xc0] sm:$0xff]
      %v3365 = vld [vmem:[%s709 + $0xc8] sm:$0xff]
      %v3366 = vld [vmem:[%s709 + $0xd0] sm:$0xff]
      %v3367 = vld [vmem:[%s709 + $0xd8] sm:$0xff]
      %v3368 = vld [vmem:[%s709 + $0xe0] sm:$0xff]
      %v3369 = vld [vmem:[%s709 + $0xe8] sm:$0xff]
      %v3370 = vld [vmem:[%s709 + $0xf0] sm:$0xff]
      %v3371 = vld [vmem:[%s709 + $0xf8] sm:$0xff]
      %v3372 = vld [vmem:[%s709 + $0x100] sm:$0xff]
      %v3373 = vld [vmem:[%s709 + $0x108] sm:$0xff]
      %v3374 = vld [vmem:[%s709 + $0x110] sm:$0xff]
      %v3375 = vld [vmem:[%s709 + $0x118] sm:$0xff]
      %v3376 = vld [vmem:[%s709 + $0x120] sm:$0xff]
      %v3377 = vld [vmem:[%s709 + $0x128] sm:$0xff]
      %v3378 = vld [vmem:[%s709 + $0x130] sm:$0xff]
      %v3379 = vld [vmem:[%s709 + $0x138] sm:$0xff]
      %v3380 = vld [vmem:[%s709 + $0x140] sm:$0xff]
      %v3381 = vld [vmem:[%s709 + $0x148] sm:$0xff]
      %v3382 = vld [vmem:[%s709 + $0x150] sm:$0xff]
      %v3383 = vld [vmem:[%s709 + $0x158] sm:$0xff]
      %v3384 = vld [vmem:[%s709 + $0x160] sm:$0xff]
      %v3385 = vld [vmem:[%s709 + $0x168] sm:$0xff]
      %v3386 = vld [vmem:[%s709 + $0x170] sm:$0xff]
      %v3387 = vld [vmem:[%s709 + $0x178] sm:$0xff]
      %v3388 = vld [vmem:[%s709 + $0x180] sm:$0xff]
      %v3389 = vld [vmem:[%s709 + $0x188] sm:$0xff]
      %v3390 = vld [vmem:[%s709 + $0x190] sm:$0xff]
      %v3391 = vld [vmem:[%s709 + $0x198] sm:$0xff]
      %v3392 = vld [vmem:[%s709 + $0x1a0] sm:$0xff]
      %v3393 = vld [vmem:[%s709 + $0x1a8] sm:$0xff]
      %v3394 = vld [vmem:[%s709 + $0x1b0] sm:$0xff]
      %v3395 = vld [vmem:[%s709 + $0x1b8] sm:$0xff]
      %v3396 = vld [vmem:[%s709 + $0x1c0] sm:$0xff]
      %v3397 = vld [vmem:[%s709 + $0x1c8] sm:$0xff]
      %v3398 = vld [vmem:[%s709 + $0x1d0] sm:$0xff]
      %v3399 = vld [vmem:[%s709 + $0x1d8] sm:$0xff]
      %v3400 = vld [vmem:[%s709 + $0x1e0] sm:$0xff]
      %v3401 = vld [vmem:[%s709 + $0x1e8] sm:$0xff]
      %v3402 = vld [vmem:[%s709 + $0x1f0] sm:$0xff]
      %v3403 = vld [vmem:[%s709 + $0x1f8] sm:$0xff]
      %v3404 = vld [vmem:[%s713] sm:$0xf]
      %v3406 = vlaneseq
      %v3407 = vshrl.u32 %v3406, 7
      %v3408 = vsub.s32 0, %v3407
      %v3409 = vrot.slane %v3404, %v3408
      %v3410 = vlaneseq
      %v3411 = vshrl.u32 %v3410, 7
      %v3412 = vsub.s32 1, %v3411
      %v3413 = vrot.slane %v3404, %v3412
      %v3414 = vlaneseq
      %v3415 = vshrl.u32 %v3414, 7
      %v3416 = vsub.s32 2, %v3415
      %v3417 = vrot.slane %v3404, %v3416
      %v3418 = vlaneseq
      %v3419 = vshrl.u32 %v3418, 7
      %v3420 = vsub.s32 3, %v3419
      %v3421 = vrot.slane %v3404, %v3420
      %v3490 = vunpack.c.l.b16 %v3340
      %v3491 = vunpack.c.h.b16 %v3340
      %v3492 = vunpack.c.l.b16 %v3341
      %v3493 = vunpack.c.h.b16 %v3341
      %v3494 = vunpack.c.l.b16 %v3342
      %v3495 = vunpack.c.h.b16 %v3342
      %v3496 = vunpack.c.l.b16 %v3343
      %v3497 = vunpack.c.h.b16 %v3343
      %v3498 = vunpack.c.l.b16 %v3344
      %v3499 = vunpack.c.h.b16 %v3344
      %v3500 = vunpack.c.l.b16 %v3345
      %v3501 = vunpack.c.h.b16 %v3345
      %v3502 = vunpack.c.l.b16 %v3346
      %v3503 = vunpack.c.h.b16 %v3346
      %v3504 = vunpack.c.l.b16 %v3347
      %v3505 = vunpack.c.h.b16 %v3347
      %v3506 = vunpack.c.l.b16 %v3348
      %v3507 = vunpack.c.h.b16 %v3348
      %v3508 = vunpack.c.l.b16 %v3349
      %v3509 = vunpack.c.h.b16 %v3349
      %v3510 = vunpack.c.l.b16 %v3350
      %v3511 = vunpack.c.h.b16 %v3350
      %v3512 = vunpack.c.l.b16 %v3351
      %v3513 = vunpack.c.h.b16 %v3351
      %v3514 = vunpack.c.l.b16 %v3352
      %v3515 = vunpack.c.h.b16 %v3352
      %v3516 = vunpack.c.l.b16 %v3353
      %v3517 = vunpack.c.h.b16 %v3353
      %v3518 = vunpack.c.l.b16 %v3354
      %v3519 = vunpack.c.h.b16 %v3354
      %v3520 = vunpack.c.l.b16 %v3355
      %v3521 = vunpack.c.h.b16 %v3355
      %v3522 = vunpack.c.l.b16 %v3356
      %v3523 = vunpack.c.h.b16 %v3356
      %v3524 = vunpack.c.l.b16 %v3357
      %v3525 = vunpack.c.h.b16 %v3357
      %v3526 = vunpack.c.l.b16 %v3358
      %v3527 = vunpack.c.h.b16 %v3358
      %v3528 = vunpack.c.l.b16 %v3359
      %v3529 = vunpack.c.h.b16 %v3359
      %v3530 = vunpack.c.l.b16 %v3360
      %v3531 = vunpack.c.h.b16 %v3360
      %v3532 = vunpack.c.l.b16 %v3361
      %v3533 = vunpack.c.h.b16 %v3361
      %v3534 = vunpack.c.l.b16 %v3362
      %v3535 = vunpack.c.h.b16 %v3362
      %v3536 = vunpack.c.l.b16 %v3363
      %v3537 = vunpack.c.h.b16 %v3363
      %v3538 = vunpack.c.l.b16 %v3364
      %v3539 = vunpack.c.h.b16 %v3364
      %v3540 = vunpack.c.l.b16 %v3365
      %v3541 = vunpack.c.h.b16 %v3365
      %v3542 = vunpack.c.l.b16 %v3366
      %v3543 = vunpack.c.h.b16 %v3366
      %v3544 = vunpack.c.l.b16 %v3367
      %v3545 = vunpack.c.h.b16 %v3367
      %v3546 = vunpack.c.l.b16 %v3368
      %v3547 = vunpack.c.h.b16 %v3368
      %v3548 = vunpack.c.l.b16 %v3369
      %v3549 = vunpack.c.h.b16 %v3369
      %v3550 = vunpack.c.l.b16 %v3370
      %v3551 = vunpack.c.h.b16 %v3370
      %v3552 = vunpack.c.l.b16 %v3371
      %v3553 = vunpack.c.h.b16 %v3371
      %v3554 = vunpack.c.l.b16 %v3372
      %v3555 = vunpack.c.h.b16 %v3372
      %v3556 = vunpack.c.l.b16 %v3373
      %v3557 = vunpack.c.h.b16 %v3373
      %v3558 = vunpack.c.l.b16 %v3374
      %v3559 = vunpack.c.h.b16 %v3374
      %v3560 = vunpack.c.l.b16 %v3375
      %v3561 = vunpack.c.h.b16 %v3375
      %v3562 = vunpack.c.l.b16 %v3376
      %v3563 = vunpack.c.h.b16 %v3376
      %v3564 = vunpack.c.l.b16 %v3377
      %v3565 = vunpack.c.h.b16 %v3377
      %v3566 = vunpack.c.l.b16 %v3378
      %v3567 = vunpack.c.h.b16 %v3378
      %v3568 = vunpack.c.l.b16 %v3379
      %v3569 = vunpack.c.h.b16 %v3379
      %v3570 = vunpack.c.l.b16 %v3380
      %v3571 = vunpack.c.h.b16 %v3380
      %v3572 = vunpack.c.l.b16 %v3381
      %v3573 = vunpack.c.h.b16 %v3381
      %v3574 = vunpack.c.l.b16 %v3382
      %v3575 = vunpack.c.h.b16 %v3382
      %v3576 = vunpack.c.l.b16 %v3383
      %v3577 = vunpack.c.h.b16 %v3383
      %v3578 = vunpack.c.l.b16 %v3384
      %v3579 = vunpack.c.h.b16 %v3384
      %v3580 = vunpack.c.l.b16 %v3385
      %v3581 = vunpack.c.h.b16 %v3385
      %v3582 = vunpack.c.l.b16 %v3386
      %v3583 = vunpack.c.h.b16 %v3386
      %v3584 = vunpack.c.l.b16 %v3387
      %v3585 = vunpack.c.h.b16 %v3387
      %v3586 = vunpack.c.l.b16 %v3388
      %v3587 = vunpack.c.h.b16 %v3388
      %v3588 = vunpack.c.l.b16 %v3389
      %v3589 = vunpack.c.h.b16 %v3389
      %v3590 = vunpack.c.l.b16 %v3390
      %v3591 = vunpack.c.h.b16 %v3390
      %v3592 = vunpack.c.l.b16 %v3391
      %v3593 = vunpack.c.h.b16 %v3391
      %v3594 = vunpack.c.l.b16 %v3392
      %v3595 = vunpack.c.h.b16 %v3392
      %v3596 = vunpack.c.l.b16 %v3393
      %v3597 = vunpack.c.h.b16 %v3393
      %v3598 = vunpack.c.l.b16 %v3394
      %v3599 = vunpack.c.h.b16 %v3394
      %v3600 = vunpack.c.l.b16 %v3395
      %v3601 = vunpack.c.h.b16 %v3395
      %v3602 = vunpack.c.l.b16 %v3396
      %v3603 = vunpack.c.h.b16 %v3396
      %v3604 = vunpack.c.l.b16 %v3397
      %v3605 = vunpack.c.h.b16 %v3397
      %v3606 = vunpack.c.l.b16 %v3398
      %v3607 = vunpack.c.h.b16 %v3398
      %v3608 = vunpack.c.l.b16 %v3399
      %v3609 = vunpack.c.h.b16 %v3399
      %v3610 = vunpack.c.l.b16 %v3400
      %v3611 = vunpack.c.h.b16 %v3400
      %v3612 = vunpack.c.l.b16 %v3401
      %v3613 = vunpack.c.h.b16 %v3401
      %v3614 = vunpack.c.l.b16 %v3402
      %v3615 = vunpack.c.h.b16 %v3402
      %v3616 = vunpack.c.l.b16 %v3403
      %v3617 = vunpack.c.h.b16 %v3403
      %v3618 = vpack.c.b16 %v3494, %v3490
      %v3619 = vpack.c.b16 %v3495, %v3491
      %v3620 = vpack.c.b16 %v3496, %v3492
      %v3621 = vpack.c.b16 %v3497, %v3493
      %v3622 = vpack.c.b16 %v3502, %v3498
      %v3623 = vpack.c.b16 %v3503, %v3499
      %v3624 = vpack.c.b16 %v3504, %v3500
      %v3625 = vpack.c.b16 %v3505, %v3501
      %v3626 = vpack.c.b16 %v3510, %v3506
      %v3627 = vpack.c.b16 %v3511, %v3507
      %v3628 = vpack.c.b16 %v3512, %v3508
      %v3629 = vpack.c.b16 %v3513, %v3509
      %v3630 = vpack.c.b16 %v3518, %v3514
      %v3631 = vpack.c.b16 %v3519, %v3515
      %v3632 = vpack.c.b16 %v3520, %v3516
      %v3633 = vpack.c.b16 %v3521, %v3517
      %v3634 = vpack.c.b16 %v3526, %v3522
      %v3635 = vpack.c.b16 %v3527, %v3523
      %v3636 = vpack.c.b16 %v3528, %v3524
      %v3637 = vpack.c.b16 %v3529, %v3525
      %v3638 = vpack.c.b16 %v3534, %v3530
      %v3639 = vpack.c.b16 %v3535, %v3531
      %v3640 = vpack.c.b16 %v3536, %v3532
      %v3641 = vpack.c.b16 %v3537, %v3533
      %v3642 = vpack.c.b16 %v3542, %v3538
      %v3643 = vpack.c.b16 %v3543, %v3539
      %v3644 = vpack.c.b16 %v3544, %v3540
      %v3645 = vpack.c.b16 %v3545, %v3541
      %v3646 = vpack.c.b16 %v3550, %v3546
      %v3647 = vpack.c.b16 %v3551, %v3547
      %v3648 = vpack.c.b16 %v3552, %v3548
      %v3649 = vpack.c.b16 %v3553, %v3549
      %v3650 = vpack.c.b16 %v3558, %v3554
      %v3651 = vpack.c.b16 %v3559, %v3555
      %v3652 = vpack.c.b16 %v3560, %v3556
      %v3653 = vpack.c.b16 %v3561, %v3557
      %v3654 = vpack.c.b16 %v3566, %v3562
      %v3655 = vpack.c.b16 %v3567, %v3563
      %v3656 = vpack.c.b16 %v3568, %v3564
      %v3657 = vpack.c.b16 %v3569, %v3565
      %v3658 = vpack.c.b16 %v3574, %v3570
      %v3659 = vpack.c.b16 %v3575, %v3571
      %v3660 = vpack.c.b16 %v3576, %v3572
      %v3661 = vpack.c.b16 %v3577, %v3573
      %v3662 = vpack.c.b16 %v3582, %v3578
      %v3663 = vpack.c.b16 %v3583, %v3579
      %v3664 = vpack.c.b16 %v3584, %v3580
      %v3665 = vpack.c.b16 %v3585, %v3581
      %v3666 = vpack.c.b16 %v3590, %v3586
      %v3667 = vpack.c.b16 %v3591, %v3587
      %v3668 = vpack.c.b16 %v3592, %v3588
      %v3669 = vpack.c.b16 %v3593, %v3589
      %v3670 = vpack.c.b16 %v3598, %v3594
      %v3671 = vpack.c.b16 %v3599, %v3595
      %v3672 = vpack.c.b16 %v3600, %v3596
      %v3673 = vpack.c.b16 %v3601, %v3597
      %v3674 = vpack.c.b16 %v3606, %v3602
      %v3675 = vpack.c.b16 %v3607, %v3603
      %v3676 = vpack.c.b16 %v3608, %v3604
      %v3677 = vpack.c.b16 %v3609, %v3605
      %v3678 = vpack.c.b16 %v3614, %v3610
      %v3679 = vpack.c.b16 %v3615, %v3611
      %v3680 = vpack.c.b16 %v3616, %v3612
      %v3681 = vpack.c.b16 %v3617, %v3613
      %3746 = vmatprep.subr.bf16.mxu0 %v3647
      %3747 = vmatpush1.bf16.msra.mxu0 %v3646
      %3748 = vmatprep.subr.bf16.mxu0 %v3643
      %3749 = vmatpush1.bf16.msra.mxu0 %v3642
      %3750 = vmatprep.subr.bf16.mxu0 %v3639
      %3751 = vmatpush1.bf16.msra.mxu0 %v3638
      %3752 = vmatprep.subr.bf16.mxu0 %v3635
      %3753 = vmatpush1.bf16.msra.mxu0 %v3634
      %3754 = vmatprep.subr.bf16.mxu0 %v3631
      %3755 = vmatpush1.bf16.msra.mxu0 %v3630
      %3756 = vmatprep.subr.bf16.mxu0 %v3627
      %3757 = vmatpush1.bf16.msra.mxu0 %v3626
      %3758 = vmatprep.subr.bf16.mxu0 %v3623
      %3759 = vmatpush1.bf16.msra.mxu0 %v3622
      %3760 = vmatprep.subr.bf16.mxu0 %v3619
      %3761 = vmatpush1.bf16.msra.mxu0 %v3618
      %3762 = vmatprep.subr.bf16.mxu0 %v3679
      %3763 = vmatpush2.bf16.msra.mxu0 %v3678
      %3764 = vmatprep.subr.bf16.mxu0 %v3675
      %3765 = vmatpush2.bf16.msra.mxu0 %v3674
      %3766 = vmatprep.subr.bf16.mxu0 %v3671
      %3767 = vmatpush2.bf16.msra.mxu0 %v3670
      %3768 = vmatprep.subr.bf16.mxu0 %v3667
      %3769 = vmatpush2.bf16.msra.mxu0 %v3666
      %3770 = vmatprep.subr.bf16.mxu0 %v3663
      %3771 = vmatpush2.bf16.msra.mxu0 %v3662
      %3772 = vmatprep.subr.bf16.mxu0 %v3659
      %3773 = vmatpush2.bf16.msra.mxu0 %v3658
      %3774 = vmatprep.subr.bf16.mxu0 %v3655
      %3775 = vmatpush2.bf16.msra.mxu0 %v3654
      %3776 = vmatprep.subr.bf16.mxu0 %v3651
      %3777 = vmatpush2.bf16.msra.mxu0 %v3650
      %3778 = vmatprep.mubr.bf16.mxu0 %v3325
      %3779 = vmatmul.mubr.bf16.gmra.mxu0 %v3324
      %v3780 = vpop.f32.mrf.mxu0
      %v3781 = vadd.f32 %v3409, %v3780
      %v3782 = vpop.f32.mrf.mxu0
      %v3783 = vadd.f32 %v3413, %v3782
      %v3784 = vpop.f32.mrf.mxu0
      %v3785 = vadd.f32 %v3409, %v3784
      %v3786 = vpop.f32.mrf.mxu0
      %v3787 = vadd.f32 %v3413, %v3786
      %3788 = vmatprep.mubr.bf16.mxu0 %v3327
      %3789 = vmatmul.mubr.bf16.gmra.mxu0 %v3326
      %v3790 = vpop.f32.mrf.mxu0
      %v3791 = vadd.f32 %v3409, %v3790
      %v3792 = vpop.f32.mrf.mxu0
      %v3793 = vadd.f32 %v3413, %v3792
      %v3794 = vpop.f32.mrf.mxu0
      %v3795 = vadd.f32 %v3409, %v3794
      %v3796 = vpop.f32.mrf.mxu0
      %v3797 = vadd.f32 %v3413, %v3796
      %3798 = vmatprep.mubr.bf16.mxu0 %v3329
      %3799 = vmatmul.mubr.bf16.gmra.mxu0 %v3328
      %v3800 = vpop.f32.mrf.mxu0
      %v3801 = vadd.f32 %v3409, %v3800
      %v3802 = vpop.f32.mrf.mxu0
      %v3803 = vadd.f32 %v3413, %v3802
      %v3804 = vpop.f32.mrf.mxu0
      %v3805 = vadd.f32 %v3409, %v3804
      %v3806 = vpop.f32.mrf.mxu0
      %v3807 = vadd.f32 %v3413, %v3806
      %3808 = vmatprep.mubr.bf16.mxu0 %v3331
      %3809 = vmatmul.mubr.bf16.gmra.mxu0 %v3330
      %v3810 = vpop.f32.mrf.mxu0
      %v3811 = vadd.f32 %v3409, %v3810
      %v3812 = vpop.f32.mrf.mxu0
      %v3813 = vadd.f32 %v3413, %v3812
      %v3814 = vpop.f32.mrf.mxu0
      %v3815 = vadd.f32 %v3409, %v3814
      %v3816 = vpop.f32.mrf.mxu0
      %v3817 = vadd.f32 %v3413, %v3816
      %3818 = vmatprep.mubr.bf16.mxu0 %v3333
      %3819 = vmatmul.mubr.bf16.gmra.mxu0 %v3332
      %v3820 = vpop.f32.mrf.mxu0
      %v3821 = vadd.f32 %v3409, %v3820
      %v3822 = vpop.f32.mrf.mxu0
      %v3823 = vadd.f32 %v3413, %v3822
      %v3824 = vpop.f32.mrf.mxu0
      %v3825 = vadd.f32 %v3409, %v3824
      %v3826 = vpop.f32.mrf.mxu0
      %v3827 = vadd.f32 %v3413, %v3826
      %3828 = vmatprep.mubr.bf16.mxu0 %v3335
      %3829 = vmatmul.mubr.bf16.gmra.mxu0 %v3334
      %v3830 = vpop.f32.mrf.mxu0
      %v3831 = vadd.f32 %v3409, %v3830
      %v3832 = vpop.f32.mrf.mxu0
      %v3833 = vadd.f32 %v3413, %v3832
      %v3834 = vpop.f32.mrf.mxu0
      %v3835 = vadd.f32 %v3409, %v3834
      %v3836 = vpop.f32.mrf.mxu0
      %v3837 = vadd.f32 %v3413, %v3836
      %3838 = vmatprep.mubr.bf16.mxu0 %v3337
      %3839 = vmatmul.mubr.bf16.gmra.mxu0 %v3336
      %v3840 = vpop.f32.mrf.mxu0
      %v3841 = vadd.f32 %v3409, %v3840
      %v3842 = vpop.f32.mrf.mxu0
      %v3843 = vadd.f32 %v3413, %v3842
      %v3844 = vpop.f32.mrf.mxu0
      %v3845 = vadd.f32 %v3409, %v3844
      %v3846 = vpop.f32.mrf.mxu0
      %v3847 = vadd.f32 %v3413, %v3846
      %3848 = vmatprep.mubr.bf16.mxu0 %v3339
      %3849 = vmatmul.mubr.bf16.gmra.mxu0 %v3338
      %v3850 = vpop.f32.mrf.mxu0
      %v3851 = vadd.f32 %v3409, %v3850
      %v3852 = vpop.f32.mrf.mxu0
      %v3853 = vadd.f32 %v3413, %v3852
      %v3854 = vpop.f32.mrf.mxu0
      %v3855 = vadd.f32 %v3409, %v3854
      %v3856 = vpop.f32.mrf.mxu0
      %v3857 = vadd.f32 %v3413, %v3856
      %3858 = vdwg.mxu0
      %3859 = vmatprep.subr.bf16.mxu0 %v3649
      %3860 = vmatpush1.bf16.msra.mxu0 %v3648
      %3861 = vmatprep.subr.bf16.mxu0 %v3645
      %3862 = vmatpush1.bf16.msra.mxu0 %v3644
      %3863 = vmatprep.subr.bf16.mxu0 %v3641
      %3864 = vmatpush1.bf16.msra.mxu0 %v3640
      %3865 = vmatprep.subr.bf16.mxu0 %v3637
      %3866 = vmatpush1.bf16.msra.mxu0 %v3636
      %3867 = vmatprep.subr.bf16.mxu0 %v3633
      %3868 = vmatpush1.bf16.msra.mxu0 %v3632
      %3869 = vmatprep.subr.bf16.mxu0 %v3629
      %3870 = vmatpush1.bf16.msra.mxu0 %v3628
      %3871 = vmatprep.subr.bf16.mxu0 %v3625
      %3872 = vmatpush1.bf16.msra.mxu0 %v3624
      %3873 = vmatprep.subr.bf16.mxu0 %v3621
      %3874 = vmatpush1.bf16.msra.mxu0 %v3620
      %3875 = vmatprep.subr.bf16.mxu0 %v3681
      %3876 = vmatpush2.bf16.msra.mxu0 %v3680
      %3877 = vmatprep.subr.bf16.mxu0 %v3677
      %3878 = vmatpush2.bf16.msra.mxu0 %v3676
      %3879 = vmatprep.subr.bf16.mxu0 %v3673
      %3880 = vmatpush2.bf16.msra.mxu0 %v3672
      %3881 = vmatprep.subr.bf16.mxu0 %v3669
      %3882 = vmatpush2.bf16.msra.mxu0 %v3668
      %3883 = vmatprep.subr.bf16.mxu0 %v3665
      %3884 = vmatpush2.bf16.msra.mxu0 %v3664
      %3885 = vmatprep.subr.bf16.mxu0 %v3661
      %3886 = vmatpush2.bf16.msra.mxu0 %v3660
      %3887 = vmatprep.subr.bf16.mxu0 %v3657
      %3888 = vmatpush2.bf16.msra.mxu0 %v3656
      %3889 = vmatprep.subr.bf16.mxu0 %v3653
      %3890 = vmatpush2.bf16.msra.mxu0 %v3652
      %3891 = vmatprep.mubr.bf16.mxu0 %v3325
      %3892 = vmatmul.mubr.bf16.gmra.mxu0 %v3324
      %v3893 = vpop.f32.mrf.mxu0
      %v3894 = vadd.f32 %v3417, %v3893
      %v3895 = vpop.f32.mrf.mxu0
      %v3896 = vadd.f32 %v3421, %v3895
      %v3897 = vpop.f32.mrf.mxu0
      %v3898 = vadd.f32 %v3417, %v3897
      %v3899 = vpop.f32.mrf.mxu0
      %v3900 = vadd.f32 %v3421, %v3899
      %3901 = vmatprep.mubr.bf16.mxu0 %v3327
      %3902 = vmatmul.mubr.bf16.gmra.mxu0 %v3326
      %v3903 = vpop.f32.mrf.mxu0
      %v3904 = vadd.f32 %v3417, %v3903
      %v3905 = vpop.f32.mrf.mxu0
      %v3906 = vadd.f32 %v3421, %v3905
      %v3907 = vpop.f32.mrf.mxu0
      %v3908 = vadd.f32 %v3417, %v3907
      %v3909 = vpop.f32.mrf.mxu0
      %v3910 = vadd.f32 %v3421, %v3909
      %3911 = vmatprep.mubr.bf16.mxu0 %v3329
      %3912 = vmatmul.mubr.bf16.gmra.mxu0 %v3328
      %v3913 = vpop.f32.mrf.mxu0
      %v3914 = vadd.f32 %v3417, %v3913
      %v3915 = vpop.f32.mrf.mxu0
      %v3916 = vadd.f32 %v3421, %v3915
      %v3917 = vpop.f32.mrf.mxu0
      %v3918 = vadd.f32 %v3417, %v3917
      %v3919 = vpop.f32.mrf.mxu0
      %v3920 = vadd.f32 %v3421, %v3919
      %3921 = vmatprep.mubr.bf16.mxu0 %v3331
      %3922 = vmatmul.mubr.bf16.gmra.mxu0 %v3330
      %v3923 = vpop.f32.mrf.mxu0
      %v3924 = vadd.f32 %v3417, %v3923
      %v3925 = vpop.f32.mrf.mxu0
      %v3926 = vadd.f32 %v3421, %v3925
      %v3927 = vpop.f32.mrf.mxu0
      %v3928 = vadd.f32 %v3417, %v3927
      %v3929 = vpop.f32.mrf.mxu0
      %v3930 = vadd.f32 %v3421, %v3929
      %3931 = vmatprep.mubr.bf16.mxu0 %v3333
      %3932 = vmatmul.mubr.bf16.gmra.mxu0 %v3332
      %v3933 = vpop.f32.mrf.mxu0
      %v3934 = vadd.f32 %v3417, %v3933
      %v3935 = vpop.f32.mrf.mxu0
      %v3936 = vadd.f32 %v3421, %v3935
      %v3937 = vpop.f32.mrf.mxu0
      %v3938 = vadd.f32 %v3417, %v3937
      %v3939 = vpop.f32.mrf.mxu0
      %v3940 = vadd.f32 %v3421, %v3939
      %3941 = vmatprep.mubr.bf16.mxu0 %v3335
      %3942 = vmatmul.mubr.bf16.gmra.mxu0 %v3334
      %v3943 = vpop.f32.mrf.mxu0
      %v3944 = vadd.f32 %v3417, %v3943
      %v3945 = vpop.f32.mrf.mxu0
      %v3946 = vadd.f32 %v3421, %v3945
      %v3947 = vpop.f32.mrf.mxu0
      %v3948 = vadd.f32 %v3417, %v3947
      %v3949 = vpop.f32.mrf.mxu0
      %v3950 = vadd.f32 %v3421, %v3949
      %3951 = vmatprep.mubr.bf16.mxu0 %v3337
      %3952 = vmatmul.mubr.bf16.gmra.mxu0 %v3336
      %v3953 = vpop.f32.mrf.mxu0
      %v3954 = vadd.f32 %v3417, %v3953
      %v3955 = vpop.f32.mrf.mxu0
      %v3956 = vadd.f32 %v3421, %v3955
      %v3957 = vpop.f32.mrf.mxu0
      %v3958 = vadd.f32 %v3417, %v3957
      %v3959 = vpop.f32.mrf.mxu0
      %v3960 = vadd.f32 %v3421, %v3959
      %3961 = vmatprep.mubr.bf16.mxu0 %v3339
      %3962 = vmatmul.mubr.bf16.gmra.mxu0 %v3338
      %v3963 = vpop.f32.mrf.mxu0
      %v3964 = vadd.f32 %v3417, %v3963
      %v3965 = vpop.f32.mrf.mxu0
      %v3966 = vadd.f32 %v3421, %v3965
      %v3967 = vpop.f32.mrf.mxu0
      %v3968 = vadd.f32 %v3417, %v3967
      %v3969 = vpop.f32.mrf.mxu0
      %v3970 = vadd.f32 %v3421, %v3969
      %3971 = vdwg.mxu0
      %v3972 = vmax.f32 %v3781, 0.0
      %v3973 = vmax.f32 %v3783, 0.0
      %v3974 = vmax.f32 %v3894, 0.0
      %v3975 = vmax.f32 %v3896, 0.0
      %v3976 = vmax.f32 %v3785, 0.0
      %v3977 = vmax.f32 %v3787, 0.0
      %v3978 = vmax.f32 %v3898, 0.0
      %v3979 = vmax.f32 %v3900, 0.0
      %v3980 = vmax.f32 %v3791, 0.0
      %v3981 = vmax.f32 %v3793, 0.0
      %v3982 = vmax.f32 %v3904, 0.0
      %v3983 = vmax.f32 %v3906, 0.0
      %v3984 = vmax.f32 %v3795, 0.0
      %v3985 = vmax.f32 %v3797, 0.0
      %v3986 = vmax.f32 %v3908, 0.0
      %v3987 = vmax.f32 %v3910, 0.0
      %v3988 = vmax.f32 %v3801, 0.0
      %v3989 = vmax.f32 %v3803, 0.0
      %v3990 = vmax.f32 %v3914, 0.0
      %v3991 = vmax.f32 %v3916, 0.0
      %v3992 = vmax.f32 %v3805, 0.0
      %v3993 = vmax.f32 %v3807, 0.0
      %v3994 = vmax.f32 %v3918, 0.0
      %v3995 = vmax.f32 %v3920, 0.0
      %v3996 = vmax.f32 %v3811, 0.0
      %v3997 = vmax.f32 %v3813, 0.0
      %v3998 = vmax.f32 %v3924, 0.0
      %v3999 = vmax.f32 %v3926, 0.0
      %v4000 = vmax.f32 %v3815, 0.0
      %v4001 = vmax.f32 %v3817, 0.0
      %v4002 = vmax.f32 %v3928, 0.0
      %v4003 = vmax.f32 %v3930, 0.0
      %v4004 = vmax.f32 %v3821, 0.0
      %v4005 = vmax.f32 %v3823, 0.0
      %v4006 = vmax.f32 %v3934, 0.0
      %v4007 = vmax.f32 %v3936, 0.0
      %v4008 = vmax.f32 %v3825, 0.0
      %v4009 = vmax.f32 %v3827, 0.0
      %v4010 = vmax.f32 %v3938, 0.0
      %v4011 = vmax.f32 %v3940, 0.0
      %v4012 = vmax.f32 %v3831, 0.0
      %v4013 = vmax.f32 %v3833, 0.0
      %v4014 = vmax.f32 %v3944, 0.0
      %v4015 = vmax.f32 %v3946, 0.0
      %v4016 = vmax.f32 %v3835, 0.0
      %v4017 = vmax.f32 %v3837, 0.0
      %v4018 = vmax.f32 %v3948, 0.0
      %v4019 = vmax.f32 %v3950, 0.0
      %v4020 = vmax.f32 %v3841, 0.0
      %v4021 = vmax.f32 %v3843, 0.0
      %v4022 = vmax.f32 %v3954, 0.0
      %v4023 = vmax.f32 %v3956, 0.0
      %v4024 = vmax.f32 %v3845, 0.0
      %v4025 = vmax.f32 %v3847, 0.0
      %v4026 = vmax.f32 %v3958, 0.0
      %v4027 = vmax.f32 %v3960, 0.0
      %v4028 = vmax.f32 %v3851, 0.0
      %v4029 = vmax.f32 %v3853, 0.0
      %v4030 = vmax.f32 %v3964, 0.0
      %v4031 = vmax.f32 %v3966, 0.0
      %v4032 = vmax.f32 %v3855, 0.0
      %v4033 = vmax.f32 %v3857, 0.0
      %v4034 = vmax.f32 %v3968, 0.0
      %v4035 = vmax.f32 %v3970, 0.0
      %v4036 = vpack.c.bf16 %v3976, %v3972
      %v4037 = vpack.c.bf16 %v3977, %v3973
      %v4038 = vpack.c.bf16 %v3978, %v3974
      %v4039 = vpack.c.bf16 %v3979, %v3975
      %v4040 = vpack.c.bf16 %v3984, %v3980
      %v4041 = vpack.c.bf16 %v3985, %v3981
      %v4042 = vpack.c.bf16 %v3986, %v3982
      %v4043 = vpack.c.bf16 %v3987, %v3983
      %v4044 = vpack.c.bf16 %v3992, %v3988
      %v4045 = vpack.c.bf16 %v3993, %v3989
      %v4046 = vpack.c.bf16 %v3994, %v3990
      %v4047 = vpack.c.bf16 %v3995, %v3991
      %v4048 = vpack.c.bf16 %v4000, %v3996
      %v4049 = vpack.c.bf16 %v4001, %v3997
      %v4050 = vpack.c.bf16 %v4002, %v3998
      %v4051 = vpack.c.bf16 %v4003, %v3999
      %v4052 = vpack.c.bf16 %v4008, %v4004
      %v4053 = vpack.c.bf16 %v4009, %v4005
      %v4054 = vpack.c.bf16 %v4010, %v4006
      %v4055 = vpack.c.bf16 %v4011, %v4007
      %v4056 = vpack.c.bf16 %v4016, %v4012
      %v4057 = vpack.c.bf16 %v4017, %v4013
      %v4058 = vpack.c.bf16 %v4018, %v4014
      %v4059 = vpack.c.bf16 %v4019, %v4015
      %v4060 = vpack.c.bf16 %v4024, %v4020
      %v4061 = vpack.c.bf16 %v4025, %v4021
      %v4062 = vpack.c.bf16 %v4026, %v4022
      %v4063 = vpack.c.bf16 %v4027, %v4023
      %v4064 = vpack.c.bf16 %v4032, %v4028
      %v4065 = vpack.c.bf16 %v4033, %v4029
      %v4066 = vpack.c.bf16 %v4034, %v4030
      %v4067 = vpack.c.bf16 %v4035, %v4031
      %v4068 = vld [vmem:[%s718] sm:$0xff]
      %v4069 = vld [vmem:[%s718 + $0x8] sm:$0xff]
      %v4070 = vld [vmem:[%s718 + $0x10] sm:$0xff]
      %v4071 = vld [vmem:[%s718 + $0x18] sm:$0xff]
      %v4072 = vld [vmem:[%s718 + $0x20] sm:$0xff]
      %v4073 = vld [vmem:[%s718 + $0x28] sm:$0xff]
      %v4074 = vld [vmem:[%s718 + $0x30] sm:$0xff]
      %v4075 = vld [vmem:[%s718 + $0x38] sm:$0xff]
      %v4076 = vld [vmem:[%s718 + $0x40] sm:$0xff]
      %v4077 = vld [vmem:[%s718 + $0x48] sm:$0xff]
      %v4078 = vld [vmem:[%s718 + $0x50] sm:$0xff]
      %v4079 = vld [vmem:[%s718 + $0x58] sm:$0xff]
      %v4080 = vld [vmem:[%s718 + $0x60] sm:$0xff]
      %v4081 = vld [vmem:[%s718 + $0x68] sm:$0xff]
      %v4082 = vld [vmem:[%s718 + $0x70] sm:$0xff]
      %v4083 = vld [vmem:[%s718 + $0x78] sm:$0xff]
      %v4084 = vld [vmem:[%s718 + $0x80] sm:$0xff]
      %v4085 = vld [vmem:[%s718 + $0x88] sm:$0xff]
      %v4086 = vld [vmem:[%s718 + $0x90] sm:$0xff]
      %v4087 = vld [vmem:[%s718 + $0x98] sm:$0xff]
      %v4088 = vld [vmem:[%s718 + $0xa0] sm:$0xff]
      %v4089 = vld [vmem:[%s718 + $0xa8] sm:$0xff]
      %v4090 = vld [vmem:[%s718 + $0xb0] sm:$0xff]
      %v4091 = vld [vmem:[%s718 + $0xb8] sm:$0xff]
      %v4092 = vld [vmem:[%s718 + $0xc0] sm:$0xff]
      %v4093 = vld [vmem:[%s718 + $0xc8] sm:$0xff]
      %v4094 = vld [vmem:[%s718 + $0xd0] sm:$0xff]
      %v4095 = vld [vmem:[%s718 + $0xd8] sm:$0xff]
      %v4096 = vld [vmem:[%s718 + $0xe0] sm:$0xff]
      %v4097 = vld [vmem:[%s718 + $0xe8] sm:$0xff]
      %v4098 = vld [vmem:[%s718 + $0xf0] sm:$0xff]
      %v4099 = vld [vmem:[%s718 + $0xf8] sm:$0xff]
      %v4100 = vld [vmem:[%s718 + $0x100] sm:$0xff]
      %v4101 = vld [vmem:[%s718 + $0x108] sm:$0xff]
      %v4102 = vld [vmem:[%s718 + $0x110] sm:$0xff]
      %v4103 = vld [vmem:[%s718 + $0x118] sm:$0xff]
      %v4104 = vld [vmem:[%s718 + $0x120] sm:$0xff]
      %v4105 = vld [vmem:[%s718 + $0x128] sm:$0xff]
      %v4106 = vld [vmem:[%s718 + $0x130] sm:$0xff]
      %v4107 = vld [vmem:[%s718 + $0x138] sm:$0xff]
      %v4108 = vld [vmem:[%s718 + $0x140] sm:$0xff]
      %v4109 = vld [vmem:[%s718 + $0x148] sm:$0xff]
      %v4110 = vld [vmem:[%s718 + $0x150] sm:$0xff]
      %v4111 = vld [vmem:[%s718 + $0x158] sm:$0xff]
      %v4112 = vld [vmem:[%s718 + $0x160] sm:$0xff]
      %v4113 = vld [vmem:[%s718 + $0x168] sm:$0xff]
      %v4114 = vld [vmem:[%s718 + $0x170] sm:$0xff]
      %v4115 = vld [vmem:[%s718 + $0x178] sm:$0xff]
      %v4116 = vld [vmem:[%s718 + $0x180] sm:$0xff]
      %v4117 = vld [vmem:[%s718 + $0x188] sm:$0xff]
      %v4118 = vld [vmem:[%s718 + $0x190] sm:$0xff]
      %v4119 = vld [vmem:[%s718 + $0x198] sm:$0xff]
      %v4120 = vld [vmem:[%s718 + $0x1a0] sm:$0xff]
      %v4121 = vld [vmem:[%s718 + $0x1a8] sm:$0xff]
      %v4122 = vld [vmem:[%s718 + $0x1b0] sm:$0xff]
      %v4123 = vld [vmem:[%s718 + $0x1b8] sm:$0xff]
      %v4124 = vld [vmem:[%s718 + $0x1c0] sm:$0xff]
      %v4125 = vld [vmem:[%s718 + $0x1c8] sm:$0xff]
      %v4126 = vld [vmem:[%s718 + $0x1d0] sm:$0xff]
      %v4127 = vld [vmem:[%s718 + $0x1d8] sm:$0xff]
      %v4128 = vld [vmem:[%s718 + $0x1e0] sm:$0xff]
      %v4129 = vld [vmem:[%s718 + $0x1e8] sm:$0xff]
      %v4130 = vld [vmem:[%s718 + $0x1f0] sm:$0xff]
      %v4131 = vld [vmem:[%s718 + $0x1f8] sm:$0xff]
      %v4132 = vld [vmem:[%s722] sm:$0x3]
      %v4134 = vlaneseq
      %v4135 = vshrl.u32 %v4134, 7
      %v4136 = vsub.s32 0, %v4135
      %v4137 = vrot.slane %v4132, %v4136
      %v4138 = vlaneseq
      %v4139 = vshrl.u32 %v4138, 7
      %v4140 = vsub.s32 1, %v4139
      %v4141 = vrot.slane %v4132, %v4140
      %v4208 = vunpack.c.l.b16 %v4068
      %v4209 = vunpack.c.h.b16 %v4068
      %v4210 = vunpack.c.l.b16 %v4069
      %v4211 = vunpack.c.h.b16 %v4069
      %v4212 = vunpack.c.l.b16 %v4070
      %v4213 = vunpack.c.h.b16 %v4070
      %v4214 = vunpack.c.l.b16 %v4071
      %v4215 = vunpack.c.h.b16 %v4071
      %v4216 = vunpack.c.l.b16 %v4072
      %v4217 = vunpack.c.h.b16 %v4072
      %v4218 = vunpack.c.l.b16 %v4073
      %v4219 = vunpack.c.h.b16 %v4073
      %v4220 = vunpack.c.l.b16 %v4074
      %v4221 = vunpack.c.h.b16 %v4074
      %v4222 = vunpack.c.l.b16 %v4075
      %v4223 = vunpack.c.h.b16 %v4075
      %v4224 = vunpack.c.l.b16 %v4076
      %v4225 = vunpack.c.h.b16 %v4076
      %v4226 = vunpack.c.l.b16 %v4077
      %v4227 = vunpack.c.h.b16 %v4077
      %v4228 = vunpack.c.l.b16 %v4078
      %v4229 = vunpack.c.h.b16 %v4078
      %v4230 = vunpack.c.l.b16 %v4079
      %v4231 = vunpack.c.h.b16 %v4079
      %v4232 = vunpack.c.l.b16 %v4080
      %v4233 = vunpack.c.h.b16 %v4080
      %v4234 = vunpack.c.l.b16 %v4081
      %v4235 = vunpack.c.h.b16 %v4081
      %v4236 = vunpack.c.l.b16 %v4082
      %v4237 = vunpack.c.h.b16 %v4082
      %v4238 = vunpack.c.l.b16 %v4083
      %v4239 = vunpack.c.h.b16 %v4083
      %v4240 = vunpack.c.l.b16 %v4084
      %v4241 = vunpack.c.h.b16 %v4084
      %v4242 = vunpack.c.l.b16 %v4085
      %v4243 = vunpack.c.h.b16 %v4085
      %v4244 = vunpack.c.l.b16 %v4086
      %v4245 = vunpack.c.h.b16 %v4086
      %v4246 = vunpack.c.l.b16 %v4087
      %v4247 = vunpack.c.h.b16 %v4087
      %v4248 = vunpack.c.l.b16 %v4088
      %v4249 = vunpack.c.h.b16 %v4088
      %v4250 = vunpack.c.l.b16 %v4089
      %v4251 = vunpack.c.h.b16 %v4089
      %v4252 = vunpack.c.l.b16 %v4090
      %v4253 = vunpack.c.h.b16 %v4090
      %v4254 = vunpack.c.l.b16 %v4091
      %v4255 = vunpack.c.h.b16 %v4091
      %v4256 = vunpack.c.l.b16 %v4092
      %v4257 = vunpack.c.h.b16 %v4092
      %v4258 = vunpack.c.l.b16 %v4093
      %v4259 = vunpack.c.h.b16 %v4093
      %v4260 = vunpack.c.l.b16 %v4094
      %v4261 = vunpack.c.h.b16 %v4094
      %v4262 = vunpack.c.l.b16 %v4095
      %v4263 = vunpack.c.h.b16 %v4095
      %v4264 = vunpack.c.l.b16 %v4096
      %v4265 = vunpack.c.h.b16 %v4096
      %v4266 = vunpack.c.l.b16 %v4097
      %v4267 = vunpack.c.h.b16 %v4097
      %v4268 = vunpack.c.l.b16 %v4098
      %v4269 = vunpack.c.h.b16 %v4098
      %v4270 = vunpack.c.l.b16 %v4099
      %v4271 = vunpack.c.h.b16 %v4099
      %v4272 = vunpack.c.l.b16 %v4100
      %v4273 = vunpack.c.h.b16 %v4100
      %v4274 = vunpack.c.l.b16 %v4101
      %v4275 = vunpack.c.h.b16 %v4101
      %v4276 = vunpack.c.l.b16 %v4102
      %v4277 = vunpack.c.h.b16 %v4102
      %v4278 = vunpack.c.l.b16 %v4103
      %v4279 = vunpack.c.h.b16 %v4103
      %v4280 = vunpack.c.l.b16 %v4104
      %v4281 = vunpack.c.h.b16 %v4104
      %v4282 = vunpack.c.l.b16 %v4105
      %v4283 = vunpack.c.h.b16 %v4105
      %v4284 = vunpack.c.l.b16 %v4106
      %v4285 = vunpack.c.h.b16 %v4106
      %v4286 = vunpack.c.l.b16 %v4107
      %v4287 = vunpack.c.h.b16 %v4107
      %v4288 = vunpack.c.l.b16 %v4108
      %v4289 = vunpack.c.h.b16 %v4108
      %v4290 = vunpack.c.l.b16 %v4109
      %v4291 = vunpack.c.h.b16 %v4109
      %v4292 = vunpack.c.l.b16 %v4110
      %v4293 = vunpack.c.h.b16 %v4110
      %v4294 = vunpack.c.l.b16 %v4111
      %v4295 = vunpack.c.h.b16 %v4111
      %v4296 = vunpack.c.l.b16 %v4112
      %v4297 = vunpack.c.h.b16 %v4112
      %v4298 = vunpack.c.l.b16 %v4113
      %v4299 = vunpack.c.h.b16 %v4113
      %v4300 = vunpack.c.l.b16 %v4114
      %v4301 = vunpack.c.h.b16 %v4114
      %v4302 = vunpack.c.l.b16 %v4115
      %v4303 = vunpack.c.h.b16 %v4115
      %v4304 = vunpack.c.l.b16 %v4116
      %v4305 = vunpack.c.h.b16 %v4116
      %v4306 = vunpack.c.l.b16 %v4117
      %v4307 = vunpack.c.h.b16 %v4117
      %v4308 = vunpack.c.l.b16 %v4118
      %v4309 = vunpack.c.h.b16 %v4118
      %v4310 = vunpack.c.l.b16 %v4119
      %v4311 = vunpack.c.h.b16 %v4119
      %v4312 = vunpack.c.l.b16 %v4120
      %v4313 = vunpack.c.h.b16 %v4120
      %v4314 = vunpack.c.l.b16 %v4121
      %v4315 = vunpack.c.h.b16 %v4121
      %v4316 = vunpack.c.l.b16 %v4122
      %v4317 = vunpack.c.h.b16 %v4122
      %v4318 = vunpack.c.l.b16 %v4123
      %v4319 = vunpack.c.h.b16 %v4123
      %v4320 = vunpack.c.l.b16 %v4124
      %v4321 = vunpack.c.h.b16 %v4124
      %v4322 = vunpack.c.l.b16 %v4125
      %v4323 = vunpack.c.h.b16 %v4125
      %v4324 = vunpack.c.l.b16 %v4126
      %v4325 = vunpack.c.h.b16 %v4126
      %v4326 = vunpack.c.l.b16 %v4127
      %v4327 = vunpack.c.h.b16 %v4127
      %v4328 = vunpack.c.l.b16 %v4128
      %v4329 = vunpack.c.h.b16 %v4128
      %v4330 = vunpack.c.l.b16 %v4129
      %v4331 = vunpack.c.h.b16 %v4129
      %v4332 = vunpack.c.l.b16 %v4130
      %v4333 = vunpack.c.h.b16 %v4130
      %v4334 = vunpack.c.l.b16 %v4131
      %v4335 = vunpack.c.h.b16 %v4131
      %v4336 = vpack.c.b16 %v4210, %v4208
      %v4337 = vpack.c.b16 %v4211, %v4209
      %v4338 = vpack.c.b16 %v4214, %v4212
      %v4339 = vpack.c.b16 %v4215, %v4213
      %v4340 = vpack.c.b16 %v4218, %v4216
      %v4341 = vpack.c.b16 %v4219, %v4217
      %v4342 = vpack.c.b16 %v4222, %v4220
      %v4343 = vpack.c.b16 %v4223, %v4221
      %v4344 = vpack.c.b16 %v4226, %v4224
      %v4345 = vpack.c.b16 %v4227, %v4225
      %v4346 = vpack.c.b16 %v4230, %v4228
      %v4347 = vpack.c.b16 %v4231, %v4229
      %v4348 = vpack.c.b16 %v4234, %v4232
      %v4349 = vpack.c.b16 %v4235, %v4233
      %v4350 = vpack.c.b16 %v4238, %v4236
      %v4351 = vpack.c.b16 %v4239, %v4237
      %v4352 = vpack.c.b16 %v4242, %v4240
      %v4353 = vpack.c.b16 %v4243, %v4241
      %v4354 = vpack.c.b16 %v4246, %v4244
      %v4355 = vpack.c.b16 %v4247, %v4245
      %v4356 = vpack.c.b16 %v4250, %v4248
      %v4357 = vpack.c.b16 %v4251, %v4249
      %v4358 = vpack.c.b16 %v4254, %v4252
      %v4359 = vpack.c.b16 %v4255, %v4253
      %v4360 = vpack.c.b16 %v4258, %v4256
      %v4361 = vpack.c.b16 %v4259, %v4257
      %v4362 = vpack.c.b16 %v4262, %v4260
      %v4363 = vpack.c.b16 %v4263, %v4261
      %v4364 = vpack.c.b16 %v4266, %v4264
      %v4365 = vpack.c.b16 %v4267, %v4265
      %v4366 = vpack.c.b16 %v4270, %v4268
      %v4367 = vpack.c.b16 %v4271, %v4269
      %v4368 = vpack.c.b16 %v4274, %v4272
      %v4369 = vpack.c.b16 %v4275, %v4273
      %v4370 = vpack.c.b16 %v4278, %v4276
      %v4371 = vpack.c.b16 %v4279, %v4277
      %v4372 = vpack.c.b16 %v4282, %v4280
      %v4373 = vpack.c.b16 %v4283, %v4281
      %v4374 = vpack.c.b16 %v4286, %v4284
      %v4375 = vpack.c.b16 %v4287, %v4285
      %v4376 = vpack.c.b16 %v4290, %v4288
      %v4377 = vpack.c.b16 %v4291, %v4289
      %v4378 = vpack.c.b16 %v4294, %v4292
      %v4379 = vpack.c.b16 %v4295, %v4293
      %v4380 = vpack.c.b16 %v4298, %v4296
      %v4381 = vpack.c.b16 %v4299, %v4297
      %v4382 = vpack.c.b16 %v4302, %v4300
      %v4383 = vpack.c.b16 %v4303, %v4301
      %v4384 = vpack.c.b16 %v4306, %v4304
      %v4385 = vpack.c.b16 %v4307, %v4305
      %v4386 = vpack.c.b16 %v4310, %v4308
      %v4387 = vpack.c.b16 %v4311, %v4309
      %v4388 = vpack.c.b16 %v4314, %v4312
      %v4389 = vpack.c.b16 %v4315, %v4313
      %v4390 = vpack.c.b16 %v4318, %v4316
      %v4391 = vpack.c.b16 %v4319, %v4317
      %v4392 = vpack.c.b16 %v4322, %v4320
      %v4393 = vpack.c.b16 %v4323, %v4321
      %v4394 = vpack.c.b16 %v4326, %v4324
      %v4395 = vpack.c.b16 %v4327, %v4325
      %v4396 = vpack.c.b16 %v4330, %v4328
      %v4397 = vpack.c.b16 %v4331, %v4329
      %v4398 = vpack.c.b16 %v4334, %v4332
      %v4399 = vpack.c.b16 %v4335, %v4333
      %4464 = vmatprep.subr.bf16.mxu0 %v4351
      %4465 = vmatpush1.bf16.msra.mxu0 %v4350
      %4466 = vmatprep.subr.bf16.mxu0 %v4349
      %4467 = vmatpush1.bf16.msra.mxu0 %v4348
      %4468 = vmatprep.subr.bf16.mxu0 %v4347
      %4469 = vmatpush1.bf16.msra.mxu0 %v4346
      %4470 = vmatprep.subr.bf16.mxu0 %v4345
      %4471 = vmatpush1.bf16.msra.mxu0 %v4344
      %4472 = vmatprep.subr.bf16.mxu0 %v4343
      %4473 = vmatpush1.bf16.msra.mxu0 %v4342
      %4474 = vmatprep.subr.bf16.mxu0 %v4341
      %4475 = vmatpush1.bf16.msra.mxu0 %v4340
      %4476 = vmatprep.subr.bf16.mxu0 %v4339
      %4477 = vmatpush1.bf16.msra.mxu0 %v4338
      %4478 = vmatprep.subr.bf16.mxu0 %v4337
      %4479 = vmatpush1.bf16.msra.mxu0 %v4336
      %4480 = vmatprep.subr.bf16.mxu0 %v4367
      %4481 = vmatpush2.bf16.msra.mxu0 %v4366
      %4482 = vmatprep.subr.bf16.mxu0 %v4365
      %4483 = vmatpush2.bf16.msra.mxu0 %v4364
      %4484 = vmatprep.subr.bf16.mxu0 %v4363
      %4485 = vmatpush2.bf16.msra.mxu0 %v4362
      %4486 = vmatprep.subr.bf16.mxu0 %v4361
      %4487 = vmatpush2.bf16.msra.mxu0 %v4360
      %4488 = vmatprep.subr.bf16.mxu0 %v4359
      %4489 = vmatpush2.bf16.msra.mxu0 %v4358
      %4490 = vmatprep.subr.bf16.mxu0 %v4357
      %4491 = vmatpush2.bf16.msra.mxu0 %v4356
      %4492 = vmatprep.subr.bf16.mxu0 %v4355
      %4493 = vmatpush2.bf16.msra.mxu0 %v4354
      %4494 = vmatprep.subr.bf16.mxu0 %v4353
      %4495 = vmatpush2.bf16.msra.mxu0 %v4352
      %4496 = vmatprep.mubr.bf16.mxu0 %v4037
      %4497 = vmatmul.mubr.bf16.gmra.mxu0 %v4036
      %v4498 = vpop.f32.mrf.mxu0
      %v4499 = vadd.f32 %v4137, %v4498
      %v4500 = vpop.f32.mrf.mxu0
      %v4501 = vadd.f32 %v4141, %v4500
      %v4502 = vpop.f32.mrf.mxu0
      %v4503 = vadd.f32 %v4137, %v4502
      %v4504 = vpop.f32.mrf.mxu0
      %v4505 = vadd.f32 %v4141, %v4504
      %4506 = vmatprep.mubr.bf16.mxu0 %v4041
      %4507 = vmatmul.mubr.bf16.gmra.mxu0 %v4040
      %v4508 = vpop.f32.mrf.mxu0
      %v4509 = vadd.f32 %v4137, %v4508
      %v4510 = vpop.f32.mrf.mxu0
      %v4511 = vadd.f32 %v4141, %v4510
      %v4512 = vpop.f32.mrf.mxu0
      %v4513 = vadd.f32 %v4137, %v4512
      %v4514 = vpop.f32.mrf.mxu0
      %v4515 = vadd.f32 %v4141, %v4514
      %4516 = vmatprep.mubr.bf16.mxu0 %v4045
      %4517 = vmatmul.mubr.bf16.gmra.mxu0 %v4044
      %v4518 = vpop.f32.mrf.mxu0
      %v4519 = vadd.f32 %v4137, %v4518
      %v4520 = vpop.f32.mrf.mxu0
      %v4521 = vadd.f32 %v4141, %v4520
      %v4522 = vpop.f32.mrf.mxu0
      %v4523 = vadd.f32 %v4137, %v4522
      %v4524 = vpop.f32.mrf.mxu0
      %v4525 = vadd.f32 %v4141, %v4524
      %4526 = vmatprep.mubr.bf16.mxu0 %v4049
      %4527 = vmatmul.mubr.bf16.gmra.mxu0 %v4048
      %v4528 = vpop.f32.mrf.mxu0
      %v4529 = vadd.f32 %v4137, %v4528
      %v4530 = vpop.f32.mrf.mxu0
      %v4531 = vadd.f32 %v4141, %v4530
      %v4532 = vpop.f32.mrf.mxu0
      %v4533 = vadd.f32 %v4137, %v4532
      %v4534 = vpop.f32.mrf.mxu0
      %v4535 = vadd.f32 %v4141, %v4534
      %4536 = vmatprep.mubr.bf16.mxu0 %v4053
      %4537 = vmatmul.mubr.bf16.gmra.mxu0 %v4052
      %v4538 = vpop.f32.mrf.mxu0
      %v4539 = vadd.f32 %v4137, %v4538
      %v4540 = vpop.f32.mrf.mxu0
      %v4541 = vadd.f32 %v4141, %v4540
      %v4542 = vpop.f32.mrf.mxu0
      %v4543 = vadd.f32 %v4137, %v4542
      %v4544 = vpop.f32.mrf.mxu0
      %v4545 = vadd.f32 %v4141, %v4544
      %4546 = vmatprep.mubr.bf16.mxu0 %v4057
      %4547 = vmatmul.mubr.bf16.gmra.mxu0 %v4056
      %v4548 = vpop.f32.mrf.mxu0
      %v4549 = vadd.f32 %v4137, %v4548
      %v4550 = vpop.f32.mrf.mxu0
      %v4551 = vadd.f32 %v4141, %v4550
      %v4552 = vpop.f32.mrf.mxu0
      %v4553 = vadd.f32 %v4137, %v4552
      %v4554 = vpop.f32.mrf.mxu0
      %v4555 = vadd.f32 %v4141, %v4554
      %4556 = vmatprep.mubr.bf16.mxu0 %v4061
      %4557 = vmatmul.mubr.bf16.gmra.mxu0 %v4060
      %v4558 = vpop.f32.mrf.mxu0
      %v4559 = vadd.f32 %v4137, %v4558
      %v4560 = vpop.f32.mrf.mxu0
      %v4561 = vadd.f32 %v4141, %v4560
      %v4562 = vpop.f32.mrf.mxu0
      %v4563 = vadd.f32 %v4137, %v4562
      %v4564 = vpop.f32.mrf.mxu0
      %v4565 = vadd.f32 %v4141, %v4564
      %4566 = vmatprep.mubr.bf16.mxu0 %v4065
      %4567 = vmatmul.mubr.bf16.gmra.mxu0 %v4064
      %v4568 = vpop.f32.mrf.mxu0
      %v4569 = vadd.f32 %v4137, %v4568
      %v4570 = vpop.f32.mrf.mxu0
      %v4571 = vadd.f32 %v4141, %v4570
      %v4572 = vpop.f32.mrf.mxu0
      %v4573 = vadd.f32 %v4137, %v4572
      %v4574 = vpop.f32.mrf.mxu0
      %v4575 = vadd.f32 %v4141, %v4574
      %4576 = vdwg.mxu0
      %4577 = vmatprep.subr.bf16.mxu0 %v4383
      %4578 = vmatpush1.bf16.msra.mxu0 %v4382
      %4579 = vmatprep.subr.bf16.mxu0 %v4381
      %4580 = vmatpush1.bf16.msra.mxu0 %v4380
      %4581 = vmatprep.subr.bf16.mxu0 %v4379
      %4582 = vmatpush1.bf16.msra.mxu0 %v4378
      %4583 = vmatprep.subr.bf16.mxu0 %v4377
      %4584 = vmatpush1.bf16.msra.mxu0 %v4376
      %4585 = vmatprep.subr.bf16.mxu0 %v4375
      %4586 = vmatpush1.bf16.msra.mxu0 %v4374
      %4587 = vmatprep.subr.bf16.mxu0 %v4373
      %4588 = vmatpush1.bf16.msra.mxu0 %v4372
      %4589 = vmatprep.subr.bf16.mxu0 %v4371
      %4590 = vmatpush1.bf16.msra.mxu0 %v4370
      %4591 = vmatprep.subr.bf16.mxu0 %v4369
      %4592 = vmatpush1.bf16.msra.mxu0 %v4368
      %4593 = vmatprep.subr.bf16.mxu0 %v4399
      %4594 = vmatpush2.bf16.msra.mxu0 %v4398
      %4595 = vmatprep.subr.bf16.mxu0 %v4397
      %4596 = vmatpush2.bf16.msra.mxu0 %v4396
      %4597 = vmatprep.subr.bf16.mxu0 %v4395
      %4598 = vmatpush2.bf16.msra.mxu0 %v4394
      %4599 = vmatprep.subr.bf16.mxu0 %v4393
      %4600 = vmatpush2.bf16.msra.mxu0 %v4392
      %4601 = vmatprep.subr.bf16.mxu0 %v4391
      %4602 = vmatpush2.bf16.msra.mxu0 %v4390
      %4603 = vmatprep.subr.bf16.mxu0 %v4389
      %4604 = vmatpush2.bf16.msra.mxu0 %v4388
      %4605 = vmatprep.subr.bf16.mxu0 %v4387
      %4606 = vmatpush2.bf16.msra.mxu0 %v4386
      %4607 = vmatprep.subr.bf16.mxu0 %v4385
      %4608 = vmatpush2.bf16.msra.mxu0 %v4384
      %4609 = vmatprep.mubr.bf16.mxu0 %v4039
      %4610 = vmatmul.mubr.bf16.gmra.mxu0 %v4038
      %v4611 = vpop.f32.mrf.mxu0
      %v4612 = vadd.f32 %v4499, %v4611
      %v4613 = vpop.f32.mrf.mxu0
      %v4614 = vadd.f32 %v4501, %v4613
      %v4615 = vpop.f32.mrf.mxu0
      %v4616 = vadd.f32 %v4503, %v4615
      %v4617 = vpop.f32.mrf.mxu0
      %v4618 = vadd.f32 %v4505, %v4617
      %4619 = vmatprep.mubr.bf16.mxu0 %v4043
      %4620 = vmatmul.mubr.bf16.gmra.mxu0 %v4042
      %v4621 = vpop.f32.mrf.mxu0
      %v4622 = vadd.f32 %v4509, %v4621
      %v4623 = vpop.f32.mrf.mxu0
      %v4624 = vadd.f32 %v4511, %v4623
      %v4625 = vpop.f32.mrf.mxu0
      %v4626 = vadd.f32 %v4513, %v4625
      %v4627 = vpop.f32.mrf.mxu0
      %v4628 = vadd.f32 %v4515, %v4627
      %4629 = vmatprep.mubr.bf16.mxu0 %v4047
      %4630 = vmatmul.mubr.bf16.gmra.mxu0 %v4046
      %v4631 = vpop.f32.mrf.mxu0
      %v4632 = vadd.f32 %v4519, %v4631
      %v4633 = vpop.f32.mrf.mxu0
      %v4634 = vadd.f32 %v4521, %v4633
      %v4635 = vpop.f32.mrf.mxu0
      %v4636 = vadd.f32 %v4523, %v4635
      %v4637 = vpop.f32.mrf.mxu0
      %v4638 = vadd.f32 %v4525, %v4637
      %4639 = vmatprep.mubr.bf16.mxu0 %v4051
      %4640 = vmatmul.mubr.bf16.gmra.mxu0 %v4050
      %v4641 = vpop.f32.mrf.mxu0
      %v4642 = vadd.f32 %v4529, %v4641
      %v4643 = vpop.f32.mrf.mxu0
      %v4644 = vadd.f32 %v4531, %v4643
      %v4645 = vpop.f32.mrf.mxu0
      %v4646 = vadd.f32 %v4533, %v4645
      %v4647 = vpop.f32.mrf.mxu0
      %v4648 = vadd.f32 %v4535, %v4647
      %4649 = vmatprep.mubr.bf16.mxu0 %v4055
      %4650 = vmatmul.mubr.bf16.gmra.mxu0 %v4054
      %v4651 = vpop.f32.mrf.mxu0
      %v4652 = vadd.f32 %v4539, %v4651
      %v4653 = vpop.f32.mrf.mxu0
      %v4654 = vadd.f32 %v4541, %v4653
      %v4655 = vpop.f32.mrf.mxu0
      %v4656 = vadd.f32 %v4543, %v4655
      %v4657 = vpop.f32.mrf.mxu0
      %v4658 = vadd.f32 %v4545, %v4657
      %4659 = vmatprep.mubr.bf16.mxu0 %v4059
      %4660 = vmatmul.mubr.bf16.gmra.mxu0 %v4058
      %v4661 = vpop.f32.mrf.mxu0
      %v4662 = vadd.f32 %v4549, %v4661
      %v4663 = vpop.f32.mrf.mxu0
      %v4664 = vadd.f32 %v4551, %v4663
      %v4665 = vpop.f32.mrf.mxu0
      %v4666 = vadd.f32 %v4553, %v4665
      %v4667 = vpop.f32.mrf.mxu0
      %v4668 = vadd.f32 %v4555, %v4667
      %4669 = vmatprep.mubr.bf16.mxu0 %v4063
      %4670 = vmatmul.mubr.bf16.gmra.mxu0 %v4062
      %v4671 = vpop.f32.mrf.mxu0
      %v4672 = vadd.f32 %v4559, %v4671
      %v4673 = vpop.f32.mrf.mxu0
      %v4674 = vadd.f32 %v4561, %v4673
      %v4675 = vpop.f32.mrf.mxu0
      %v4676 = vadd.f32 %v4563, %v4675
      %v4677 = vpop.f32.mrf.mxu0
      %v4678 = vadd.f32 %v4565, %v4677
      %4679 = vmatprep.mubr.bf16.mxu0 %v4067
      %4680 = vmatmul.mubr.bf16.gmra.mxu0 %v4066
      %v4681 = vpop.f32.mrf.mxu0
      %v4682 = vadd.f32 %v4569, %v4681
      %v4683 = vpop.f32.mrf.mxu0
      %v4684 = vadd.f32 %v4571, %v4683
      %v4685 = vpop.f32.mrf.mxu0
      %v4686 = vadd.f32 %v4573, %v4685
      %v4687 = vpop.f32.mrf.mxu0
      %v4688 = vadd.f32 %v4575, %v4687
      %4689 = vdwg.mxu0
      %v4690 = vadd.f32 %v3292, %v4612
      %v4691 = vadd.f32 %v3293, %v4614
      %v4692 = vadd.f32 %v3294, %v4616
      %v4693 = vadd.f32 %v3295, %v4618
      %v4694 = vadd.f32 %v3296, %v4622
      %v4695 = vadd.f32 %v3297, %v4624
      %v4696 = vadd.f32 %v3298, %v4626
      %v4697 = vadd.f32 %v3299, %v4628
      %v4698 = vadd.f32 %v3300, %v4632
      %v4699 = vadd.f32 %v3301, %v4634
      %v4700 = vadd.f32 %v3302, %v4636
      %v4701 = vadd.f32 %v3303, %v4638
      %v4702 = vadd.f32 %v3304, %v4642
      %v4703 = vadd.f32 %v3305, %v4644
      %v4704 = vadd.f32 %v3306, %v4646
      %v4705 = vadd.f32 %v3307, %v4648
      %v4706 = vadd.f32 %v3308, %v4652
      %v4707 = vadd.f32 %v3309, %v4654
      %v4708 = vadd.f32 %v3310, %v4656
      %v4709 = vadd.f32 %v3311, %v4658
      %v4710 = vadd.f32 %v3312, %v4662
      %v4711 = vadd.f32 %v3313, %v4664
      %v4712 = vadd.f32 %v3314, %v4666
      %v4713 = vadd.f32 %v3315, %v4668
      %v4714 = vadd.f32 %v3316, %v4672
      %v4715 = vadd.f32 %v3317, %v4674
      %v4716 = vadd.f32 %v3318, %v4676
      %v4717 = vadd.f32 %v3319, %v4678
      %v4718 = vadd.f32 %v3320, %v4682
      %v4719 = vadd.f32 %v3321, %v4684
      %v4720 = vadd.f32 %v3322, %v4686
      %v4721 = vadd.f32 %v3323, %v4688
      %v4722 = vld [vmem:[%s726] sm:$0x3]
      %v4723 = vld [vmem:[%s730] sm:$0x3]
      %v4724 = vadd.f32 %v4690, %v4691
      %4725 = vadd.xlane.f32.xlu0 %v4724
      %v4726 = vpop.xlane.xlu0 %4725
      %v4727 = vadd.f32 %v4692, %v4693
      %4728 = vadd.xlane.f32.xlu0 %v4727
      %v4729 = vpop.xlane.xlu0 %4728
      %v4730 = vadd.f32 %v4694, %v4695
      %4731 = vadd.xlane.f32.xlu0 %v4730
      %v4732 = vpop.xlane.xlu0 %4731
      %v4733 = vadd.f32 %v4696, %v4697
      %4734 = vadd.xlane.f32.xlu0 %v4733
      %v4735 = vpop.xlane.xlu0 %4734
      %v4736 = vadd.f32 %v4698, %v4699
      %4737 = vadd.xlane.f32.xlu0 %v4736
      %v4738 = vpop.xlane.xlu0 %4737
      %v4739 = vadd.f32 %v4700, %v4701
      %4740 = vadd.xlane.f32.xlu0 %v4739
      %v4741 = vpop.xlane.xlu0 %4740
      %v4742 = vadd.f32 %v4702, %v4703
      %4743 = vadd.xlane.f32.xlu0 %v4742
      %v4744 = vpop.xlane.xlu0 %4743
      %v4745 = vadd.f32 %v4704, %v4705
      %4746 = vadd.xlane.f32.xlu0 %v4745
      %v4747 = vpop.xlane.xlu0 %4746
      %v4748 = vadd.f32 %v4706, %v4707
      %4749 = vadd.xlane.f32.xlu0 %v4748
      %v4750 = vpop.xlane.xlu0 %4749
      %v4751 = vadd.f32 %v4708, %v4709
      %4752 = vadd.xlane.f32.xlu0 %v4751
      %v4753 = vpop.xlane.xlu0 %4752
      %v4754 = vadd.f32 %v4710, %v4711
      %4755 = vadd.xlane.f32.xlu0 %v4754
      %v4756 = vpop.xlane.xlu0 %4755
      %v4757 = vadd.f32 %v4712, %v4713
      %4758 = vadd.xlane.f32.xlu0 %v4757
      %v4759 = vpop.xlane.xlu0 %4758
      %v4760 = vadd.f32 %v4714, %v4715
      %4761 = vadd.xlane.f32.xlu0 %v4760
      %v4762 = vpop.xlane.xlu0 %4761
      %v4763 = vadd.f32 %v4716, %v4717
      %4764 = vadd.xlane.f32.xlu0 %v4763
      %v4765 = vpop.xlane.xlu0 %4764
      %v4766 = vadd.f32 %v4718, %v4719
      %4767 = vadd.xlane.f32.xlu0 %v4766
      %v4768 = vpop.xlane.xlu0 %4767
      %v4769 = vadd.f32 %v4720, %v4721
      %4770 = vadd.xlane.f32.xlu0 %v4769
      %v4771 = vpop.xlane.xlu0 %4770
      %v4772 = vmul.f32 %v4726, %v3029
      %v4773 = vmul.f32 %v4729, %v3029
      %v4774 = vmul.f32 %v4732, %v3029
      %v4775 = vmul.f32 %v4735, %v3029
      %v4776 = vmul.f32 %v4738, %v3029
      %v4777 = vmul.f32 %v4741, %v3029
      %v4778 = vmul.f32 %v4744, %v3029
      %v4779 = vmul.f32 %v4747, %v3029
      %v4780 = vmul.f32 %v4750, %v3029
      %v4781 = vmul.f32 %v4753, %v3029
      %v4782 = vmul.f32 %v4756, %v3029
      %v4783 = vmul.f32 %v4759, %v3029
      %v4784 = vmul.f32 %v4762, %v3029
      %v4785 = vmul.f32 %v4765, %v3029
      %v4786 = vmul.f32 %v4768, %v3029
      %v4787 = vmul.f32 %v4771, %v3029
      %v4788 = vsub.f32 %v4690, %v4772
      %v4789 = vsub.f32 %v4691, %v4772
      %v4790 = vsub.f32 %v4692, %v4773
      %v4791 = vsub.f32 %v4693, %v4773
      %v4792 = vsub.f32 %v4694, %v4774
      %v4793 = vsub.f32 %v4695, %v4774
      %v4794 = vsub.f32 %v4696, %v4775
      %v4795 = vsub.f32 %v4697, %v4775
      %v4796 = vsub.f32 %v4698, %v4776
      %v4797 = vsub.f32 %v4699, %v4776
      %v4798 = vsub.f32 %v4700, %v4777
      %v4799 = vsub.f32 %v4701, %v4777
      %v4800 = vsub.f32 %v4702, %v4778
      %v4801 = vsub.f32 %v4703, %v4778
      %v4802 = vsub.f32 %v4704, %v4779
      %v4803 = vsub.f32 %v4705, %v4779
      %v4804 = vsub.f32 %v4706, %v4780
      %v4805 = vsub.f32 %v4707, %v4780
      %v4806 = vsub.f32 %v4708, %v4781
      %v4807 = vsub.f32 %v4709, %v4781
      %v4808 = vsub.f32 %v4710, %v4782
      %v4809 = vsub.f32 %v4711, %v4782
      %v4810 = vsub.f32 %v4712, %v4783
      %v4811 = vsub.f32 %v4713, %v4783
      %v4812 = vsub.f32 %v4714, %v4784
      %v4813 = vsub.f32 %v4715, %v4784
      %v4814 = vsub.f32 %v4716, %v4785
      %v4815 = vsub.f32 %v4717, %v4785
      %v4816 = vsub.f32 %v4718, %v4786
      %v4817 = vsub.f32 %v4719, %v4786
      %v4818 = vsub.f32 %v4720, %v4787
      %v4819 = vsub.f32 %v4721, %v4787
      %v4820 = vmul.f32 %v4788, %v4788
      %v4821 = vmul.f32 %v4789, %v4789
      %v4822 = vmul.f32 %v4790, %v4790
      %v4823 = vmul.f32 %v4791, %v4791
      %v4824 = vmul.f32 %v4792, %v4792
      %v4825 = vmul.f32 %v4793, %v4793
      %v4826 = vmul.f32 %v4794, %v4794
      %v4827 = vmul.f32 %v4795, %v4795
      %v4828 = vmul.f32 %v4796, %v4796
      %v4829 = vmul.f32 %v4797, %v4797
      %v4830 = vmul.f32 %v4798, %v4798
      %v4831 = vmul.f32 %v4799, %v4799
      %v4832 = vmul.f32 %v4800, %v4800
      %v4833 = vmul.f32 %v4801, %v4801
      %v4834 = vmul.f32 %v4802, %v4802
      %v4835 = vmul.f32 %v4803, %v4803
      %v4836 = vmul.f32 %v4804, %v4804
      %v4837 = vmul.f32 %v4805, %v4805
      %v4838 = vmul.f32 %v4806, %v4806
      %v4839 = vmul.f32 %v4807, %v4807
      %v4840 = vmul.f32 %v4808, %v4808
      %v4841 = vmul.f32 %v4809, %v4809
      %v4842 = vmul.f32 %v4810, %v4810
      %v4843 = vmul.f32 %v4811, %v4811
      %v4844 = vmul.f32 %v4812, %v4812
      %v4845 = vmul.f32 %v4813, %v4813
      %v4846 = vmul.f32 %v4814, %v4814
      %v4847 = vmul.f32 %v4815, %v4815
      %v4848 = vmul.f32 %v4816, %v4816
      %v4849 = vmul.f32 %v4817, %v4817
      %v4850 = vmul.f32 %v4818, %v4818
      %v4851 = vmul.f32 %v4819, %v4819
      %v4852 = vadd.f32 %v4820, %v4821
      %4853 = vadd.xlane.f32.xlu0 %v4852
      %v4854 = vpop.xlane.xlu0 %4853
      %v4855 = vadd.f32 %v4822, %v4823
      %4856 = vadd.xlane.f32.xlu0 %v4855
      %v4857 = vpop.xlane.xlu0 %4856
      %v4858 = vadd.f32 %v4824, %v4825
      %4859 = vadd.xlane.f32.xlu0 %v4858
      %v4860 = vpop.xlane.xlu0 %4859
      %v4861 = vadd.f32 %v4826, %v4827
      %4862 = vadd.xlane.f32.xlu0 %v4861
      %v4863 = vpop.xlane.xlu0 %4862
      %v4864 = vadd.f32 %v4828, %v4829
      %4865 = vadd.xlane.f32.xlu0 %v4864
      %v4866 = vpop.xlane.xlu0 %4865
      %v4867 = vadd.f32 %v4830, %v4831
      %4868 = vadd.xlane.f32.xlu0 %v4867
      %v4869 = vpop.xlane.xlu0 %4868
      %v4870 = vadd.f32 %v4832, %v4833
      %4871 = vadd.xlane.f32.xlu0 %v4870
      %v4872 = vpop.xlane.xlu0 %4871
      %v4873 = vadd.f32 %v4834, %v4835
      %4874 = vadd.xlane.f32.xlu0 %v4873
      %v4875 = vpop.xlane.xlu0 %4874
      %v4876 = vadd.f32 %v4836, %v4837
      %4877 = vadd.xlane.f32.xlu0 %v4876
      %v4878 = vpop.xlane.xlu0 %4877
      %v4879 = vadd.f32 %v4838, %v4839
      %4880 = vadd.xlane.f32.xlu0 %v4879
      %v4881 = vpop.xlane.xlu0 %4880
      %v4882 = vadd.f32 %v4840, %v4841
      %4883 = vadd.xlane.f32.xlu0 %v4882
      %v4884 = vpop.xlane.xlu0 %4883
      %v4885 = vadd.f32 %v4842, %v4843
      %4886 = vadd.xlane.f32.xlu0 %v4885
      %v4887 = vpop.xlane.xlu0 %4886
      %v4888 = vadd.f32 %v4844, %v4845
      %4889 = vadd.xlane.f32.xlu0 %v4888
      %v4890 = vpop.xlane.xlu0 %4889
      %v4891 = vadd.f32 %v4846, %v4847
      %4892 = vadd.xlane.f32.xlu0 %v4891
      %v4893 = vpop.xlane.xlu0 %4892
      %v4894 = vadd.f32 %v4848, %v4849
      %4895 = vadd.xlane.f32.xlu0 %v4894
      %v4896 = vpop.xlane.xlu0 %4895
      %v4897 = vadd.f32 %v4850, %v4851
      %4898 = vadd.xlane.f32.xlu0 %v4897
      %v4899 = vpop.xlane.xlu0 %4898
      %v4900 = vmul.f32 %v4854, %v3029
      %v4901 = vmul.f32 %v4857, %v3029
      %v4902 = vmul.f32 %v4860, %v3029
      %v4903 = vmul.f32 %v4863, %v3029
      %v4904 = vmul.f32 %v4866, %v3029
      %v4905 = vmul.f32 %v4869, %v3029
      %v4906 = vmul.f32 %v4872, %v3029
      %v4907 = vmul.f32 %v4875, %v3029
      %v4908 = vmul.f32 %v4878, %v3029
      %v4909 = vmul.f32 %v4881, %v3029
      %v4910 = vmul.f32 %v4884, %v3029
      %v4911 = vmul.f32 %v4887, %v3029
      %v4912 = vmul.f32 %v4890, %v3029
      %v4913 = vmul.f32 %v4893, %v3029
      %v4914 = vmul.f32 %v4896, %v3029
      %v4915 = vmul.f32 %v4899, %v3029
      %v4916 = vadd.f32 %v4900, 1e-05
      %v4917 = vadd.f32 %v4901, 1e-05
      %v4918 = vadd.f32 %v4902, 1e-05
      %v4919 = vadd.f32 %v4903, 1e-05
      %v4920 = vadd.f32 %v4904, 1e-05
      %v4921 = vadd.f32 %v4905, 1e-05
      %v4922 = vadd.f32 %v4906, 1e-05
      %v4923 = vadd.f32 %v4907, 1e-05
      %v4924 = vadd.f32 %v4908, 1e-05
      %v4925 = vadd.f32 %v4909, 1e-05
      %v4926 = vadd.f32 %v4910, 1e-05
      %v4927 = vadd.f32 %v4911, 1e-05
      %v4928 = vadd.f32 %v4912, 1e-05
      %v4929 = vadd.f32 %v4913, 1e-05
      %v4930 = vadd.f32 %v4914, 1e-05
      %v4931 = vadd.f32 %v4915, 1e-05
      %v4932 = vrsqrt.pop %v4916
      %v4933 = vrsqrt.pop %v4917
      %v4934 = vrsqrt.pop %v4918
      %v4935 = vrsqrt.pop %v4919
      %v4936 = vrsqrt.pop %v4920
      %v4937 = vrsqrt.pop %v4921
      %v4938 = vrsqrt.pop %v4922
      %v4939 = vrsqrt.pop %v4923
      %v4940 = vrsqrt.pop %v4924
      %v4941 = vrsqrt.pop %v4925
      %v4942 = vrsqrt.pop %v4926
      %v4943 = vrsqrt.pop %v4927
      %v4944 = vrsqrt.pop %v4928
      %v4945 = vrsqrt.pop %v4929
      %v4946 = vrsqrt.pop %v4930
      %v4947 = vrsqrt.pop %v4931
      %v4948 = vmul.f32 %v4788, %v4932
      %v4949 = vmul.f32 %v4789, %v4932
      %v4950 = vmul.f32 %v4790, %v4933
      %v4951 = vmul.f32 %v4791, %v4933
      %v4952 = vmul.f32 %v4792, %v4934
      %v4953 = vmul.f32 %v4793, %v4934
      %v4954 = vmul.f32 %v4794, %v4935
      %v4955 = vmul.f32 %v4795, %v4935
      %v4956 = vmul.f32 %v4796, %v4936
      %v4957 = vmul.f32 %v4797, %v4936
      %v4958 = vmul.f32 %v4798, %v4937
      %v4959 = vmul.f32 %v4799, %v4937
      %v4960 = vmul.f32 %v4800, %v4938
      %v4961 = vmul.f32 %v4801, %v4938
      %v4962 = vmul.f32 %v4802, %v4939
      %v4963 = vmul.f32 %v4803, %v4939
      %v4964 = vmul.f32 %v4804, %v4940
      %v4965 = vmul.f32 %v4805, %v4940
      %v4966 = vmul.f32 %v4806, %v4941
      %v4967 = vmul.f32 %v4807, %v4941
      %v4968 = vmul.f32 %v4808, %v4942
      %v4969 = vmul.f32 %v4809, %v4942
      %v4970 = vmul.f32 %v4810, %v4943
      %v4971 = vmul.f32 %v4811, %v4943
      %v4972 = vmul.f32 %v4812, %v4944
      %v4973 = vmul.f32 %v4813, %v4944
      %v4974 = vmul.f32 %v4814, %v4945
      %v4975 = vmul.f32 %v4815, %v4945
      %v4976 = vmul.f32 %v4816, %v4946
      %v4977 = vmul.f32 %v4817, %v4946
      %v4978 = vmul.f32 %v4818, %v4947
      %v4979 = vmul.f32 %v4819, %v4947
      %v4981 = vlaneseq
      %v4982 = vshrl.u32 %v4981, 7
      %v4983 = vsub.s32 0, %v4982
      %v4984 = vrot.slane %v4722, %v4983
      %v4985 = vlaneseq
      %v4986 = vshrl.u32 %v4985, 7
      %v4987 = vsub.s32 1, %v4986
      %v4988 = vrot.slane %v4722, %v4987
      %v4991 = vmul.f32 %v4948, %v4984
      %v4992 = vmul.f32 %v4949, %v4988
      %v4993 = vmul.f32 %v4950, %v4984
      %v4994 = vmul.f32 %v4951, %v4988
      %v4995 = vmul.f32 %v4952, %v4984
      %v4996 = vmul.f32 %v4953, %v4988
      %v4997 = vmul.f32 %v4954, %v4984
      %v4998 = vmul.f32 %v4955, %v4988
      %v4999 = vmul.f32 %v4956, %v4984
      %v5000 = vmul.f32 %v4957, %v4988
      %v5001 = vmul.f32 %v4958, %v4984
      %v5002 = vmul.f32 %v4959, %v4988
      %v5003 = vmul.f32 %v4960, %v4984
      %v5004 = vmul.f32 %v4961, %v4988
      %v5005 = vmul.f32 %v4962, %v4984
      %v5006 = vmul.f32 %v4963, %v4988
      %v5007 = vmul.f32 %v4964, %v4984
      %v5008 = vmul.f32 %v4965, %v4988
      %v5009 = vmul.f32 %v4966, %v4984
      %v5010 = vmul.f32 %v4967, %v4988
      %v5011 = vmul.f32 %v4968, %v4984
      %v5012 = vmul.f32 %v4969, %v4988
      %v5013 = vmul.f32 %v4970, %v4984
      %v5014 = vmul.f32 %v4971, %v4988
      %v5015 = vmul.f32 %v4972, %v4984
      %v5016 = vmul.f32 %v4973, %v4988
      %v5017 = vmul.f32 %v4974, %v4984
      %v5018 = vmul.f32 %v4975, %v4988
      %v5019 = vmul.f32 %v4976, %v4984
      %v5020 = vmul.f32 %v4977, %v4988
      %v5021 = vmul.f32 %v4978, %v4984
      %v5022 = vmul.f32 %v4979, %v4988
      %v5024 = vlaneseq
      %v5025 = vshrl.u32 %v5024, 7
      %v5026 = vsub.s32 0, %v5025
      %v5027 = vrot.slane %v4723, %v5026
      %v5028 = vlaneseq
      %v5029 = vshrl.u32 %v5028, 7
      %v5030 = vsub.s32 1, %v5029
      %v5031 = vrot.slane %v4723, %v5030
      %v5034 = vadd.f32 %v4991, %v5027
      %v5035 = vadd.f32 %v4992, %v5031
      %v5036 = vadd.f32 %v4993, %v5027
      %v5037 = vadd.f32 %v4994, %v5031
      %v5038 = vadd.f32 %v4995, %v5027
      %v5039 = vadd.f32 %v4996, %v5031
      %v5040 = vadd.f32 %v4997, %v5027
      %v5041 = vadd.f32 %v4998, %v5031
      %v5042 = vadd.f32 %v4999, %v5027
      %v5043 = vadd.f32 %v5000, %v5031
      %v5044 = vadd.f32 %v5001, %v5027
      %v5045 = vadd.f32 %v5002, %v5031
      %v5046 = vadd.f32 %v5003, %v5027
      %v5047 = vadd.f32 %v5004, %v5031
      %v5048 = vadd.f32 %v5005, %v5027
      %v5049 = vadd.f32 %v5006, %v5031
      %v5050 = vadd.f32 %v5007, %v5027
      %v5051 = vadd.f32 %v5008, %v5031
      %v5052 = vadd.f32 %v5009, %v5027
      %v5053 = vadd.f32 %v5010, %v5031
      %v5054 = vadd.f32 %v5011, %v5027
      %v5055 = vadd.f32 %v5012, %v5031
      %v5056 = vadd.f32 %v5013, %v5027
      %v5057 = vadd.f32 %v5014, %v5031
      %v5058 = vadd.f32 %v5015, %v5027
      %v5059 = vadd.f32 %v5016, %v5031
      %v5060 = vadd.f32 %v5017, %v5027
      %v5061 = vadd.f32 %v5018, %v5031
      %v5062 = vadd.f32 %v5019, %v5027
      %v5063 = vadd.f32 %v5020, %v5031
      %v5064 = vadd.f32 %v5021, %v5027
      %v5065 = vadd.f32 %v5022, %v5031
      %5066 = vst [vmem:[#allocation2] sm:$0xff] %v5034
      %5067 = vst [vmem:[#allocation2 + $0x8] sm:$0xff] %v5035
      %5068 = vst [vmem:[#allocation2 + $0x10] sm:$0xff] %v5036
      %5069 = vst [vmem:[#allocation2 + $0x18] sm:$0xff] %v5037
      %5070 = vst [vmem:[#allocation2 + $0x20] sm:$0xff] %v5038
      %5071 = vst [vmem:[#allocation2 + $0x28] sm:$0xff] %v5039
      %5072 = vst [vmem:[#allocation2 + $0x30] sm:$0xff] %v5040
      %5073 = vst [vmem:[#allocation2 + $0x38] sm:$0xff] %v5041
      %5074 = vst [vmem:[#allocation2 + $0x40] sm:$0xff] %v5042
      %5075 = vst [vmem:[#allocation2 + $0x48] sm:$0xff] %v5043
      %5076 = vst [vmem:[#allocation2 + $0x50] sm:$0xff] %v5044
      %5077 = vst [vmem:[#allocation2 + $0x58] sm:$0xff] %v5045
      %5078 = vst [vmem:[#allocation2 + $0x60] sm:$0xff] %v5046
      %5079 = vst [vmem:[#allocation2 + $0x68] sm:$0xff] %v5047
      %5080 = vst [vmem:[#allocation2 + $0x70] sm:$0xff] %v5048
      %5081 = vst [vmem:[#allocation2 + $0x78] sm:$0xff] %v5049
      %5082 = vst [vmem:[#allocation2 + $0x80] sm:$0xff] %v5050
      %5083 = vst [vmem:[#allocation2 + $0x88] sm:$0xff] %v5051
      %5084 = vst [vmem:[#allocation2 + $0x90] sm:$0xff] %v5052
      %5085 = vst [vmem:[#allocation2 + $0x98] sm:$0xff] %v5053
      %5086 = vst [vmem:[#allocation2 + $0xa0] sm:$0xff] %v5054
      %5087 = vst [vmem:[#allocation2 + $0xa8] sm:$0xff] %v5055
      %5088 = vst [vmem:[#allocation2 + $0xb0] sm:$0xff] %v5056
      %5089 = vst [vmem:[#allocation2 + $0xb8] sm:$0xff] %v5057
      %5090 = vst [vmem:[#allocation2 + $0xc0] sm:$0xff] %v5058
      %5091 = vst [vmem:[#allocation2 + $0xc8] sm:$0xff] %v5059
      %5092 = vst [vmem:[#allocation2 + $0xd0] sm:$0xff] %v5060
      %5093 = vst [vmem:[#allocation2 + $0xd8] sm:$0xff] %v5061
      %5094 = vst [vmem:[#allocation2 + $0xe0] sm:$0xff] %v5062
      %5095 = vst [vmem:[#allocation2 + $0xe8] sm:$0xff] %v5063
      %5096 = vst [vmem:[#allocation2 + $0xf0] sm:$0xff] %v5064
      %5097 = vst [vmem:[#allocation2 + $0xf8] sm:$0xff] %v5065
      %p5098 = scmp.eq.s32.totalorder %s32, 1
      // Predicated region
      $region81: #{transformer_encoder_forward.1} parent=75 // pred_check
        %p5099 = pneg %p5098
      $region82: #{transformer_encoder_forward.1} parent=75 // pred_check_branch
        %5101 = sbr.rel (%p5099) target = $region84
      $region83: #{transformer_encoder_forward.1} parent=75 // pred_region
        %v5102 = vadd.f32 %v5034, %v5036
        %v5103 = vadd.f32 %v5102, %v5038
        %v5104 = vadd.f32 %v5103, %v5040
        %v5105 = vadd.f32 %v5104, %v5042
        %v5106 = vadd.f32 %v5105, %v5044
        %v5107 = vadd.f32 %v5106, %v5046
        %v5108 = vadd.f32 %v5107, %v5048
        %v5109 = vadd.f32 %v5108, %v5050
        %v5110 = vadd.f32 %v5109, %v5052
        %v5111 = vadd.f32 %v5110, %v5054
        %v5112 = vadd.f32 %v5111, %v5056
        %v5113 = vadd.f32 %v5112, %v5058
        %v5114 = vadd.f32 %v5113, %v5060
        %v5115 = vadd.f32 %v5114, %v5062
        %v5116 = vadd.f32 %v5115, %v5064
        %v5117 = vrot.slane %v5116, 4
        %v5118 = vadd.f32 %v5116, %v5117
        %v5119 = vrot.slane %v5118, 2
        %v5120 = vadd.f32 %v5118, %v5119
        %v5121 = vrot.slane %v5120, 1
        %v5122 = vadd.f32 %v5120, %v5121
        %v5123 = vadd.f32 %v5035, %v5037
        %v5124 = vadd.f32 %v5123, %v5039
        %v5125 = vadd.f32 %v5124, %v5041
        %v5126 = vadd.f32 %v5125, %v5043
        %v5127 = vadd.f32 %v5126, %v5045
        %v5128 = vadd.f32 %v5127, %v5047
        %v5129 = vadd.f32 %v5128, %v5049
        %v5130 = vadd.f32 %v5129, %v5051
        %v5131 = vadd.f32 %v5130, %v5053
        %v5132 = vadd.f32 %v5131, %v5055
        %v5133 = vadd.f32 %v5132, %v5057
        %v5134 = vadd.f32 %v5133, %v5059
        %v5135 = vadd.f32 %v5134, %v5061
        %v5136 = vadd.f32 %v5135, %v5063
        %v5137 = vadd.f32 %v5136, %v5065
        %v5138 = vrot.slane %v5137, 4
        %v5139 = vadd.f32 %v5137, %v5138
        %v5140 = vrot.slane %v5139, 2
        %v5141 = vadd.f32 %v5139, %v5140
        %v5142 = vrot.slane %v5141, 1
        %v5143 = vadd.f32 %v5141, %v5142
        %v5144 = vrcp.pop 128.0
        %v5145 = vmul.f32 %v5122, %v5144
        %v5146 = vmul.f32 %v5143, %v5144
        %v5149 = vcombine.low %v5145, %v5146
        %v5151 = vunpack.c.l.s4 1966171168
        %v5152 = vunpack.c.0.s8 %v5151
        %v5153 = vlaneseq
        %v5154 = vshrl.u32 %v5153, 7
        %v5155 = vsub.s32 %v5152, %v5154
        %v5156 = vrot.slane %v5149, %v5155
        %v5158 = vunpack.c.l.s4 1966171168
        %v5159 = vunpack.c.0.s8 %v5158
        %v5160 = vlaneseq
        %v5161 = vshrl.u32 %v5160, 7
        %v5162 = vsub.s32 %v5159, %v5161
        %v5163 = vrot.slane %v5156, %v5162
        %v5165 = vlaneseq
        %vm5166 = vcmp.ge.s32.totalorder %v5165, 0
        %vm5167 = vcmp.lt.s32.totalorder %v5165, 256
        %vm5168 = vmand %vm5166, %vm5167
        %5169 = vst.msk [vmem:[%s743] sm:$0x3] %vm5168, %v5163
      $region84: #{transformer_encoder_forward.1} parent=75 // pred_fallthru
        _
      %p5170 = scmp.lt.s32.totalorder %s31, 1
      %s5171 = scalar_select %p5170, %s31, 1
      %p5172 = scmp.lt.s32.totalorder %s32, 1
      %s5173 = scalar_select %p5172, %s32, 1
      %s5174 = smul.addr %s5173, 32
      %s5175 = smul.addr %s5171, 64
      %s5176 = sadd.s32 %s5174, %s5175
      %s5177 = smul.addr %s5176, 8
      %s5178 = scalar_lea.vmem %s14, %s5177
      %p5179 = scmp.lt.s32.totalorder %s31, 1
      %s5180 = scalar_select %p5179, %s31, 1
      %s5181 = smul.addr %s5180, 2
      %s5182 = scalar_lea.vmem %s15, %s5181
      // Predicated region
      $region85: #{transformer_encoder_forward.1} parent=75 // pred_check
        %p5183 = pneg %p418
      $region86: #{transformer_encoder_forward.1} parent=75 // pred_check_branch
        %5185 = sbr.rel (%p5183) target = $region88
      $region87: #{transformer_encoder_forward.1} parent=75 // pred_region
        _
      $region88: #{transformer_encoder_forward.1} parent=75 // pred_fallthru
        _
      // Predicated region
      $region89: #{transformer_encoder_forward.1} parent=75 // pred_check
        %p5186 = pneg %p444
      $region90: #{transformer_encoder_forward.1} parent=75 // pred_check_branch
        %5188 = sbr.rel (%p5186) target = $region92
      $region91: #{transformer_encoder_forward.1} parent=75 // pred_region
        _
      $region92: #{transformer_encoder_forward.1} parent=75 // pred_fallthru
        _
    $region76: #{transformer_encoder_forward.1} parent=5 // pred_fallthru
      _
    %p5189 = scmp.le.s32.totalorder 2, %s22
    // Predicated region
    $region93: #{transformer_encoder_forward.1} parent=5 // pred_check
      %p5190 = pneg %p5189
    $region94: #{transformer_encoder_forward.1} parent=5 // pred_check_branch
      %5192 = sbr.rel (%p5190) target = $region96
    $region95: #{transformer_encoder_forward.1} parent=5 // pred_region
      %s5193 = ssub.s32 %s22, 2
      // Predicated region
      $region97: #{transformer_encoder_forward.1} parent=95 // pred_check
        %p5194 = pneg %p424
      $region98: #{transformer_encoder_forward.1} parent=95 // pred_check_branch
        %5196 = sbr.rel (%p5194) target = $region100
      $region99: #{transformer_encoder_forward.1} parent=95 // pred_region
        %p5197 = scmp.lt.s32.totalorder %s33, 1
        %s5198 = scalar_select %p5197, %s33, 1
        %p5199 = scmp.lt.s32.totalorder %s34, 1
        %s5200 = scalar_select %p5199, %s34, 1
        %s5201 = smul.addr %s5200, 32
        %s5202 = smul.addr %s5198, 64
        %s5203 = sadd.s32 %s5201, %s5202
        %s5204 = smul.addr %s5203, 8
        %s5205 = scalar_lea.vmem %s14, %s5204
      $region100: #{transformer_encoder_forward.1} parent=95 // pred_fallthru
        _
      // Predicated region
      $region101: #{transformer_encoder_forward.1} parent=95 // pred_check
        %p5206 = pneg %p450
      $region102: #{transformer_encoder_forward.1} parent=95 // pred_check_branch
        %5208 = sbr.rel (%p5206) target = $region104
      $region103: #{transformer_encoder_forward.1} parent=95 // pred_region
        %p5209 = scmp.lt.s32.totalorder %s33, 1
        %s5210 = scalar_select %p5209, %s33, 1
        %s5211 = smul.addr %s5210, 2
        %s5212 = scalar_lea.vmem %s15, %s5211
      $region104: #{transformer_encoder_forward.1} parent=95 // pred_fallthru
        _
    $region96: #{transformer_encoder_forward.1} parent=5 // pred_fallthru
      _
  $region6: #{transformer_encoder_forward.1} parent=0 // loop_footer
    %s26 = sadd.s32 1, %s22
  $region7: #{transformer_encoder_forward.1} parent=0 // loop_footer_branch
    %21 = sbr.rel target = $region3
  $region8: #{transformer_encoder_forward.1} parent=0 // loop_exit
    _

</llo_original>
